<compile_context>
chip_gen: v5e
topology: v5e:2x2
jax: 0.10.0
libtpu: 0.0.40
codegen_flags: <defaults>
</compile_context>

<pallas_src>
import functools
import math

import jax
import jax.numpy as jnp
from jax.experimental import pallas as pl
from jax.experimental.pallas import tpu as pltpu

EPS = 1e-5     # nn.BatchNorm2d default eps
LANE = 128


# --------------------------- fused conv + BN + SE kernel ---------------------------
def _se_res_cellB_kernel(xp_ref, w_ref, gamma_ref, beta_ref, w1_ref, w2_ref, out_ref,
                         *, stride, Ho, Wo):
    # xp_ref    : (B, Hp, Wp, Cin)   spatially padded NHWC activation, f32
    # w_ref     : (3, 3, Cin, Cp)    conv weight, bf16, Cout zero-padded to Cp=128k lanes
    # gamma_ref : (1, Cp)            BN scale  (zero on padded channels)
    # beta_ref  : (1, Cp)            BN shift  (zero on padded channels)
    # w1_ref    : (Cp, hidden)       SE fc1 (= torch fc[0].weight.T, rows padded)
    # w2_ref    : (hidden, Cp)       SE fc2 (= torch fc[2].weight.T, cols padded)
    # out_ref   : (B, Ho*Wo, Cp)     gated, BN-normalized conv output (lane-dense)
    B, Hp, Wp, Cin = xp_ref.shape
    KH, KW, _, Cp = w_ref.shape
    HW = Ho * Wo
    M = B * HW

    # ---- 3x3 conv as 9 accumulating MXU dots (in-kernel im2col, bf16 in / f32 acc) ----
    # Taps are sliced directly from the VMEM ref, so only (B, Ho, Wo, Cin) ever lives
    # in vregs at a time (the full padded activation stays in VMEM).
    acc = jnp.zeros((M, Cp), jnp.float32)
    for dy in range(KH):
        for dx in range(KW):
            if stride == 1:
                tap = xp_ref[:, dy:dy + Ho, dx:dx + Wo, :]
            else:
                span_h = (Ho - 1) * stride + 1
                span_w = (Wo - 1) * stride + 1
                tap = xp_ref[:, dy:dy + span_h, dx:dx + span_w, :]
                tap = tap[:, ::stride, ::stride, :]
            tap2d = tap.reshape(M, Cin).astype(jnp.bfloat16)
            acc = acc + jnp.dot(tap2d, w_ref[dy, dx],
                                preferred_element_type=jnp.float32)

    # ---- BatchNorm2d (training-mode batch stats), single sum/sumsq reduction pass ----
    inv_m = 1.0 / float(M)
    s = jnp.sum(acc, axis=0, keepdims=True)
    ss = jnp.sum(acc * acc, axis=0, keepdims=True)
    mean = s * inv_m
    var = jnp.maximum(ss * inv_m - mean * mean, 0.0)          # biased variance
    scale = gamma_ref[...] * jax.lax.rsqrt(var + EPS)         # (1, Cp) folded BN scale
    shift = beta_ref[...] - mean * scale                      # (1, Cp) folded BN shift
    y = acc * scale + shift                                   # (M, Cp)

    # ---- SE layer: global avg pool -> fc -> ReLU -> fc -> sigmoid -> channel gate ----
    y3 = y.reshape(B, HW, Cp)
    pooled = jnp.mean(y3, axis=1)                                     # (B, Cp)
    h = jnp.maximum(jnp.dot(pooled, w1_ref[...],
                            preferred_element_type=jnp.float32), 0.0)   # (B, hidden)
    gate = jax.nn.sigmoid(jnp.dot(h, w2_ref[...],
                                  preferred_element_type=jnp.float32))  # (B, Cp)
    out_ref[...] = y3 * gate[:, None, :]


# ------------------------------- params & wrappers -------------------------------
def init_params(key, cin, cout, reduction=16):
    """f32 'master' parameters in a torch-equivalent layout (conv weight as HWIO)."""
    k1, k2, k3 = jax.random.split(key, 3)
    hidden = cout // reduction
    assert hidden >= 1, "planes must be >= reduction for SELayer"
    conv_w = jax.random.normal(k1, (3, 3, cin, cout), jnp.float32) * math.sqrt(
        2.0 / (3 * 3 * cout))
    b1 = 1.0 / math.sqrt(cout)
    fc1 = jax.random.uniform(k2, (cout, hidden), jnp.float32, -b1, b1)   # x @ fc1
    b2 = 1.0 / math.sqrt(hidden)
    fc2 = jax.random.uniform(k3, (hidden, cout), jnp.float32, -b2, b2)   # h @ fc2
    return {
        "conv_w": conv_w,
        "gamma": jnp.ones((cout,), jnp.float32),
        "beta": jnp.zeros((cout,), jnp.float32),
        "fc1": fc1,
        "fc2": fc2,
    }


def prepare_kernel_params(p):
    """One-time repack into the kernel layout: Cout zero-padded to 128 lanes, bf16 conv w."""
    cout = p["conv_w"].shape[-1]
    cp = ((cout + LANE - 1) // LANE) * LANE
    padc = cp - cout
    return {
        "w": jnp.pad(p["conv_w"], ((0, 0), (0, 0), (0, 0), (0, padc))).astype(jnp.bfloat16),
        "gamma": jnp.pad(p["gamma"], (0, padc)).reshape(1, cp),
        "beta": jnp.pad(p["beta"], (0, padc)).reshape(1, cp),
        "w1": jnp.pad(p["fc1"], ((0, padc), (0, 0))),   # (cp, hidden)
        "w2": jnp.pad(p["fc2"], ((0, 0), (0, padc))),   # (hidden, cp)
    }


def se_res_cellB_forward(kp, x_nchw, *, cout, stride=1):
    """x_nchw: (B, Cin, H, W) -> (B, cout, Ho, Wo), matching the PyTorch module."""
    B, Cin, H, W = x_nchw.shape
    pad = 1
    Ho = (H + 2 * pad - 3) // stride + 1
    Wo = (W + 2 * pad - 3) // stride + 1
    Cp = kp["w"].shape[-1]

    x = jnp.transpose(x_nchw, (0, 2, 3, 1)).astype(jnp.float32)       # NCHW -> NHWC
    xp = jnp.pad(x, ((0, 0), (pad, pad), (pad, pad), (0, 0)))

    out = pl.pallas_call(
        functools.partial(_se_res_cellB_kernel, stride=stride, Ho=Ho, Wo=Wo),
        out_shape=jax.ShapeDtypeStruct((B, Ho * Wo, Cp), jnp.float32),
        in_specs=[pl.BlockSpec(memory_space=pltpu.MemorySpace.VMEM) for _ in range(6)],
        out_specs=pl.BlockSpec(memory_space=pltpu.MemorySpace.VMEM),
        compiler_params=pltpu.CompilerParams(vmem_limit_bytes=64 << 20),
    )(xp, kp["w"], kp["gamma"], kp["beta"], kp["w1"], kp["w2"])

    out = out[:, :, :cout].reshape(B, Ho, Wo, cout)
    return jnp.transpose(out, (0, 3, 1, 2))                           # back to NCHW


# ------------------------------- pure-JAX reference -------------------------------
def reference_forward(p, x_nchw, *, stride=1):
    x = jnp.transpose(x_nchw, (0, 2, 3, 1)).astype(jnp.float32)
    y = jax.lax.conv_general_dilated(
        x, p["conv_w"], (stride, stride), ((1, 1), (1, 1)),
        dimension_numbers=("NHWC", "HWIO", "NHWC"))
    mean = jnp.mean(y, axis=(0, 1, 2))
    var = jnp.mean(jnp.square(y - mean), axis=(0, 1, 2))               # biased (train mode)
    y = (y - mean) * jax.lax.rsqrt(var + EPS) * p["gamma"] + p["beta"]
    pooled = jnp.mean(y, axis=(1, 2))                                  # (B, C)
    h = jnp.maximum(pooled @ p["fc1"], 0.0)
    gate = jax.nn.sigmoid(h @ p["fc2"])
    y = y * gate[:, None, None, :]
    return jnp.transpose(y, (0, 3, 1, 2))


if __name__ == "__main__":
    key = jax.random.PRNGKey(0)
    pkey, xkey = jax.random.split(key)

    B, CIN, H, W = 2, 4, 16, 16
    COUT, STRIDE = 32, 1          # SELayer(reduction=16) -> hidden = 2

    raw = init_params(pkey, CIN, COUT)
    kp = prepare_kernel_params(raw)
    x = jax.random.normal(xkey, (B, CIN, H, W), jnp.float32)

    fwd = jax.jit(functools.partial(se_res_cellB_forward, cout=COUT, stride=STRIDE))
    out = jax.block_until_ready(fwd(kp, x))

    ref = reference_forward(raw, x, stride=STRIDE)

    assert out.shape == (B, COUT, H, W), out.shape
    assert bool(jnp.all(jnp.isfinite(out)))
    max_err = float(jnp.max(jnp.abs(out - ref)))
    assert max_err < 1e-1, max_err   # bf16 MXU operands vs f32 reference
    print("KERNEL_OK")
</pallas_src>

<mosaic_0001>
module attributes {stable_mosaic.version = 11 : i64} {
  func.func @_se_res_cellB_kernel(%arg0: memref<2x18x18x4xf32, #tpu.memory_space<vmem>>, %arg1: memref<3x3x4x128xbf16, #tpu.memory_space<vmem>>, %arg2: memref<1x128xf32, #tpu.memory_space<vmem>>, %arg3: memref<1x128xf32, #tpu.memory_space<vmem>>, %arg4: memref<128x2xf32, #tpu.memory_space<vmem>>, %arg5: memref<2x128xf32, #tpu.memory_space<vmem>>, %arg6: memref<2x256x128xf32, #tpu.memory_space<vmem>>) attributes {dimension_semantics = [], scalar_prefetch = 0 : i64, scratch_operands = 0 : i64, tpu.core_type = #tpu.core_type<tc>} {
    %cst = arith.constant 0.000000e+00 : f32
    %0 = vector.broadcast %cst : f32 to vector<512x128xf32>
    %c0 = arith.constant 0 : index
    %c0_0 = arith.constant 0 : index
    %c0_1 = arith.constant 0 : index
    %c0_2 = arith.constant 0 : index
    %1 = vector.load %arg0[%c0, %c0_0, %c0_1, %c0_2] : memref<2x18x18x4xf32, #tpu.memory_space<vmem>>, vector<2x16x16x4xf32>
    %2 = vector.shape_cast %1 : vector<2x16x16x4xf32> to vector<512x4xf32>
    %3 = arith.truncf %2 : vector<512x4xf32> to vector<512x4xbf16>
    %c0_3 = arith.constant 0 : index
    %c0_4 = arith.constant 0 : index
    %c0_5 = arith.constant 0 : index
    %c0_6 = arith.constant 0 : index
    %4 = vector.load %arg1[%c0_3, %c0_4, %c0_5, %c0_6] : memref<3x3x4x128xbf16, #tpu.memory_space<vmem>>, vector<1x1x4x128xbf16>
    %5 = vector.shape_cast %4 : vector<1x1x4x128xbf16> to vector<4x128xbf16>
    %cst_7 = arith.constant dense<0.000000e+00> : vector<512x128xf32>
    %6 = tpu.matmul %3, %5, %cst_7 {dimension_numbers = #tpu.dot_dimension_numbers<[1], [0], [0], [1], [0, 0, 1, 1], [], []>} : vector<512x4xbf16>, vector<4x128xbf16>, vector<512x128xf32> -> vector<512x128xf32>
    %7 = arith.addf %0, %6 : vector<512x128xf32>
    %c0_8 = arith.constant 0 : index
    %c0_9 = arith.constant 0 : index
    %c1 = arith.constant 1 : index
    %c0_10 = arith.constant 0 : index
    %8 = vector.load %arg0[%c0_8, %c0_9, %c1, %c0_10] : memref<2x18x18x4xf32, #tpu.memory_space<vmem>>, vector<2x16x16x4xf32>
    %9 = vector.shape_cast %8 : vector<2x16x16x4xf32> to vector<512x4xf32>
    %10 = arith.truncf %9 : vector<512x4xf32> to vector<512x4xbf16>
    %c0_11 = arith.constant 0 : index
    %c1_12 = arith.constant 1 : index
    %c0_13 = arith.constant 0 : index
    %c0_14 = arith.constant 0 : index
    %11 = vector.load %arg1[%c0_11, %c1_12, %c0_13, %c0_14] : memref<3x3x4x128xbf16, #tpu.memory_space<vmem>>, vector<1x1x4x128xbf16>
    %12 = vector.shape_cast %11 : vector<1x1x4x128xbf16> to vector<4x128xbf16>
    %cst_15 = arith.constant dense<0.000000e+00> : vector<512x128xf32>
    %13 = tpu.matmul %10, %12, %cst_15 {dimension_numbers = #tpu.dot_dimension_numbers<[1], [0], [0], [1], [0, 0, 1, 1], [], []>} : vector<512x4xbf16>, vector<4x128xbf16>, vector<512x128xf32> -> vector<512x128xf32>
    %14 = arith.addf %7, %13 : vector<512x128xf32>
    %c0_16 = arith.constant 0 : index
    %c0_17 = arith.constant 0 : index
    %c2 = arith.constant 2 : index
    %c0_18 = arith.constant 0 : index
    %15 = vector.load %arg0[%c0_16, %c0_17, %c2, %c0_18] : memref<2x18x18x4xf32, #tpu.memory_space<vmem>>, vector<2x16x16x4xf32>
    %16 = vector.shape_cast %15 : vector<2x16x16x4xf32> to vector<512x4xf32>
    %17 = arith.truncf %16 : vector<512x4xf32> to vector<512x4xbf16>
    %c0_19 = arith.constant 0 : index
    %c2_20 = arith.constant 2 : index
    %c0_21 = arith.constant 0 : index
    %c0_22 = arith.constant 0 : index
    %18 = vector.load %arg1[%c0_19, %c2_20, %c0_21, %c0_22] : memref<3x3x4x128xbf16, #tpu.memory_space<vmem>>, vector<1x1x4x128xbf16>
    %19 = vector.shape_cast %18 : vector<1x1x4x128xbf16> to vector<4x128xbf16>
    %cst_23 = arith.constant dense<0.000000e+00> : vector<512x128xf32>
    %20 = tpu.matmul %17, %19, %cst_23 {dimension_numbers = #tpu.dot_dimension_numbers<[1], [0], [0], [1], [0, 0, 1, 1], [], []>} : vector<512x4xbf16>, vector<4x128xbf16>, vector<512x128xf32> -> vector<512x128xf32>
    %21 = arith.addf %14, %20 : vector<512x128xf32>
    %c0_24 = arith.constant 0 : index
    %c1_25 = arith.constant 1 : index
    %c0_26 = arith.constant 0 : index
    %c0_27 = arith.constant 0 : index
    %22 = vector.load %arg0[%c0_24, %c1_25, %c0_26, %c0_27] : memref<2x18x18x4xf32, #tpu.memory_space<vmem>>, vector<2x16x16x4xf32>
    %23 = vector.shape_cast %22 : vector<2x16x16x4xf32> to vector<512x4xf32>
    %24 = arith.truncf %23 : vector<512x4xf32> to vector<512x4xbf16>
    %c1_28 = arith.constant 1 : index
    %c0_29 = arith.constant 0 : index
    %c0_30 = arith.constant 0 : index
    %c0_31 = arith.constant 0 : index
    %25 = vector.load %arg1[%c1_28, %c0_29, %c0_30, %c0_31] : memref<3x3x4x128xbf16, #tpu.memory_space<vmem>>, vector<1x1x4x128xbf16>
    %26 = vector.shape_cast %25 : vector<1x1x4x128xbf16> to vector<4x128xbf16>
    %cst_32 = arith.constant dense<0.000000e+00> : vector<512x128xf32>
    %27 = tpu.matmul %24, %26, %cst_32 {dimension_numbers = #tpu.dot_dimension_numbers<[1], [0], [0], [1], [0, 0, 1, 1], [], []>} : vector<512x4xbf16>, vector<4x128xbf16>, vector<512x128xf32> -> vector<512x128xf32>
    %28 = arith.addf %21, %27 : vector<512x128xf32>
    %c0_33 = arith.constant 0 : index
    %c1_34 = arith.constant 1 : index
    %c1_35 = arith.constant 1 : index
    %c0_36 = arith.constant 0 : index
    %29 = vector.load %arg0[%c0_33, %c1_34, %c1_35, %c0_36] : memref<2x18x18x4xf32, #tpu.memory_space<vmem>>, vector<2x16x16x4xf32>
    %30 = vector.shape_cast %29 : vector<2x16x16x4xf32> to vector<512x4xf32>
    %31 = arith.truncf %30 : vector<512x4xf32> to vector<512x4xbf16>
    %c1_37 = arith.constant 1 : index
    %c1_38 = arith.constant 1 : index
    %c0_39 = arith.constant 0 : index
    %c0_40 = arith.constant 0 : index
    %32 = vector.load %arg1[%c1_37, %c1_38, %c0_39, %c0_40] : memref<3x3x4x128xbf16, #tpu.memory_space<vmem>>, vector<1x1x4x128xbf16>
    %33 = vector.shape_cast %32 : vector<1x1x4x128xbf16> to vector<4x128xbf16>
    %cst_41 = arith.constant dense<0.000000e+00> : vector<512x128xf32>
    %34 = tpu.matmul %31, %33, %cst_41 {dimension_numbers = #tpu.dot_dimension_numbers<[1], [0], [0], [1], [0, 0, 1, 1], [], []>} : vector<512x4xbf16>, vector<4x128xbf16>, vector<512x128xf32> -> vector<512x128xf32>
    %35 = arith.addf %28, %34 : vector<512x128xf32>
    %c0_42 = arith.constant 0 : index
    %c1_43 = arith.constant 1 : index
    %c2_44 = arith.constant 2 : index
    %c0_45 = arith.constant 0 : index
    %36 = vector.load %arg0[%c0_42, %c1_43, %c2_44, %c0_45] : memref<2x18x18x4xf32, #tpu.memory_space<vmem>>, vector<2x16x16x4xf32>
    %37 = vector.shape_cast %36 : vector<2x16x16x4xf32> to vector<512x4xf32>
    %38 = arith.truncf %37 : vector<512x4xf32> to vector<512x4xbf16>
    %c1_46 = arith.constant 1 : index
    %c2_47 = arith.constant 2 : index
    %c0_48 = arith.constant 0 : index
    %c0_49 = arith.constant 0 : index
    %39 = vector.load %arg1[%c1_46, %c2_47, %c0_48, %c0_49] : memref<3x3x4x128xbf16, #tpu.memory_space<vmem>>, vector<1x1x4x128xbf16>
    %40 = vector.shape_cast %39 : vector<1x1x4x128xbf16> to vector<4x128xbf16>
    %cst_50 = arith.constant dense<0.000000e+00> : vector<512x128xf32>
    %41 = tpu.matmul %38, %40, %cst_50 {dimension_numbers = #tpu.dot_dimension_numbers<[1], [0], [0], [1], [0, 0, 1, 1], [], []>} : vector<512x4xbf16>, vector<4x128xbf16>, vector<512x128xf32> -> vector<512x128xf32>
    %42 = arith.addf %35, %41 : vector<512x128xf32>
    %c0_51 = arith.constant 0 : index
    %c2_52 = arith.constant 2 : index
    %c0_53 = arith.constant 0 : index
    %c0_54 = arith.constant 0 : index
    %43 = vector.load %arg0[%c0_51, %c2_52, %c0_53, %c0_54] : memref<2x18x18x4xf32, #tpu.memory_space<vmem>>, vector<2x16x16x4xf32>
    %44 = vector.shape_cast %43 : vector<2x16x16x4xf32> to vector<512x4xf32>
    %45 = arith.truncf %44 : vector<512x4xf32> to vector<512x4xbf16>
    %c2_55 = arith.constant 2 : index
    %c0_56 = arith.constant 0 : index
    %c0_57 = arith.constant 0 : index
    %c0_58 = arith.constant 0 : index
    %46 = vector.load %arg1[%c2_55, %c0_56, %c0_57, %c0_58] : memref<3x3x4x128xbf16, #tpu.memory_space<vmem>>, vector<1x1x4x128xbf16>
    %47 = vector.shape_cast %46 : vector<1x1x4x128xbf16> to vector<4x128xbf16>
    %cst_59 = arith.constant dense<0.000000e+00> : vector<512x128xf32>
    %48 = tpu.matmul %45, %47, %cst_59 {dimension_numbers = #tpu.dot_dimension_numbers<[1], [0], [0], [1], [0, 0, 1, 1], [], []>} : vector<512x4xbf16>, vector<4x128xbf16>, vector<512x128xf32> -> vector<512x128xf32>
    %49 = arith.addf %42, %48 : vector<512x128xf32>
    %c0_60 = arith.constant 0 : index
    %c2_61 = arith.constant 2 : index
    %c1_62 = arith.constant 1 : index
    %c0_63 = arith.constant 0 : index
    %50 = vector.load %arg0[%c0_60, %c2_61, %c1_62, %c0_63] : memref<2x18x18x4xf32, #tpu.memory_space<vmem>>, vector<2x16x16x4xf32>
    %51 = vector.shape_cast %50 : vector<2x16x16x4xf32> to vector<512x4xf32>
    %52 = arith.truncf %51 : vector<512x4xf32> to vector<512x4xbf16>
    %c2_64 = arith.constant 2 : index
    %c1_65 = arith.constant 1 : index
    %c0_66 = arith.constant 0 : index
    %c0_67 = arith.constant 0 : index
    %53 = vector.load %arg1[%c2_64, %c1_65, %c0_66, %c0_67] : memref<3x3x4x128xbf16, #tpu.memory_space<vmem>>, vector<1x1x4x128xbf16>
    %54 = vector.shape_cast %53 : vector<1x1x4x128xbf16> to vector<4x128xbf16>
    %cst_68 = arith.constant dense<0.000000e+00> : vector<512x128xf32>
    %55 = tpu.matmul %52, %54, %cst_68 {dimension_numbers = #tpu.dot_dimension_numbers<[1], [0], [0], [1], [0, 0, 1, 1], [], []>} : vector<512x4xbf16>, vector<4x128xbf16>, vector<512x128xf32> -> vector<512x128xf32>
    %56 = arith.addf %49, %55 : vector<512x128xf32>
    %c0_69 = arith.constant 0 : index
    %c2_70 = arith.constant 2 : index
    %c2_71 = arith.constant 2 : index
    %c0_72 = arith.constant 0 : index
    %57 = vector.load %arg0[%c0_69, %c2_70, %c2_71, %c0_72] : memref<2x18x18x4xf32, #tpu.memory_space<vmem>>, vector<2x16x16x4xf32>
    %58 = vector.shape_cast %57 : vector<2x16x16x4xf32> to vector<512x4xf32>
    %59 = arith.truncf %58 : vector<512x4xf32> to vector<512x4xbf16>
    %c2_73 = arith.constant 2 : index
    %c2_74 = arith.constant 2 : index
    %c0_75 = arith.constant 0 : index
    %c0_76 = arith.constant 0 : index
    %60 = vector.load %arg1[%c2_73, %c2_74, %c0_75, %c0_76] : memref<3x3x4x128xbf16, #tpu.memory_space<vmem>>, vector<1x1x4x128xbf16>
    %61 = vector.shape_cast %60 : vector<1x1x4x128xbf16> to vector<4x128xbf16>
    %cst_77 = arith.constant dense<0.000000e+00> : vector<512x128xf32>
    %62 = tpu.matmul %59, %61, %cst_77 {dimension_numbers = #tpu.dot_dimension_numbers<[1], [0], [0], [1], [0, 0, 1, 1], [], []>} : vector<512x4xbf16>, vector<4x128xbf16>, vector<512x128xf32> -> vector<512x128xf32>
    %63 = arith.addf %56, %62 : vector<512x128xf32>
    %cst_78 = arith.constant dense<0.000000e+00> : vector<128xf32>
    %64 = vector.multi_reduction <add>, %63, %cst_78 [0] : vector<512x128xf32> to vector<128xf32>
    %65 = vector.shape_cast %64 : vector<128xf32> to vector<1x128xf32>
    %66 = arith.mulf %63, %63 : vector<512x128xf32>
    %cst_79 = arith.constant dense<0.000000e+00> : vector<128xf32>
    %67 = vector.multi_reduction <add>, %66, %cst_79 [0] : vector<512x128xf32> to vector<128xf32>
    %68 = vector.shape_cast %67 : vector<128xf32> to vector<1x128xf32>
    %cst_80 = arith.constant 0.001953125 : f32
    %69 = vector.broadcast %cst_80 : f32 to vector<1x128xf32>
    %70 = arith.mulf %65, %69 : vector<1x128xf32>
    %cst_81 = arith.constant 0.001953125 : f32
    %71 = vector.broadcast %cst_81 : f32 to vector<1x128xf32>
    %72 = arith.mulf %68, %71 : vector<1x128xf32>
    %73 = arith.mulf %70, %70 : vector<1x128xf32>
    %74 = arith.subf %72, %73 : vector<1x128xf32>
    %cst_82 = arith.constant 0.000000e+00 : f32
    %75 = vector.broadcast %cst_82 : f32 to vector<1x128xf32>
    %76 = arith.maximumf %74, %75 : vector<1x128xf32>
    %c0_83 = arith.constant 0 : index
    %c0_84 = arith.constant 0 : index
    %77 = vector.load %arg2[%c0_83, %c0_84] : memref<1x128xf32, #tpu.memory_space<vmem>>, vector<1x128xf32>
    %cst_85 = arith.constant 9.99999974E-6 : f32
    %78 = vector.broadcast %cst_85 : f32 to vector<1x128xf32>
    %79 = arith.addf %76, %78 : vector<1x128xf32>
    %80 = math.rsqrt %79 : vector<1x128xf32>
    %81 = arith.mulf %77, %80 : vector<1x128xf32>
    %c0_86 = arith.constant 0 : index
    %c0_87 = arith.constant 0 : index
    %82 = vector.load %arg3[%c0_86, %c0_87] : memref<1x128xf32, #tpu.memory_space<vmem>>, vector<1x128xf32>
    %83 = arith.mulf %70, %81 : vector<1x128xf32>
    %84 = arith.subf %82, %83 : vector<1x128xf32>
    %85 = vector.broadcast %81 : vector<1x128xf32> to vector<512x128xf32>
    %86 = arith.mulf %63, %85 : vector<512x128xf32>
    %87 = vector.broadcast %84 : vector<1x128xf32> to vector<512x128xf32>
    %88 = arith.addf %86, %87 : vector<512x128xf32>
    %89 = vector.shape_cast %88 : vector<512x128xf32> to vector<2x256x128xf32>
    %cst_88 = arith.constant dense<0.000000e+00> : vector<2x128xf32>
    %90 = vector.multi_reduction <add>, %89, %cst_88 [1] : vector<2x256x128xf32> to vector<2x128xf32>
    %cst_89 = arith.constant 2.560000e+02 : f32
    %91 = vector.broadcast %cst_89 : f32 to vector<2x128xf32>
    %92 = arith.divf %90, %91 : vector<2x128xf32>
    %c0_90 = arith.constant 0 : index
    %c0_91 = arith.constant 0 : index
    %93 = vector.load %arg4[%c0_90, %c0_91] : memref<128x2xf32, #tpu.memory_space<vmem>>, vector<128x2xf32>
    %cst_92 = arith.constant dense<0.000000e+00> : vector<2x2xf32>
    %94 = tpu.matmul %92, %93, %cst_92 {dimension_numbers = #tpu.dot_dimension_numbers<[1], [0], [0], [1], [0, 0, 1, 1], [], []>} : vector<2x128xf32>, vector<128x2xf32>, vector<2x2xf32> -> vector<2x2xf32>
    %cst_93 = arith.constant 0.000000e+00 : f32
    %95 = vector.broadcast %cst_93 : f32 to vector<2x2xf32>
    %96 = arith.maximumf %94, %95 : vector<2x2xf32>
    %c0_94 = arith.constant 0 : index
    %c0_95 = arith.constant 0 : index
    %97 = vector.load %arg5[%c0_94, %c0_95] : memref<2x128xf32, #tpu.memory_space<vmem>>, vector<2x128xf32>
    %cst_96 = arith.constant dense<0.000000e+00> : vector<2x128xf32>
    %98 = tpu.matmul %96, %97, %cst_96 {dimension_numbers = #tpu.dot_dimension_numbers<[1], [0], [0], [1], [0, 0, 1, 1], [], []>} : vector<2x2xf32>, vector<2x128xf32>, vector<2x128xf32> -> vector<2x128xf32>
    %99 = arith.negf %98 : vector<2x128xf32>
    %100 = math.exp %99 : vector<2x128xf32>
    %cst_97 = arith.constant 1.000000e+00 : f32
    %101 = vector.broadcast %cst_97 : f32 to vector<2x128xf32>
    %102 = arith.addf %101, %100 : vector<2x128xf32>
    %103 = arith.divf %101, %102 : vector<2x128xf32>
    %104 = vector.shape_cast %103 : vector<2x128xf32> to vector<2x1x128xf32>
    %105 = vector.broadcast %104 : vector<2x1x128xf32> to vector<2x256x128xf32>
    %106 = arith.mulf %89, %105 : vector<2x256x128xf32>
    %c0_98 = arith.constant 0 : index
    %c0_99 = arith.constant 0 : index
    %c0_100 = arith.constant 0 : index
    %107 = vector.load %arg6[%c0_98, %c0_99, %c0_100] : memref<2x256x128xf32, #tpu.memory_space<vmem>>, vector<2x256x128xf32>
    tpu.vector_store %arg6[%c0_98, %c0_99, %c0_100], %106 {strides = array<i32>} : memref<2x256x128xf32, #tpu.memory_space<vmem>>, vector<2x256x128xf32>,
    return
  }
}

</mosaic_0001>

<llo_original>
// kernel: se_res_cellB_forward.1
$region0: #{se_res_cellB_forward.1}
  #allocation0 [shape = 'u32[]', space=smem, size = 0x4, offset = 0x4, fixed_abs, tag = 'smem constant byte address 0x4 - core index']
  #allocation1 [shape = 'u32[72,128]{1,0:T(1,128)}', space=vmem, size = 0x9000, scoped, tag = 'internal scratch']
  %s0 = inlined_call_operand.vmem [shape: f32[2,18,18,4], index: 0, kind: input, shape index: {}]
  %s1 = inlined_call_operand.vmem [shape: bf16[3,3,4,128], index: 1, kind: input, shape index: {}]
  %s2 = inlined_call_operand.vmem [shape: f32[1,128], index: 2, kind: input, shape index: {}]
  %s3 = inlined_call_operand.vmem [shape: f32[1,128], index: 3, kind: input, shape index: {}]
  %s4 = inlined_call_operand.vmem [shape: f32[128,2], index: 4, kind: input, shape index: {}]
  %s5 = inlined_call_operand.vmem [shape: f32[2,128], index: 5, kind: input, shape index: {}]
  %s6 = inlined_call_operand.hbm [shape: f32[2,256,128], index: 6, kind: output, shape index: {}]
  %s7 = sld [smem:[#allocation0]]
  $region34: #{se_res_cellB_forward.1} parent=0
    _
  %s9 = ssub.s32 1, %s7
  %s10 = scalar_select 0, %s9, %s7
  $region1: #{se_res_cellB_forward.1} parent=0
    #allocation2 [shape = 'u8[262144]{0}', space=vmem, size = 0x40000, scoped, tag = 'output window, operand 0, single buffered']
    #allocation3 [shape = 's32[1]{0}', space=sflag, size = 0x4, scoped, tag = 'scoped memory for se_res_cellB_forward.1']
    %11 = vsyncpa [#allocation3], 0
    // Predicated region
    $region2: #{se_res_cellB_forward.1} parent=1 // pred_check
      _
    $region3: #{se_res_cellB_forward.1} parent=1 // pred_check_branch
      %13 = sbr.rel (0) target = $region5
    $region4: #{se_res_cellB_forward.1} parent=1 // pred_region
      _
    $region5: #{se_res_cellB_forward.1} parent=1 // pred_fallthru
      _
    // Predicated region
    $region6: #{se_res_cellB_forward.1} parent=1 // pred_check
      _
    $region7: #{se_res_cellB_forward.1} parent=1 // pred_check_branch
      %15 = sbr.rel (0) target = $region9
    $region8: #{se_res_cellB_forward.1} parent=1 // pred_region
      _
    $region9: #{se_res_cellB_forward.1} parent=1 // pred_fallthru
      _
    // Predicated region
    $region10: #{se_res_cellB_forward.1} parent=1 // pred_check
      _
    $region11: #{se_res_cellB_forward.1} parent=1 // pred_check_branch
      %17 = sbr.rel (0) target = $region13
    $region12: #{se_res_cellB_forward.1} parent=1 // pred_region
      _
    $region13: #{se_res_cellB_forward.1} parent=1 // pred_fallthru
      _
    // Predicated region
    $region14: #{se_res_cellB_forward.1} parent=1 // pred_check
      _
    $region15: #{se_res_cellB_forward.1} parent=1 // pred_check_branch
      %19 = sbr.rel (0) target = $region17
    $region16: #{se_res_cellB_forward.1} parent=1 // pred_region
      _
    $region17: #{se_res_cellB_forward.1} parent=1 // pred_fallthru
      _
    // Predicated region
    $region18: #{se_res_cellB_forward.1} parent=1 // pred_check
      _
    $region19: #{se_res_cellB_forward.1} parent=1 // pred_check_branch
      %21 = sbr.rel (0) target = $region21
    $region20: #{se_res_cellB_forward.1} parent=1 // pred_region
      _
    $region21: #{se_res_cellB_forward.1} parent=1 // pred_fallthru
      _
    // Predicated region
    $region22: #{se_res_cellB_forward.1} parent=1 // pred_check
      _
    $region23: #{se_res_cellB_forward.1} parent=1 // pred_check_branch
      %23 = sbr.rel (0) target = $region25
    $region24: #{se_res_cellB_forward.1} parent=1 // pred_region
      _
    $region25: #{se_res_cellB_forward.1} parent=1 // pred_fallthru
      _
    %v25 = vld [vmem:[%s0] sm:$0xff]
    %v26 = vld [vmem:[%s0 + $0x8] sm:$0xff]
    %v27 = vld [vmem:[%s0 + $0x18] sm:$0xff]
    %v28 = vld [vmem:[%s0 + $0x20] sm:$0xff]
    %v29 = vld [vmem:[%s0 + $0x30] sm:$0xff]
    %v30 = vld [vmem:[%s0 + $0x38] sm:$0xff]
    %v31 = vld [vmem:[%s0 + $0x48] sm:$0xff]
    %v32 = vld [vmem:[%s0 + $0x50] sm:$0xff]
    %v33 = vld [vmem:[%s0 + $0x60] sm:$0xff]
    %v34 = vld [vmem:[%s0 + $0x68] sm:$0xff]
    %v35 = vld [vmem:[%s0 + $0x78] sm:$0xff]
    %v36 = vld [vmem:[%s0 + $0x80] sm:$0xff]
    %v37 = vld [vmem:[%s0 + $0x90] sm:$0xff]
    %v38 = vld [vmem:[%s0 + $0x98] sm:$0xff]
    %v39 = vld [vmem:[%s0 + $0xa8] sm:$0xff]
    %v40 = vld [vmem:[%s0 + $0xb0] sm:$0xff]
    %v41 = vld [vmem:[%s0 + $0xc0] sm:$0xff]
    %v42 = vld [vmem:[%s0 + $0xc8] sm:$0xff]
    %v43 = vld [vmem:[%s0 + $0xd8] sm:$0xff]
    %v44 = vld [vmem:[%s0 + $0xe0] sm:$0xff]
    %v45 = vld [vmem:[%s0 + $0xf0] sm:$0xff]
    %v46 = vld [vmem:[%s0 + $0xf8] sm:$0xff]
    %v47 = vld [vmem:[%s0 + $0x108] sm:$0xff]
    %v48 = vld [vmem:[%s0 + $0x110] sm:$0xff]
    %v49 = vld [vmem:[%s0 + $0x120] sm:$0xff]
    %v50 = vld [vmem:[%s0 + $0x128] sm:$0xff]
    %v51 = vld [vmem:[%s0 + $0x138] sm:$0xff]
    %v52 = vld [vmem:[%s0 + $0x140] sm:$0xff]
    %v53 = vld [vmem:[%s0 + $0x150] sm:$0xff]
    %v54 = vld [vmem:[%s0 + $0x158] sm:$0xff]
    %v55 = vld [vmem:[%s0 + $0x168] sm:$0xff]
    %v56 = vld [vmem:[%s0 + $0x170] sm:$0xff]
    %v57 = vld [vmem:[%s0 + $0x1b0] sm:$0xff]
    %v58 = vld [vmem:[%s0 + $0x1b8] sm:$0xff]
    %v59 = vld [vmem:[%s0 + $0x1c8] sm:$0xff]
    %v60 = vld [vmem:[%s0 + $0x1d0] sm:$0xff]
    %v61 = vld [vmem:[%s0 + $0x1e0] sm:$0xff]
    %v62 = vld [vmem:[%s0 + $0x1e8] sm:$0xff]
    %v63 = vld [vmem:[%s0 + $0x1f8] sm:$0xff]
    %v64 = vld [vmem:[%s0 + $0x200] sm:$0xff]
    %v65 = vld [vmem:[%s0 + $0x210] sm:$0xff]
    %v66 = vld [vmem:[%s0 + $0x218] sm:$0xff]
    %v67 = vld [vmem:[%s0 + $0x228] sm:$0xff]
    %v68 = vld [vmem:[%s0 + $0x230] sm:$0xff]
    %v69 = vld [vmem:[%s0 + $0x240] sm:$0xff]
    %v70 = vld [vmem:[%s0 + $0x248] sm:$0xff]
    %v71 = vld [vmem:[%s0 + $0x258] sm:$0xff]
    %v72 = vld [vmem:[%s0 + $0x260] sm:$0xff]
    %v73 = vld [vmem:[%s0 + $0x270] sm:$0xff]
    %v74 = vld [vmem:[%s0 + $0x278] sm:$0xff]
    %v75 = vld [vmem:[%s0 + $0x288] sm:$0xff]
    %v76 = vld [vmem:[%s0 + $0x290] sm:$0xff]
    %v77 = vld [vmem:[%s0 + $0x2a0] sm:$0xff]
    %v78 = vld [vmem:[%s0 + $0x2a8] sm:$0xff]
    %v79 = vld [vmem:[%s0 + $0x2b8] sm:$0xff]
    %v80 = vld [vmem:[%s0 + $0x2c0] sm:$0xff]
    %v81 = vld [vmem:[%s0 + $0x2d0] sm:$0xff]
    %v82 = vld [vmem:[%s0 + $0x2d8] sm:$0xff]
    %v83 = vld [vmem:[%s0 + $0x2e8] sm:$0xff]
    %v84 = vld [vmem:[%s0 + $0x2f0] sm:$0xff]
    %v85 = vld [vmem:[%s0 + $0x300] sm:$0xff]
    %v86 = vld [vmem:[%s0 + $0x308] sm:$0xff]
    %v87 = vld [vmem:[%s0 + $0x318] sm:$0xff]
    %v88 = vld [vmem:[%s0 + $0x320] sm:$0xff]
    %v89 = vpack.c.bf16 %v26, %v25
    %v90 = vpack.c.bf16 %v28, %v27
    %v91 = vpack.c.bf16 %v30, %v29
    %v92 = vpack.c.bf16 %v32, %v31
    %v93 = vpack.c.bf16 %v34, %v33
    %v94 = vpack.c.bf16 %v36, %v35
    %v95 = vpack.c.bf16 %v38, %v37
    %v96 = vpack.c.bf16 %v40, %v39
    %v97 = vpack.c.bf16 %v42, %v41
    %v98 = vpack.c.bf16 %v44, %v43
    %v99 = vpack.c.bf16 %v46, %v45
    %v100 = vpack.c.bf16 %v48, %v47
    %v101 = vpack.c.bf16 %v50, %v49
    %v102 = vpack.c.bf16 %v52, %v51
    %v103 = vpack.c.bf16 %v54, %v53
    %v104 = vpack.c.bf16 %v56, %v55
    %v105 = vpack.c.bf16 %v58, %v57
    %v106 = vpack.c.bf16 %v60, %v59
    %v107 = vpack.c.bf16 %v62, %v61
    %v108 = vpack.c.bf16 %v64, %v63
    %v109 = vpack.c.bf16 %v66, %v65
    %v110 = vpack.c.bf16 %v68, %v67
    %v111 = vpack.c.bf16 %v70, %v69
    %v112 = vpack.c.bf16 %v72, %v71
    %v113 = vpack.c.bf16 %v74, %v73
    %v114 = vpack.c.bf16 %v76, %v75
    %v115 = vpack.c.bf16 %v78, %v77
    %v116 = vpack.c.bf16 %v80, %v79
    %v117 = vpack.c.bf16 %v82, %v81
    %v118 = vpack.c.bf16 %v84, %v83
    %v119 = vpack.c.bf16 %v86, %v85
    %v120 = vpack.c.bf16 %v88, %v87
    %v121 = vld [vmem:[%s1] sm:$0x3]
    %v122 = vld [vmem:[%s0 + $0x1] sm:$0xff]
    %v123 = vld [vmem:[%s0 + $0x9] sm:$0xff]
    %v124 = vld [vmem:[%s0 + $0x19] sm:$0xff]
    %v125 = vld [vmem:[%s0 + $0x21] sm:$0xff]
    %v126 = vld [vmem:[%s0 + $0x31] sm:$0xff]
    %v127 = vld [vmem:[%s0 + $0x39] sm:$0xff]
    %v128 = vld [vmem:[%s0 + $0x49] sm:$0xff]
    %v129 = vld [vmem:[%s0 + $0x51] sm:$0xff]
    %v130 = vld [vmem:[%s0 + $0x61] sm:$0xff]
    %v131 = vld [vmem:[%s0 + $0x69] sm:$0xff]
    %v132 = vld [vmem:[%s0 + $0x79] sm:$0xff]
    %v133 = vld [vmem:[%s0 + $0x81] sm:$0xff]
    %v134 = vld [vmem:[%s0 + $0x91] sm:$0xff]
    %v135 = vld [vmem:[%s0 + $0x99] sm:$0xff]
    %v136 = vld [vmem:[%s0 + $0xa9] sm:$0xff]
    %v137 = vld [vmem:[%s0 + $0xb1] sm:$0xff]
    %v138 = vld [vmem:[%s0 + $0xc1] sm:$0xff]
    %v139 = vld [vmem:[%s0 + $0xc9] sm:$0xff]
    %v140 = vld [vmem:[%s0 + $0xd9] sm:$0xff]
    %v141 = vld [vmem:[%s0 + $0xe1] sm:$0xff]
    %v142 = vld [vmem:[%s0 + $0xf1] sm:$0xff]
    %v143 = vld [vmem:[%s0 + $0xf9] sm:$0xff]
    %v144 = vld [vmem:[%s0 + $0x109] sm:$0xff]
    %v145 = vld [vmem:[%s0 + $0x111] sm:$0xff]
    %v146 = vld [vmem:[%s0 + $0x121] sm:$0xff]
    %v147 = vld [vmem:[%s0 + $0x129] sm:$0xff]
    %v148 = vld [vmem:[%s0 + $0x139] sm:$0xff]
    %v149 = vld [vmem:[%s0 + $0x141] sm:$0xff]
    %v150 = vld [vmem:[%s0 + $0x151] sm:$0xff]
    %v151 = vld [vmem:[%s0 + $0x159] sm:$0xff]
    %v152 = vld [vmem:[%s0 + $0x169] sm:$0xff]
    %v153 = vld [vmem:[%s0 + $0x171] sm:$0xff]
    %v154 = vld [vmem:[%s0 + $0x1b1] sm:$0xff]
    %v155 = vld [vmem:[%s0 + $0x1b9] sm:$0xff]
    %v156 = vld [vmem:[%s0 + $0x1c9] sm:$0xff]
    %v157 = vld [vmem:[%s0 + $0x1d1] sm:$0xff]
    %v158 = vld [vmem:[%s0 + $0x1e1] sm:$0xff]
    %v159 = vld [vmem:[%s0 + $0x1e9] sm:$0xff]
    %v160 = vld [vmem:[%s0 + $0x1f9] sm:$0xff]
    %v161 = vld [vmem:[%s0 + $0x201] sm:$0xff]
    %v162 = vld [vmem:[%s0 + $0x211] sm:$0xff]
    %v163 = vld [vmem:[%s0 + $0x219] sm:$0xff]
    %v164 = vld [vmem:[%s0 + $0x229] sm:$0xff]
    %v165 = vld [vmem:[%s0 + $0x231] sm:$0xff]
    %v166 = vld [vmem:[%s0 + $0x241] sm:$0xff]
    %v167 = vld [vmem:[%s0 + $0x249] sm:$0xff]
    %v168 = vld [vmem:[%s0 + $0x259] sm:$0xff]
    %v169 = vld [vmem:[%s0 + $0x261] sm:$0xff]
    %v170 = vld [vmem:[%s0 + $0x271] sm:$0xff]
    %v171 = vld [vmem:[%s0 + $0x279] sm:$0xff]
    %v172 = vld [vmem:[%s0 + $0x289] sm:$0xff]
    %v173 = vld [vmem:[%s0 + $0x291] sm:$0xff]
    %v174 = vld [vmem:[%s0 + $0x2a1] sm:$0xff]
    %v175 = vld [vmem:[%s0 + $0x2a9] sm:$0xff]
    %v176 = vld [vmem:[%s0 + $0x2b9] sm:$0xff]
    %v177 = vld [vmem:[%s0 + $0x2c1] sm:$0xff]
    %v178 = vld [vmem:[%s0 + $0x2d1] sm:$0xff]
    %v179 = vld [vmem:[%s0 + $0x2d9] sm:$0xff]
    %v180 = vld [vmem:[%s0 + $0x2e9] sm:$0xff]
    %v181 = vld [vmem:[%s0 + $0x2f1] sm:$0xff]
    %v182 = vld [vmem:[%s0 + $0x301] sm:$0xff]
    %v183 = vld [vmem:[%s0 + $0x309] sm:$0xff]
    %v184 = vld [vmem:[%s0 + $0x319] sm:$0xff]
    %v185 = vld [vmem:[%s0 + $0x321] sm:$0xff]
    %v186 = vpack.c.bf16 %v123, %v122
    %v187 = vpack.c.bf16 %v125, %v124
    %v188 = vpack.c.bf16 %v127, %v126
    %v189 = vpack.c.bf16 %v129, %v128
    %v190 = vpack.c.bf16 %v131, %v130
    %v191 = vpack.c.bf16 %v133, %v132
    %v192 = vpack.c.bf16 %v135, %v134
    %v193 = vpack.c.bf16 %v137, %v136
    %v194 = vpack.c.bf16 %v139, %v138
    %v195 = vpack.c.bf16 %v141, %v140
    %v196 = vpack.c.bf16 %v143, %v142
    %v197 = vpack.c.bf16 %v145, %v144
    %v198 = vpack.c.bf16 %v147, %v146
    %v199 = vpack.c.bf16 %v149, %v148
    %v200 = vpack.c.bf16 %v151, %v150
    %v201 = vpack.c.bf16 %v153, %v152
    %v202 = vpack.c.bf16 %v155, %v154
    %v203 = vpack.c.bf16 %v157, %v156
    %v204 = vpack.c.bf16 %v159, %v158
    %v205 = vpack.c.bf16 %v161, %v160
    %v206 = vpack.c.bf16 %v163, %v162
    %v207 = vpack.c.bf16 %v165, %v164
    %v208 = vpack.c.bf16 %v167, %v166
    %v209 = vpack.c.bf16 %v169, %v168
    %v210 = vpack.c.bf16 %v171, %v170
    %v211 = vpack.c.bf16 %v173, %v172
    %v212 = vpack.c.bf16 %v175, %v174
    %v213 = vpack.c.bf16 %v177, %v176
    %v214 = vpack.c.bf16 %v179, %v178
    %v215 = vpack.c.bf16 %v181, %v180
    %v216 = vpack.c.bf16 %v183, %v182
    %v217 = vpack.c.bf16 %v185, %v184
    %s218 = scalar_lea.vmem %s1, 2
    %v219 = vld [vmem:[%s218] sm:$0x3]
    %vm220 = vcmask 31744
    %v222 = vsel %vm220, %v186, 0
    %v225 = vsel %vm220, %v187, 0
    %v228 = vsel %vm220, %v188, 0
    %v231 = vsel %vm220, %v189, 0
    %v234 = vsel %vm220, %v190, 0
    %v237 = vsel %vm220, %v191, 0
    %v240 = vsel %vm220, %v192, 0
    %v243 = vsel %vm220, %v193, 0
    %v246 = vsel %vm220, %v194, 0
    %v249 = vsel %vm220, %v195, 0
    %v252 = vsel %vm220, %v196, 0
    %v255 = vsel %vm220, %v197, 0
    %v258 = vsel %vm220, %v198, 0
    %v261 = vsel %vm220, %v199, 0
    %v264 = vsel %vm220, %v200, 0
    %v267 = vsel %vm220, %v201, 0
    %v270 = vsel %vm220, %v202, 0
    %v273 = vsel %vm220, %v203, 0
    %v276 = vsel %vm220, %v204, 0
    %v279 = vsel %vm220, %v205, 0
    %v282 = vsel %vm220, %v206, 0
    %v285 = vsel %vm220, %v207, 0
    %v288 = vsel %vm220, %v208, 0
    %v291 = vsel %vm220, %v209, 0
    %v294 = vsel %vm220, %v210, 0
    %v297 = vsel %vm220, %v211, 0
    %v300 = vsel %vm220, %v212, 0
    %v303 = vsel %vm220, %v213, 0
    %v306 = vsel %vm220, %v214, 0
    %v309 = vsel %vm220, %v215, 0
    %v312 = vsel %vm220, %v216, 0
    %v315 = vsel %vm220, %v217, 0
    %vm317 = vcmask 1041408
    %v319 = vsel %vm317, %v219, 0
    %321 = vmatpush.bf16.msra.mxu0 0
    %322 = vmatpush.bf16.msra.mxu0 0
    %323 = vmatpush.bf16.msra.mxu0 0
    %324 = vmatpush.bf16.msra.mxu0 0
    %325 = vmatpush.bf16.msra.mxu0 0
    %326 = vmatpush.bf16.msra.mxu0 0
    %327 = vmatpush.bf16.msra.mxu0 0
    %328 = vmatpush.bf16.msra.mxu0 %v319
    %329 = vmatmul.bf16.gmra.mxu0 %v222
    %v330 = vpop.f32.mrf.mxu0
    %v331 = vadd.f32 0.0, %v330
    %v332 = vpop.f32.mrf.mxu0
    %v333 = vadd.f32 0.0, %v332
    %334 = vmatmul.bf16.gmra.mxu0 %v225
    %v335 = vpop.f32.mrf.mxu0
    %v336 = vadd.f32 0.0, %v335
    %v337 = vpop.f32.mrf.mxu0
    %v338 = vadd.f32 0.0, %v337
    %339 = vmatmul.bf16.gmra.mxu0 %v228
    %v340 = vpop.f32.mrf.mxu0
    %v341 = vadd.f32 0.0, %v340
    %v342 = vpop.f32.mrf.mxu0
    %v343 = vadd.f32 0.0, %v342
    %344 = vmatmul.bf16.gmra.mxu0 %v231
    %v345 = vpop.f32.mrf.mxu0
    %v346 = vadd.f32 0.0, %v345
    %v347 = vpop.f32.mrf.mxu0
    %v348 = vadd.f32 0.0, %v347
    %349 = vmatmul.bf16.gmra.mxu0 %v234
    %v350 = vpop.f32.mrf.mxu0
    %v351 = vadd.f32 0.0, %v350
    %v352 = vpop.f32.mrf.mxu0
    %v353 = vadd.f32 0.0, %v352
    %354 = vmatmul.bf16.gmra.mxu0 %v237
    %v355 = vpop.f32.mrf.mxu0
    %v356 = vadd.f32 0.0, %v355
    %v357 = vpop.f32.mrf.mxu0
    %v358 = vadd.f32 0.0, %v357
    %359 = vmatmul.bf16.gmra.mxu0 %v240
    %v360 = vpop.f32.mrf.mxu0
    %v361 = vadd.f32 0.0, %v360
    %v362 = vpop.f32.mrf.mxu0
    %v363 = vadd.f32 0.0, %v362
    %364 = vmatmul.bf16.gmra.mxu0 %v243
    %v365 = vpop.f32.mrf.mxu0
    %v366 = vadd.f32 0.0, %v365
    %v367 = vpop.f32.mrf.mxu0
    %v368 = vadd.f32 0.0, %v367
    %369 = vmatmul.bf16.gmra.mxu0 %v246
    %v370 = vpop.f32.mrf.mxu0
    %v371 = vadd.f32 0.0, %v370
    %v372 = vpop.f32.mrf.mxu0
    %v373 = vadd.f32 0.0, %v372
    %374 = vmatmul.bf16.gmra.mxu0 %v249
    %v375 = vpop.f32.mrf.mxu0
    %v376 = vadd.f32 0.0, %v375
    %v377 = vpop.f32.mrf.mxu0
    %v378 = vadd.f32 0.0, %v377
    %379 = vmatmul.bf16.gmra.mxu0 %v252
    %v380 = vpop.f32.mrf.mxu0
    %v381 = vadd.f32 0.0, %v380
    %v382 = vpop.f32.mrf.mxu0
    %v383 = vadd.f32 0.0, %v382
    %384 = vmatmul.bf16.gmra.mxu0 %v255
    %v385 = vpop.f32.mrf.mxu0
    %v386 = vadd.f32 0.0, %v385
    %v387 = vpop.f32.mrf.mxu0
    %v388 = vadd.f32 0.0, %v387
    %389 = vmatmul.bf16.gmra.mxu0 %v258
    %v390 = vpop.f32.mrf.mxu0
    %v391 = vadd.f32 0.0, %v390
    %v392 = vpop.f32.mrf.mxu0
    %v393 = vadd.f32 0.0, %v392
    %394 = vmatmul.bf16.gmra.mxu0 %v261
    %v395 = vpop.f32.mrf.mxu0
    %v396 = vadd.f32 0.0, %v395
    %v397 = vpop.f32.mrf.mxu0
    %v398 = vadd.f32 0.0, %v397
    %399 = vmatmul.bf16.gmra.mxu0 %v264
    %v400 = vpop.f32.mrf.mxu0
    %v401 = vadd.f32 0.0, %v400
    %v402 = vpop.f32.mrf.mxu0
    %v403 = vadd.f32 0.0, %v402
    %404 = vmatmul.bf16.gmra.mxu0 %v267
    %v405 = vpop.f32.mrf.mxu0
    %v406 = vadd.f32 0.0, %v405
    %v407 = vpop.f32.mrf.mxu0
    %v408 = vadd.f32 0.0, %v407
    %409 = vmatmul.bf16.gmra.mxu0 %v270
    %v410 = vpop.f32.mrf.mxu0
    %v411 = vadd.f32 0.0, %v410
    %v412 = vpop.f32.mrf.mxu0
    %v413 = vadd.f32 0.0, %v412
    %414 = vmatmul.bf16.gmra.mxu0 %v273
    %v415 = vpop.f32.mrf.mxu0
    %v416 = vadd.f32 0.0, %v415
    %v417 = vpop.f32.mrf.mxu0
    %v418 = vadd.f32 0.0, %v417
    %419 = vmatmul.bf16.gmra.mxu0 %v276
    %v420 = vpop.f32.mrf.mxu0
    %v421 = vadd.f32 0.0, %v420
    %v422 = vpop.f32.mrf.mxu0
    %v423 = vadd.f32 0.0, %v422
    %424 = vmatmul.bf16.gmra.mxu0 %v279
    %v425 = vpop.f32.mrf.mxu0
    %v426 = vadd.f32 0.0, %v425
    %v427 = vpop.f32.mrf.mxu0
    %v428 = vadd.f32 0.0, %v427
    %429 = vmatmul.bf16.gmra.mxu0 %v282
    %v430 = vpop.f32.mrf.mxu0
    %v431 = vadd.f32 0.0, %v430
    %v432 = vpop.f32.mrf.mxu0
    %v433 = vadd.f32 0.0, %v432
    %434 = vmatmul.bf16.gmra.mxu0 %v285
    %v435 = vpop.f32.mrf.mxu0
    %v436 = vadd.f32 0.0, %v435
    %v437 = vpop.f32.mrf.mxu0
    %v438 = vadd.f32 0.0, %v437
    %439 = vmatmul.bf16.gmra.mxu0 %v288
    %v440 = vpop.f32.mrf.mxu0
    %v441 = vadd.f32 0.0, %v440
    %v442 = vpop.f32.mrf.mxu0
    %v443 = vadd.f32 0.0, %v442
    %444 = vmatmul.bf16.gmra.mxu0 %v291
    %v445 = vpop.f32.mrf.mxu0
    %v446 = vadd.f32 0.0, %v445
    %v447 = vpop.f32.mrf.mxu0
    %v448 = vadd.f32 0.0, %v447
    %449 = vmatmul.bf16.gmra.mxu0 %v294
    %v450 = vpop.f32.mrf.mxu0
    %v451 = vadd.f32 0.0, %v450
    %v452 = vpop.f32.mrf.mxu0
    %v453 = vadd.f32 0.0, %v452
    %454 = vmatmul.bf16.gmra.mxu0 %v297
    %v455 = vpop.f32.mrf.mxu0
    %v456 = vadd.f32 0.0, %v455
    %v457 = vpop.f32.mrf.mxu0
    %v458 = vadd.f32 0.0, %v457
    %459 = vmatmul.bf16.gmra.mxu0 %v300
    %v460 = vpop.f32.mrf.mxu0
    %v461 = vadd.f32 0.0, %v460
    %v462 = vpop.f32.mrf.mxu0
    %v463 = vadd.f32 0.0, %v462
    %464 = vmatmul.bf16.gmra.mxu0 %v303
    %v465 = vpop.f32.mrf.mxu0
    %v466 = vadd.f32 0.0, %v465
    %v467 = vpop.f32.mrf.mxu0
    %v468 = vadd.f32 0.0, %v467
    %469 = vmatmul.bf16.gmra.mxu0 %v306
    %v470 = vpop.f32.mrf.mxu0
    %v471 = vadd.f32 0.0, %v470
    %v472 = vpop.f32.mrf.mxu0
    %v473 = vadd.f32 0.0, %v472
    %474 = vmatmul.bf16.gmra.mxu0 %v309
    %v475 = vpop.f32.mrf.mxu0
    %v476 = vadd.f32 0.0, %v475
    %v477 = vpop.f32.mrf.mxu0
    %v478 = vadd.f32 0.0, %v477
    %479 = vmatmul.bf16.gmra.mxu0 %v312
    %v480 = vpop.f32.mrf.mxu0
    %v481 = vadd.f32 0.0, %v480
    %v482 = vpop.f32.mrf.mxu0
    %v483 = vadd.f32 0.0, %v482
    %484 = vmatmul.bf16.gmra.mxu0 %v315
    %v485 = vpop.f32.mrf.mxu0
    %v486 = vadd.f32 0.0, %v485
    %v487 = vpop.f32.mrf.mxu0
    %v488 = vadd.f32 0.0, %v487
    %489 = vdwg.mxu0
    %v491 = vsel %vm220, %v89, 0
    %v494 = vsel %vm220, %v90, 0
    %v497 = vsel %vm220, %v91, 0
    %v500 = vsel %vm220, %v92, 0
    %v503 = vsel %vm220, %v93, 0
    %v506 = vsel %vm220, %v94, 0
    %v509 = vsel %vm220, %v95, 0
    %v512 = vsel %vm220, %v96, 0
    %v515 = vsel %vm220, %v97, 0
    %v518 = vsel %vm220, %v98, 0
    %v521 = vsel %vm220, %v99, 0
    %v524 = vsel %vm220, %v100, 0
    %v527 = vsel %vm220, %v101, 0
    %v530 = vsel %vm220, %v102, 0
    %v533 = vsel %vm220, %v103, 0
    %v536 = vsel %vm220, %v104, 0
    %v539 = vsel %vm220, %v105, 0
    %v542 = vsel %vm220, %v106, 0
    %v545 = vsel %vm220, %v107, 0
    %v548 = vsel %vm220, %v108, 0
    %v551 = vsel %vm220, %v109, 0
    %v554 = vsel %vm220, %v110, 0
    %v557 = vsel %vm220, %v111, 0
    %v560 = vsel %vm220, %v112, 0
    %v563 = vsel %vm220, %v113, 0
    %v566 = vsel %vm220, %v114, 0
    %v569 = vsel %vm220, %v115, 0
    %v572 = vsel %vm220, %v116, 0
    %v575 = vsel %vm220, %v117, 0
    %v578 = vsel %vm220, %v118, 0
    %v581 = vsel %vm220, %v119, 0
    %v584 = vsel %vm220, %v120, 0
    %v587 = vsel %vm317, %v121, 0
    %589 = vmatpush.bf16.msra.mxu0 0
    %590 = vmatpush.bf16.msra.mxu0 0
    %591 = vmatpush.bf16.msra.mxu0 0
    %592 = vmatpush.bf16.msra.mxu0 0
    %593 = vmatpush.bf16.msra.mxu0 0
    %594 = vmatpush.bf16.msra.mxu0 0
    %595 = vmatpush.bf16.msra.mxu0 0
    %596 = vmatpush.bf16.msra.mxu0 %v587
    %597 = vmatmul.bf16.gmra.mxu0 %v491
    %v598 = vpop.f32.mrf.mxu0
    %v599 = vadd.f32 %v331, %v598
    %v600 = vpop.f32.mrf.mxu0
    %v601 = vadd.f32 %v333, %v600
    %602 = vmatmul.bf16.gmra.mxu0 %v494
    %v603 = vpop.f32.mrf.mxu0
    %v604 = vadd.f32 %v336, %v603
    %v605 = vpop.f32.mrf.mxu0
    %v606 = vadd.f32 %v338, %v605
    %607 = vmatmul.bf16.gmra.mxu0 %v497
    %v608 = vpop.f32.mrf.mxu0
    %v609 = vadd.f32 %v341, %v608
    %v610 = vpop.f32.mrf.mxu0
    %v611 = vadd.f32 %v343, %v610
    %612 = vmatmul.bf16.gmra.mxu0 %v500
    %v613 = vpop.f32.mrf.mxu0
    %v614 = vadd.f32 %v346, %v613
    %v615 = vpop.f32.mrf.mxu0
    %v616 = vadd.f32 %v348, %v615
    %617 = vmatmul.bf16.gmra.mxu0 %v503
    %v618 = vpop.f32.mrf.mxu0
    %v619 = vadd.f32 %v351, %v618
    %v620 = vpop.f32.mrf.mxu0
    %v621 = vadd.f32 %v353, %v620
    %622 = vmatmul.bf16.gmra.mxu0 %v506
    %v623 = vpop.f32.mrf.mxu0
    %v624 = vadd.f32 %v356, %v623
    %v625 = vpop.f32.mrf.mxu0
    %v626 = vadd.f32 %v358, %v625
    %627 = vmatmul.bf16.gmra.mxu0 %v509
    %v628 = vpop.f32.mrf.mxu0
    %v629 = vadd.f32 %v361, %v628
    %v630 = vpop.f32.mrf.mxu0
    %v631 = vadd.f32 %v363, %v630
    %632 = vmatmul.bf16.gmra.mxu0 %v512
    %v633 = vpop.f32.mrf.mxu0
    %v634 = vadd.f32 %v366, %v633
    %v635 = vpop.f32.mrf.mxu0
    %v636 = vadd.f32 %v368, %v635
    %637 = vmatmul.bf16.gmra.mxu0 %v515
    %v638 = vpop.f32.mrf.mxu0
    %v639 = vadd.f32 %v371, %v638
    %v640 = vpop.f32.mrf.mxu0
    %v641 = vadd.f32 %v373, %v640
    %642 = vmatmul.bf16.gmra.mxu0 %v518
    %v643 = vpop.f32.mrf.mxu0
    %v644 = vadd.f32 %v376, %v643
    %v645 = vpop.f32.mrf.mxu0
    %v646 = vadd.f32 %v378, %v645
    %647 = vmatmul.bf16.gmra.mxu0 %v521
    %v648 = vpop.f32.mrf.mxu0
    %v649 = vadd.f32 %v381, %v648
    %v650 = vpop.f32.mrf.mxu0
    %v651 = vadd.f32 %v383, %v650
    %652 = vmatmul.bf16.gmra.mxu0 %v524
    %v653 = vpop.f32.mrf.mxu0
    %v654 = vadd.f32 %v386, %v653
    %v655 = vpop.f32.mrf.mxu0
    %v656 = vadd.f32 %v388, %v655
    %657 = vmatmul.bf16.gmra.mxu0 %v527
    %v658 = vpop.f32.mrf.mxu0
    %v659 = vadd.f32 %v391, %v658
    %v660 = vpop.f32.mrf.mxu0
    %v661 = vadd.f32 %v393, %v660
    %662 = vmatmul.bf16.gmra.mxu0 %v530
    %v663 = vpop.f32.mrf.mxu0
    %v664 = vadd.f32 %v396, %v663
    %v665 = vpop.f32.mrf.mxu0
    %v666 = vadd.f32 %v398, %v665
    %667 = vmatmul.bf16.gmra.mxu0 %v533
    %v668 = vpop.f32.mrf.mxu0
    %v669 = vadd.f32 %v401, %v668
    %v670 = vpop.f32.mrf.mxu0
    %v671 = vadd.f32 %v403, %v670
    %672 = vmatmul.bf16.gmra.mxu0 %v536
    %v673 = vpop.f32.mrf.mxu0
    %v674 = vadd.f32 %v406, %v673
    %v675 = vpop.f32.mrf.mxu0
    %v676 = vadd.f32 %v408, %v675
    %677 = vmatmul.bf16.gmra.mxu0 %v539
    %v678 = vpop.f32.mrf.mxu0
    %v679 = vadd.f32 %v411, %v678
    %v680 = vpop.f32.mrf.mxu0
    %v681 = vadd.f32 %v413, %v680
    %682 = vmatmul.bf16.gmra.mxu0 %v542
    %v683 = vpop.f32.mrf.mxu0
    %v684 = vadd.f32 %v416, %v683
    %v685 = vpop.f32.mrf.mxu0
    %v686 = vadd.f32 %v418, %v685
    %687 = vmatmul.bf16.gmra.mxu0 %v545
    %v688 = vpop.f32.mrf.mxu0
    %v689 = vadd.f32 %v421, %v688
    %v690 = vpop.f32.mrf.mxu0
    %v691 = vadd.f32 %v423, %v690
    %692 = vmatmul.bf16.gmra.mxu0 %v548
    %v693 = vpop.f32.mrf.mxu0
    %v694 = vadd.f32 %v426, %v693
    %v695 = vpop.f32.mrf.mxu0
    %v696 = vadd.f32 %v428, %v695
    %697 = vmatmul.bf16.gmra.mxu0 %v551
    %v698 = vpop.f32.mrf.mxu0
    %v699 = vadd.f32 %v431, %v698
    %v700 = vpop.f32.mrf.mxu0
    %v701 = vadd.f32 %v433, %v700
    %702 = vmatmul.bf16.gmra.mxu0 %v554
    %v703 = vpop.f32.mrf.mxu0
    %v704 = vadd.f32 %v436, %v703
    %v705 = vpop.f32.mrf.mxu0
    %v706 = vadd.f32 %v438, %v705
    %707 = vmatmul.bf16.gmra.mxu0 %v557
    %v708 = vpop.f32.mrf.mxu0
    %v709 = vadd.f32 %v441, %v708
    %v710 = vpop.f32.mrf.mxu0
    %v711 = vadd.f32 %v443, %v710
    %712 = vmatmul.bf16.gmra.mxu0 %v560
    %v713 = vpop.f32.mrf.mxu0
    %v714 = vadd.f32 %v446, %v713
    %v715 = vpop.f32.mrf.mxu0
    %v716 = vadd.f32 %v448, %v715
    %717 = vmatmul.bf16.gmra.mxu0 %v563
    %v718 = vpop.f32.mrf.mxu0
    %v719 = vadd.f32 %v451, %v718
    %v720 = vpop.f32.mrf.mxu0
    %v721 = vadd.f32 %v453, %v720
    %722 = vmatmul.bf16.gmra.mxu0 %v566
    %v723 = vpop.f32.mrf.mxu0
    %v724 = vadd.f32 %v456, %v723
    %v725 = vpop.f32.mrf.mxu0
    %v726 = vadd.f32 %v458, %v725
    %727 = vmatmul.bf16.gmra.mxu0 %v569
    %v728 = vpop.f32.mrf.mxu0
    %v729 = vadd.f32 %v461, %v728
    %v730 = vpop.f32.mrf.mxu0
    %v731 = vadd.f32 %v463, %v730
    %732 = vmatmul.bf16.gmra.mxu0 %v572
    %v733 = vpop.f32.mrf.mxu0
    %v734 = vadd.f32 %v466, %v733
    %v735 = vpop.f32.mrf.mxu0
    %v736 = vadd.f32 %v468, %v735
    %737 = vmatmul.bf16.gmra.mxu0 %v575
    %v738 = vpop.f32.mrf.mxu0
    %v739 = vadd.f32 %v471, %v738
    %v740 = vpop.f32.mrf.mxu0
    %v741 = vadd.f32 %v473, %v740
    %742 = vmatmul.bf16.gmra.mxu0 %v578
    %v743 = vpop.f32.mrf.mxu0
    %v744 = vadd.f32 %v476, %v743
    %v745 = vpop.f32.mrf.mxu0
    %v746 = vadd.f32 %v478, %v745
    %747 = vmatmul.bf16.gmra.mxu0 %v581
    %v748 = vpop.f32.mrf.mxu0
    %v749 = vadd.f32 %v481, %v748
    %v750 = vpop.f32.mrf.mxu0
    %v751 = vadd.f32 %v483, %v750
    %752 = vmatmul.bf16.gmra.mxu0 %v584
    %v753 = vpop.f32.mrf.mxu0
    %v754 = vadd.f32 %v486, %v753
    %v755 = vpop.f32.mrf.mxu0
    %v756 = vadd.f32 %v488, %v755
    %757 = vdwg.mxu0
    %v758 = vld [vmem:[%s0 + $0x2] sm:$0xff]
    %v759 = vld [vmem:[%s0 + $0xa] sm:$0xff]
    %v760 = vld [vmem:[%s0 + $0x1a] sm:$0xff]
    %v761 = vld [vmem:[%s0 + $0x22] sm:$0xff]
    %v762 = vld [vmem:[%s0 + $0x32] sm:$0xff]
    %v763 = vld [vmem:[%s0 + $0x3a] sm:$0xff]
    %v764 = vld [vmem:[%s0 + $0x4a] sm:$0xff]
    %v765 = vld [vmem:[%s0 + $0x52] sm:$0xff]
    %v766 = vld [vmem:[%s0 + $0x62] sm:$0xff]
    %v767 = vld [vmem:[%s0 + $0x6a] sm:$0xff]
    %v768 = vld [vmem:[%s0 + $0x7a] sm:$0xff]
    %v769 = vld [vmem:[%s0 + $0x82] sm:$0xff]
    %v770 = vld [vmem:[%s0 + $0x92] sm:$0xff]
    %v771 = vld [vmem:[%s0 + $0x9a] sm:$0xff]
    %v772 = vld [vmem:[%s0 + $0xaa] sm:$0xff]
    %v773 = vld [vmem:[%s0 + $0xb2] sm:$0xff]
    %v774 = vld [vmem:[%s0 + $0xc2] sm:$0xff]
    %v775 = vld [vmem:[%s0 + $0xca] sm:$0xff]
    %v776 = vld [vmem:[%s0 + $0xda] sm:$0xff]
    %v777 = vld [vmem:[%s0 + $0xe2] sm:$0xff]
    %v778 = vld [vmem:[%s0 + $0xf2] sm:$0xff]
    %v779 = vld [vmem:[%s0 + $0xfa] sm:$0xff]
    %v780 = vld [vmem:[%s0 + $0x10a] sm:$0xff]
    %v781 = vld [vmem:[%s0 + $0x112] sm:$0xff]
    %v782 = vld [vmem:[%s0 + $0x122] sm:$0xff]
    %v783 = vld [vmem:[%s0 + $0x12a] sm:$0xff]
    %v784 = vld [vmem:[%s0 + $0x13a] sm:$0xff]
    %v785 = vld [vmem:[%s0 + $0x142] sm:$0xff]
    %v786 = vld [vmem:[%s0 + $0x152] sm:$0xff]
    %v787 = vld [vmem:[%s0 + $0x15a] sm:$0xff]
    %v788 = vld [vmem:[%s0 + $0x16a] sm:$0xff]
    %v789 = vld [vmem:[%s0 + $0x172] sm:$0xff]
    %v790 = vld [vmem:[%s0 + $0x1b2] sm:$0xff]
    %v791 = vld [vmem:[%s0 + $0x1ba] sm:$0xff]
    %v792 = vld [vmem:[%s0 + $0x1ca] sm:$0xff]
    %v793 = vld [vmem:[%s0 + $0x1d2] sm:$0xff]
    %v794 = vld [vmem:[%s0 + $0x1e2] sm:$0xff]
    %v795 = vld [vmem:[%s0 + $0x1ea] sm:$0xff]
    %v796 = vld [vmem:[%s0 + $0x1fa] sm:$0xff]
    %v797 = vld [vmem:[%s0 + $0x202] sm:$0xff]
    %v798 = vld [vmem:[%s0 + $0x212] sm:$0xff]
    %v799 = vld [vmem:[%s0 + $0x21a] sm:$0xff]
    %v800 = vld [vmem:[%s0 + $0x22a] sm:$0xff]
    %v801 = vld [vmem:[%s0 + $0x232] sm:$0xff]
    %v802 = vld [vmem:[%s0 + $0x242] sm:$0xff]
    %v803 = vld [vmem:[%s0 + $0x24a] sm:$0xff]
    %v804 = vld [vmem:[%s0 + $0x25a] sm:$0xff]
    %v805 = vld [vmem:[%s0 + $0x262] sm:$0xff]
    %v806 = vld [vmem:[%s0 + $0x272] sm:$0xff]
    %v807 = vld [vmem:[%s0 + $0x27a] sm:$0xff]
    %v808 = vld [vmem:[%s0 + $0x28a] sm:$0xff]
    %v809 = vld [vmem:[%s0 + $0x292] sm:$0xff]
    %v810 = vld [vmem:[%s0 + $0x2a2] sm:$0xff]
    %v811 = vld [vmem:[%s0 + $0x2aa] sm:$0xff]
    %v812 = vld [vmem:[%s0 + $0x2ba] sm:$0xff]
    %v813 = vld [vmem:[%s0 + $0x2c2] sm:$0xff]
    %v814 = vld [vmem:[%s0 + $0x2d2] sm:$0xff]
    %v815 = vld [vmem:[%s0 + $0x2da] sm:$0xff]
    %v816 = vld [vmem:[%s0 + $0x2ea] sm:$0xff]
    %v817 = vld [vmem:[%s0 + $0x2f2] sm:$0xff]
    %v818 = vld [vmem:[%s0 + $0x302] sm:$0xff]
    %v819 = vld [vmem:[%s0 + $0x30a] sm:$0xff]
    %v820 = vld [vmem:[%s0 + $0x31a] sm:$0xff]
    %v821 = vld [vmem:[%s0 + $0x322] sm:$0xff]
    %v822 = vpack.c.bf16 %v759, %v758
    %v823 = vpack.c.bf16 %v761, %v760
    %v824 = vpack.c.bf16 %v763, %v762
    %v825 = vpack.c.bf16 %v765, %v764
    %v826 = vpack.c.bf16 %v767, %v766
    %v827 = vpack.c.bf16 %v769, %v768
    %v828 = vpack.c.bf16 %v771, %v770
    %v829 = vpack.c.bf16 %v773, %v772
    %v830 = vpack.c.bf16 %v775, %v774
    %v831 = vpack.c.bf16 %v777, %v776
    %v832 = vpack.c.bf16 %v779, %v778
    %v833 = vpack.c.bf16 %v781, %v780
    %v834 = vpack.c.bf16 %v783, %v782
    %v835 = vpack.c.bf16 %v785, %v784
    %v836 = vpack.c.bf16 %v787, %v786
    %v837 = vpack.c.bf16 %v789, %v788
    %v838 = vpack.c.bf16 %v791, %v790
    %v839 = vpack.c.bf16 %v793, %v792
    %v840 = vpack.c.bf16 %v795, %v794
    %v841 = vpack.c.bf16 %v797, %v796
    %v842 = vpack.c.bf16 %v799, %v798
    %v843 = vpack.c.bf16 %v801, %v800
    %v844 = vpack.c.bf16 %v803, %v802
    %v845 = vpack.c.bf16 %v805, %v804
    %v846 = vpack.c.bf16 %v807, %v806
    %v847 = vpack.c.bf16 %v809, %v808
    %v848 = vpack.c.bf16 %v811, %v810
    %v849 = vpack.c.bf16 %v813, %v812
    %v850 = vpack.c.bf16 %v815, %v814
    %v851 = vpack.c.bf16 %v817, %v816
    %v852 = vpack.c.bf16 %v819, %v818
    %v853 = vpack.c.bf16 %v821, %v820
    %s854 = scalar_lea.vmem %s1, 4
    %v855 = vld [vmem:[%s854] sm:$0x3]
    %v857 = vsel %vm220, %v822, 0
    %v860 = vsel %vm220, %v823, 0
    %v863 = vsel %vm220, %v824, 0
    %v866 = vsel %vm220, %v825, 0
    %v869 = vsel %vm220, %v826, 0
    %v872 = vsel %vm220, %v827, 0
    %v875 = vsel %vm220, %v828, 0
    %v878 = vsel %vm220, %v829, 0
    %v881 = vsel %vm220, %v830, 0
    %v884 = vsel %vm220, %v831, 0
    %v887 = vsel %vm220, %v832, 0
    %v890 = vsel %vm220, %v833, 0
    %v893 = vsel %vm220, %v834, 0
    %v896 = vsel %vm220, %v835, 0
    %v899 = vsel %vm220, %v836, 0
    %v902 = vsel %vm220, %v837, 0
    %v905 = vsel %vm220, %v838, 0
    %v908 = vsel %vm220, %v839, 0
    %v911 = vsel %vm220, %v840, 0
    %v914 = vsel %vm220, %v841, 0
    %v917 = vsel %vm220, %v842, 0
    %v920 = vsel %vm220, %v843, 0
    %v923 = vsel %vm220, %v844, 0
    %v926 = vsel %vm220, %v845, 0
    %v929 = vsel %vm220, %v846, 0
    %v932 = vsel %vm220, %v847, 0
    %v935 = vsel %vm220, %v848, 0
    %v938 = vsel %vm220, %v849, 0
    %v941 = vsel %vm220, %v850, 0
    %v944 = vsel %vm220, %v851, 0
    %v947 = vsel %vm220, %v852, 0
    %v950 = vsel %vm220, %v853, 0
    %v953 = vsel %vm317, %v855, 0
    %955 = vmatpush.bf16.msra.mxu0 0
    %956 = vmatpush.bf16.msra.mxu0 0
    %957 = vmatpush.bf16.msra.mxu0 0
    %958 = vmatpush.bf16.msra.mxu0 0
    %959 = vmatpush.bf16.msra.mxu0 0
    %960 = vmatpush.bf16.msra.mxu0 0
    %961 = vmatpush.bf16.msra.mxu0 0
    %962 = vmatpush.bf16.msra.mxu0 %v953
    %963 = vmatmul.bf16.gmra.mxu0 %v857
    %v964 = vpop.f32.mrf.mxu0
    %v965 = vadd.f32 0.0, %v964
    %v966 = vpop.f32.mrf.mxu0
    %v967 = vadd.f32 0.0, %v966
    %968 = vmatmul.bf16.gmra.mxu0 %v860
    %v969 = vpop.f32.mrf.mxu0
    %v970 = vadd.f32 0.0, %v969
    %v971 = vpop.f32.mrf.mxu0
    %v972 = vadd.f32 0.0, %v971
    %973 = vmatmul.bf16.gmra.mxu0 %v863
    %v974 = vpop.f32.mrf.mxu0
    %v975 = vadd.f32 0.0, %v974
    %v976 = vpop.f32.mrf.mxu0
    %v977 = vadd.f32 0.0, %v976
    %978 = vmatmul.bf16.gmra.mxu0 %v866
    %v979 = vpop.f32.mrf.mxu0
    %v980 = vadd.f32 0.0, %v979
    %v981 = vpop.f32.mrf.mxu0
    %v982 = vadd.f32 0.0, %v981
    %983 = vmatmul.bf16.gmra.mxu0 %v869
    %v984 = vpop.f32.mrf.mxu0
    %v985 = vadd.f32 0.0, %v984
    %v986 = vpop.f32.mrf.mxu0
    %v987 = vadd.f32 0.0, %v986
    %988 = vmatmul.bf16.gmra.mxu0 %v872
    %v989 = vpop.f32.mrf.mxu0
    %v990 = vadd.f32 0.0, %v989
    %v991 = vpop.f32.mrf.mxu0
    %v992 = vadd.f32 0.0, %v991
    %993 = vmatmul.bf16.gmra.mxu0 %v875
    %v994 = vpop.f32.mrf.mxu0
    %v995 = vadd.f32 0.0, %v994
    %v996 = vpop.f32.mrf.mxu0
    %v997 = vadd.f32 0.0, %v996
    %998 = vmatmul.bf16.gmra.mxu0 %v878
    %v999 = vpop.f32.mrf.mxu0
    %v1000 = vadd.f32 0.0, %v999
    %v1001 = vpop.f32.mrf.mxu0
    %v1002 = vadd.f32 0.0, %v1001
    %1003 = vmatmul.bf16.gmra.mxu0 %v881
    %v1004 = vpop.f32.mrf.mxu0
    %v1005 = vadd.f32 0.0, %v1004
    %v1006 = vpop.f32.mrf.mxu0
    %v1007 = vadd.f32 0.0, %v1006
    %1008 = vmatmul.bf16.gmra.mxu0 %v884
    %v1009 = vpop.f32.mrf.mxu0
    %v1010 = vadd.f32 0.0, %v1009
    %v1011 = vpop.f32.mrf.mxu0
    %v1012 = vadd.f32 0.0, %v1011
    %1013 = vmatmul.bf16.gmra.mxu0 %v887
    %v1014 = vpop.f32.mrf.mxu0
    %v1015 = vadd.f32 0.0, %v1014
    %v1016 = vpop.f32.mrf.mxu0
    %v1017 = vadd.f32 0.0, %v1016
    %1018 = vmatmul.bf16.gmra.mxu0 %v890
    %v1019 = vpop.f32.mrf.mxu0
    %v1020 = vadd.f32 0.0, %v1019
    %v1021 = vpop.f32.mrf.mxu0
    %v1022 = vadd.f32 0.0, %v1021
    %1023 = vmatmul.bf16.gmra.mxu0 %v893
    %v1024 = vpop.f32.mrf.mxu0
    %v1025 = vadd.f32 0.0, %v1024
    %v1026 = vpop.f32.mrf.mxu0
    %v1027 = vadd.f32 0.0, %v1026
    %1028 = vmatmul.bf16.gmra.mxu0 %v896
    %v1029 = vpop.f32.mrf.mxu0
    %v1030 = vadd.f32 0.0, %v1029
    %v1031 = vpop.f32.mrf.mxu0
    %v1032 = vadd.f32 0.0, %v1031
    %1033 = vmatmul.bf16.gmra.mxu0 %v899
    %v1034 = vpop.f32.mrf.mxu0
    %v1035 = vadd.f32 0.0, %v1034
    %v1036 = vpop.f32.mrf.mxu0
    %v1037 = vadd.f32 0.0, %v1036
    %1038 = vmatmul.bf16.gmra.mxu0 %v902
    %v1039 = vpop.f32.mrf.mxu0
    %v1040 = vadd.f32 0.0, %v1039
    %v1041 = vpop.f32.mrf.mxu0
    %v1042 = vadd.f32 0.0, %v1041
    %1043 = vmatmul.bf16.gmra.mxu0 %v905
    %v1044 = vpop.f32.mrf.mxu0
    %v1045 = vadd.f32 0.0, %v1044
    %v1046 = vpop.f32.mrf.mxu0
    %v1047 = vadd.f32 0.0, %v1046
    %1048 = vmatmul.bf16.gmra.mxu0 %v908
    %v1049 = vpop.f32.mrf.mxu0
    %v1050 = vadd.f32 0.0, %v1049
    %v1051 = vpop.f32.mrf.mxu0
    %v1052 = vadd.f32 0.0, %v1051
    %1053 = vmatmul.bf16.gmra.mxu0 %v911
    %v1054 = vpop.f32.mrf.mxu0
    %v1055 = vadd.f32 0.0, %v1054
    %v1056 = vpop.f32.mrf.mxu0
    %v1057 = vadd.f32 0.0, %v1056
    %1058 = vmatmul.bf16.gmra.mxu0 %v914
    %v1059 = vpop.f32.mrf.mxu0
    %v1060 = vadd.f32 0.0, %v1059
    %v1061 = vpop.f32.mrf.mxu0
    %v1062 = vadd.f32 0.0, %v1061
    %1063 = vmatmul.bf16.gmra.mxu0 %v917
    %v1064 = vpop.f32.mrf.mxu0
    %v1065 = vadd.f32 0.0, %v1064
    %v1066 = vpop.f32.mrf.mxu0
    %v1067 = vadd.f32 0.0, %v1066
    %1068 = vmatmul.bf16.gmra.mxu0 %v920
    %v1069 = vpop.f32.mrf.mxu0
    %v1070 = vadd.f32 0.0, %v1069
    %v1071 = vpop.f32.mrf.mxu0
    %v1072 = vadd.f32 0.0, %v1071
    %1073 = vmatmul.bf16.gmra.mxu0 %v923
    %v1074 = vpop.f32.mrf.mxu0
    %v1075 = vadd.f32 0.0, %v1074
    %v1076 = vpop.f32.mrf.mxu0
    %v1077 = vadd.f32 0.0, %v1076
    %1078 = vmatmul.bf16.gmra.mxu0 %v926
    %v1079 = vpop.f32.mrf.mxu0
    %v1080 = vadd.f32 0.0, %v1079
    %v1081 = vpop.f32.mrf.mxu0
    %v1082 = vadd.f32 0.0, %v1081
    %1083 = vmatmul.bf16.gmra.mxu0 %v929
    %v1084 = vpop.f32.mrf.mxu0
    %v1085 = vadd.f32 0.0, %v1084
    %v1086 = vpop.f32.mrf.mxu0
    %v1087 = vadd.f32 0.0, %v1086
    %1088 = vmatmul.bf16.gmra.mxu0 %v932
    %v1089 = vpop.f32.mrf.mxu0
    %v1090 = vadd.f32 0.0, %v1089
    %v1091 = vpop.f32.mrf.mxu0
    %v1092 = vadd.f32 0.0, %v1091
    %1093 = vmatmul.bf16.gmra.mxu0 %v935
    %v1094 = vpop.f32.mrf.mxu0
    %v1095 = vadd.f32 0.0, %v1094
    %v1096 = vpop.f32.mrf.mxu0
    %v1097 = vadd.f32 0.0, %v1096
    %1098 = vmatmul.bf16.gmra.mxu0 %v938
    %v1099 = vpop.f32.mrf.mxu0
    %v1100 = vadd.f32 0.0, %v1099
    %v1101 = vpop.f32.mrf.mxu0
    %v1102 = vadd.f32 0.0, %v1101
    %1103 = vmatmul.bf16.gmra.mxu0 %v941
    %v1104 = vpop.f32.mrf.mxu0
    %v1105 = vadd.f32 0.0, %v1104
    %v1106 = vpop.f32.mrf.mxu0
    %v1107 = vadd.f32 0.0, %v1106
    %1108 = vmatmul.bf16.gmra.mxu0 %v944
    %v1109 = vpop.f32.mrf.mxu0
    %v1110 = vadd.f32 0.0, %v1109
    %v1111 = vpop.f32.mrf.mxu0
    %v1112 = vadd.f32 0.0, %v1111
    %1113 = vmatmul.bf16.gmra.mxu0 %v947
    %v1114 = vpop.f32.mrf.mxu0
    %v1115 = vadd.f32 0.0, %v1114
    %v1116 = vpop.f32.mrf.mxu0
    %v1117 = vadd.f32 0.0, %v1116
    %1118 = vmatmul.bf16.gmra.mxu0 %v950
    %v1119 = vpop.f32.mrf.mxu0
    %v1120 = vadd.f32 0.0, %v1119
    %v1121 = vpop.f32.mrf.mxu0
    %v1122 = vadd.f32 0.0, %v1121
    %1123 = vdwg.mxu0
    %v1124 = vadd.f32 %v599, %v965
    %v1125 = vadd.f32 %v601, %v967
    %v1126 = vadd.f32 %v604, %v970
    %v1127 = vadd.f32 %v606, %v972
    %v1128 = vadd.f32 %v609, %v975
    %v1129 = vadd.f32 %v611, %v977
    %v1130 = vadd.f32 %v614, %v980
    %v1131 = vadd.f32 %v616, %v982
    %v1132 = vadd.f32 %v619, %v985
    %v1133 = vadd.f32 %v621, %v987
    %v1134 = vadd.f32 %v624, %v990
    %v1135 = vadd.f32 %v626, %v992
    %v1136 = vadd.f32 %v629, %v995
    %v1137 = vadd.f32 %v631, %v997
    %v1138 = vadd.f32 %v634, %v1000
    %v1139 = vadd.f32 %v636, %v1002
    %v1140 = vadd.f32 %v639, %v1005
    %v1141 = vadd.f32 %v641, %v1007
    %v1142 = vadd.f32 %v644, %v1010
    %v1143 = vadd.f32 %v646, %v1012
    %v1144 = vadd.f32 %v649, %v1015
    %v1145 = vadd.f32 %v651, %v1017
    %v1146 = vadd.f32 %v654, %v1020
    %v1147 = vadd.f32 %v656, %v1022
    %v1148 = vadd.f32 %v659, %v1025
    %v1149 = vadd.f32 %v661, %v1027
    %v1150 = vadd.f32 %v664, %v1030
    %v1151 = vadd.f32 %v666, %v1032
    %v1152 = vadd.f32 %v669, %v1035
    %v1153 = vadd.f32 %v671, %v1037
    %v1154 = vadd.f32 %v674, %v1040
    %v1155 = vadd.f32 %v676, %v1042
    %v1156 = vadd.f32 %v679, %v1045
    %v1157 = vadd.f32 %v681, %v1047
    %v1158 = vadd.f32 %v684, %v1050
    %v1159 = vadd.f32 %v686, %v1052
    %v1160 = vadd.f32 %v689, %v1055
    %v1161 = vadd.f32 %v691, %v1057
    %v1162 = vadd.f32 %v694, %v1060
    %v1163 = vadd.f32 %v696, %v1062
    %v1164 = vadd.f32 %v699, %v1065
    %v1165 = vadd.f32 %v701, %v1067
    %v1166 = vadd.f32 %v704, %v1070
    %v1167 = vadd.f32 %v706, %v1072
    %v1168 = vadd.f32 %v709, %v1075
    %v1169 = vadd.f32 %v711, %v1077
    %v1170 = vadd.f32 %v714, %v1080
    %v1171 = vadd.f32 %v716, %v1082
    %v1172 = vadd.f32 %v719, %v1085
    %v1173 = vadd.f32 %v721, %v1087
    %v1174 = vadd.f32 %v724, %v1090
    %v1175 = vadd.f32 %v726, %v1092
    %v1176 = vadd.f32 %v729, %v1095
    %v1177 = vadd.f32 %v731, %v1097
    %v1178 = vadd.f32 %v734, %v1100
    %v1179 = vadd.f32 %v736, %v1102
    %v1180 = vadd.f32 %v739, %v1105
    %v1181 = vadd.f32 %v741, %v1107
    %v1182 = vadd.f32 %v744, %v1110
    %v1183 = vadd.f32 %v746, %v1112
    %v1184 = vadd.f32 %v749, %v1115
    %v1185 = vadd.f32 %v751, %v1117
    %v1186 = vadd.f32 %v754, %v1120
    %v1187 = vadd.f32 %v756, %v1122
    %s1188 = scalar_lea.vmem %s0, 24
    %v1189 = vld [vmem:[%s1188] sm:$0xff]
    %v1190 = vld [vmem:[%s1188 + $0x8] sm:$0xff]
    %v1191 = vld [vmem:[%s1188 + $0x18] sm:$0xff]
    %v1192 = vld [vmem:[%s1188 + $0x20] sm:$0xff]
    %v1193 = vld [vmem:[%s1188 + $0x30] sm:$0xff]
    %v1194 = vld [vmem:[%s1188 + $0x38] sm:$0xff]
    %v1195 = vld [vmem:[%s1188 + $0x48] sm:$0xff]
    %v1196 = vld [vmem:[%s1188 + $0x50] sm:$0xff]
    %v1197 = vld [vmem:[%s1188 + $0x60] sm:$0xff]
    %v1198 = vld [vmem:[%s1188 + $0x68] sm:$0xff]
    %v1199 = vld [vmem:[%s1188 + $0x78] sm:$0xff]
    %v1200 = vld [vmem:[%s1188 + $0x80] sm:$0xff]
    %v1201 = vld [vmem:[%s1188 + $0x90] sm:$0xff]
    %v1202 = vld [vmem:[%s1188 + $0x98] sm:$0xff]
    %v1203 = vld [vmem:[%s1188 + $0xa8] sm:$0xff]
    %v1204 = vld [vmem:[%s1188 + $0xb0] sm:$0xff]
    %v1205 = vld [vmem:[%s1188 + $0xc0] sm:$0xff]
    %v1206 = vld [vmem:[%s1188 + $0xc8] sm:$0xff]
    %v1207 = vld [vmem:[%s1188 + $0xd8] sm:$0xff]
    %v1208 = vld [vmem:[%s1188 + $0xe0] sm:$0xff]
    %v1209 = vld [vmem:[%s1188 + $0xf0] sm:$0xff]
    %v1210 = vld [vmem:[%s1188 + $0xf8] sm:$0xff]
    %v1211 = vld [vmem:[%s1188 + $0x108] sm:$0xff]
    %v1212 = vld [vmem:[%s1188 + $0x110] sm:$0xff]
    %v1213 = vld [vmem:[%s1188 + $0x120] sm:$0xff]
    %v1214 = vld [vmem:[%s1188 + $0x128] sm:$0xff]
    %v1215 = vld [vmem:[%s1188 + $0x138] sm:$0xff]
    %v1216 = vld [vmem:[%s1188 + $0x140] sm:$0xff]
    %v1217 = vld [vmem:[%s1188 + $0x150] sm:$0xff]
    %v1218 = vld [vmem:[%s1188 + $0x158] sm:$0xff]
    %v1219 = vld [vmem:[%s1188 + $0x168] sm:$0xff]
    %v1220 = vld [vmem:[%s1188 + $0x170] sm:$0xff]
    %v1221 = vld [vmem:[%s1188 + $0x1b0] sm:$0xff]
    %v1222 = vld [vmem:[%s1188 + $0x1b8] sm:$0xff]
    %v1223 = vld [vmem:[%s1188 + $0x1c8] sm:$0xff]
    %v1224 = vld [vmem:[%s1188 + $0x1d0] sm:$0xff]
    %v1225 = vld [vmem:[%s1188 + $0x1e0] sm:$0xff]
    %v1226 = vld [vmem:[%s1188 + $0x1e8] sm:$0xff]
    %v1227 = vld [vmem:[%s1188 + $0x1f8] sm:$0xff]
    %v1228 = vld [vmem:[%s1188 + $0x200] sm:$0xff]
    %v1229 = vld [vmem:[%s1188 + $0x210] sm:$0xff]
    %v1230 = vld [vmem:[%s1188 + $0x218] sm:$0xff]
    %v1231 = vld [vmem:[%s1188 + $0x228] sm:$0xff]
    %v1232 = vld [vmem:[%s1188 + $0x230] sm:$0xff]
    %v1233 = vld [vmem:[%s1188 + $0x240] sm:$0xff]
    %v1234 = vld [vmem:[%s1188 + $0x248] sm:$0xff]
    %v1235 = vld [vmem:[%s1188 + $0x258] sm:$0xff]
    %v1236 = vld [vmem:[%s1188 + $0x260] sm:$0xff]
    %v1237 = vld [vmem:[%s1188 + $0x270] sm:$0xff]
    %v1238 = vld [vmem:[%s1188 + $0x278] sm:$0xff]
    %v1239 = vld [vmem:[%s1188 + $0x288] sm:$0xff]
    %v1240 = vld [vmem:[%s1188 + $0x290] sm:$0xff]
    %v1241 = vld [vmem:[%s1188 + $0x2a0] sm:$0xff]
    %v1242 = vld [vmem:[%s1188 + $0x2a8] sm:$0xff]
    %v1243 = vld [vmem:[%s1188 + $0x2b8] sm:$0xff]
    %v1244 = vld [vmem:[%s1188 + $0x2c0] sm:$0xff]
    %v1245 = vld [vmem:[%s1188 + $0x2d0] sm:$0xff]
    %v1246 = vld [vmem:[%s1188 + $0x2d8] sm:$0xff]
    %v1247 = vld [vmem:[%s1188 + $0x2e8] sm:$0xff]
    %v1248 = vld [vmem:[%s1188 + $0x2f0] sm:$0xff]
    %v1249 = vld [vmem:[%s1188 + $0x300] sm:$0xff]
    %v1250 = vld [vmem:[%s1188 + $0x308] sm:$0xff]
    %v1251 = vld [vmem:[%s1188 + $0x318] sm:$0xff]
    %v1252 = vld [vmem:[%s1188 + $0x320] sm:$0xff]
    %v1253 = vpack.c.bf16 %v1190, %v1189
    %v1254 = vpack.c.bf16 %v1192, %v1191
    %v1255 = vpack.c.bf16 %v1194, %v1193
    %v1256 = vpack.c.bf16 %v1196, %v1195
    %v1257 = vpack.c.bf16 %v1198, %v1197
    %v1258 = vpack.c.bf16 %v1200, %v1199
    %v1259 = vpack.c.bf16 %v1202, %v1201
    %v1260 = vpack.c.bf16 %v1204, %v1203
    %v1261 = vpack.c.bf16 %v1206, %v1205
    %v1262 = vpack.c.bf16 %v1208, %v1207
    %v1263 = vpack.c.bf16 %v1210, %v1209
    %v1264 = vpack.c.bf16 %v1212, %v1211
    %v1265 = vpack.c.bf16 %v1214, %v1213
    %v1266 = vpack.c.bf16 %v1216, %v1215
    %v1267 = vpack.c.bf16 %v1218, %v1217
    %v1268 = vpack.c.bf16 %v1220, %v1219
    %v1269 = vpack.c.bf16 %v1222, %v1221
    %v1270 = vpack.c.bf16 %v1224, %v1223
    %v1271 = vpack.c.bf16 %v1226, %v1225
    %v1272 = vpack.c.bf16 %v1228, %v1227
    %v1273 = vpack.c.bf16 %v1230, %v1229
    %v1274 = vpack.c.bf16 %v1232, %v1231
    %v1275 = vpack.c.bf16 %v1234, %v1233
    %v1276 = vpack.c.bf16 %v1236, %v1235
    %v1277 = vpack.c.bf16 %v1238, %v1237
    %v1278 = vpack.c.bf16 %v1240, %v1239
    %v1279 = vpack.c.bf16 %v1242, %v1241
    %v1280 = vpack.c.bf16 %v1244, %v1243
    %v1281 = vpack.c.bf16 %v1246, %v1245
    %v1282 = vpack.c.bf16 %v1248, %v1247
    %v1283 = vpack.c.bf16 %v1250, %v1249
    %v1284 = vpack.c.bf16 %v1252, %v1251
    %s1285 = scalar_lea.vmem %s1, 6
    %v1286 = vld [vmem:[%s1285] sm:$0x3]
    %v1288 = vsel %vm220, %v1253, 0
    %v1291 = vsel %vm220, %v1254, 0
    %v1294 = vsel %vm220, %v1255, 0
    %v1297 = vsel %vm220, %v1256, 0
    %v1300 = vsel %vm220, %v1257, 0
    %v1303 = vsel %vm220, %v1258, 0
    %v1306 = vsel %vm220, %v1259, 0
    %v1309 = vsel %vm220, %v1260, 0
    %v1312 = vsel %vm220, %v1261, 0
    %v1315 = vsel %vm220, %v1262, 0
    %v1318 = vsel %vm220, %v1263, 0
    %v1321 = vsel %vm220, %v1264, 0
    %v1324 = vsel %vm220, %v1265, 0
    %v1327 = vsel %vm220, %v1266, 0
    %v1330 = vsel %vm220, %v1267, 0
    %v1333 = vsel %vm220, %v1268, 0
    %v1336 = vsel %vm220, %v1269, 0
    %v1339 = vsel %vm220, %v1270, 0
    %v1342 = vsel %vm220, %v1271, 0
    %v1345 = vsel %vm220, %v1272, 0
    %v1348 = vsel %vm220, %v1273, 0
    %v1351 = vsel %vm220, %v1274, 0
    %v1354 = vsel %vm220, %v1275, 0
    %v1357 = vsel %vm220, %v1276, 0
    %v1360 = vsel %vm220, %v1277, 0
    %v1363 = vsel %vm220, %v1278, 0
    %v1366 = vsel %vm220, %v1279, 0
    %v1369 = vsel %vm220, %v1280, 0
    %v1372 = vsel %vm220, %v1281, 0
    %v1375 = vsel %vm220, %v1282, 0
    %v1378 = vsel %vm220, %v1283, 0
    %v1381 = vsel %vm220, %v1284, 0
    %v1384 = vsel %vm317, %v1286, 0
    %1386 = vmatpush.bf16.msra.mxu0 0
    %1387 = vmatpush.bf16.msra.mxu0 0
    %1388 = vmatpush.bf16.msra.mxu0 0
    %1389 = vmatpush.bf16.msra.mxu0 0
    %1390 = vmatpush.bf16.msra.mxu0 0
    %1391 = vmatpush.bf16.msra.mxu0 0
    %1392 = vmatpush.bf16.msra.mxu0 0
    %1393 = vmatpush.bf16.msra.mxu0 %v1384
    %1394 = vmatmul.bf16.gmra.mxu0 %v1288
    %v1395 = vpop.f32.mrf.mxu0
    %v1396 = vadd.f32 0.0, %v1395
    %v1397 = vpop.f32.mrf.mxu0
    %v1398 = vadd.f32 0.0, %v1397
    %1399 = vmatmul.bf16.gmra.mxu0 %v1291
    %v1400 = vpop.f32.mrf.mxu0
    %v1401 = vadd.f32 0.0, %v1400
    %v1402 = vpop.f32.mrf.mxu0
    %v1403 = vadd.f32 0.0, %v1402
    %1404 = vmatmul.bf16.gmra.mxu0 %v1294
    %v1405 = vpop.f32.mrf.mxu0
    %v1406 = vadd.f32 0.0, %v1405
    %v1407 = vpop.f32.mrf.mxu0
    %v1408 = vadd.f32 0.0, %v1407
    %1409 = vmatmul.bf16.gmra.mxu0 %v1297
    %v1410 = vpop.f32.mrf.mxu0
    %v1411 = vadd.f32 0.0, %v1410
    %v1412 = vpop.f32.mrf.mxu0
    %v1413 = vadd.f32 0.0, %v1412
    %1414 = vmatmul.bf16.gmra.mxu0 %v1300
    %v1415 = vpop.f32.mrf.mxu0
    %v1416 = vadd.f32 0.0, %v1415
    %v1417 = vpop.f32.mrf.mxu0
    %v1418 = vadd.f32 0.0, %v1417
    %1419 = vmatmul.bf16.gmra.mxu0 %v1303
    %v1420 = vpop.f32.mrf.mxu0
    %v1421 = vadd.f32 0.0, %v1420
    %v1422 = vpop.f32.mrf.mxu0
    %v1423 = vadd.f32 0.0, %v1422
    %1424 = vmatmul.bf16.gmra.mxu0 %v1306
    %v1425 = vpop.f32.mrf.mxu0
    %v1426 = vadd.f32 0.0, %v1425
    %v1427 = vpop.f32.mrf.mxu0
    %v1428 = vadd.f32 0.0, %v1427
    %1429 = vmatmul.bf16.gmra.mxu0 %v1309
    %v1430 = vpop.f32.mrf.mxu0
    %v1431 = vadd.f32 0.0, %v1430
    %v1432 = vpop.f32.mrf.mxu0
    %v1433 = vadd.f32 0.0, %v1432
    %1434 = vmatmul.bf16.gmra.mxu0 %v1312
    %v1435 = vpop.f32.mrf.mxu0
    %v1436 = vadd.f32 0.0, %v1435
    %v1437 = vpop.f32.mrf.mxu0
    %v1438 = vadd.f32 0.0, %v1437
    %1439 = vmatmul.bf16.gmra.mxu0 %v1315
    %v1440 = vpop.f32.mrf.mxu0
    %v1441 = vadd.f32 0.0, %v1440
    %v1442 = vpop.f32.mrf.mxu0
    %v1443 = vadd.f32 0.0, %v1442
    %1444 = vmatmul.bf16.gmra.mxu0 %v1318
    %v1445 = vpop.f32.mrf.mxu0
    %v1446 = vadd.f32 0.0, %v1445
    %v1447 = vpop.f32.mrf.mxu0
    %v1448 = vadd.f32 0.0, %v1447
    %1449 = vmatmul.bf16.gmra.mxu0 %v1321
    %v1450 = vpop.f32.mrf.mxu0
    %v1451 = vadd.f32 0.0, %v1450
    %v1452 = vpop.f32.mrf.mxu0
    %v1453 = vadd.f32 0.0, %v1452
    %1454 = vmatmul.bf16.gmra.mxu0 %v1324
    %v1455 = vpop.f32.mrf.mxu0
    %v1456 = vadd.f32 0.0, %v1455
    %v1457 = vpop.f32.mrf.mxu0
    %v1458 = vadd.f32 0.0, %v1457
    %1459 = vmatmul.bf16.gmra.mxu0 %v1327
    %v1460 = vpop.f32.mrf.mxu0
    %v1461 = vadd.f32 0.0, %v1460
    %v1462 = vpop.f32.mrf.mxu0
    %v1463 = vadd.f32 0.0, %v1462
    %1464 = vmatmul.bf16.gmra.mxu0 %v1330
    %v1465 = vpop.f32.mrf.mxu0
    %v1466 = vadd.f32 0.0, %v1465
    %v1467 = vpop.f32.mrf.mxu0
    %v1468 = vadd.f32 0.0, %v1467
    %1469 = vmatmul.bf16.gmra.mxu0 %v1333
    %v1470 = vpop.f32.mrf.mxu0
    %v1471 = vadd.f32 0.0, %v1470
    %v1472 = vpop.f32.mrf.mxu0
    %v1473 = vadd.f32 0.0, %v1472
    %1474 = vmatmul.bf16.gmra.mxu0 %v1336
    %v1475 = vpop.f32.mrf.mxu0
    %v1476 = vadd.f32 0.0, %v1475
    %v1477 = vpop.f32.mrf.mxu0
    %v1478 = vadd.f32 0.0, %v1477
    %1479 = vmatmul.bf16.gmra.mxu0 %v1339
    %v1480 = vpop.f32.mrf.mxu0
    %v1481 = vadd.f32 0.0, %v1480
    %v1482 = vpop.f32.mrf.mxu0
    %v1483 = vadd.f32 0.0, %v1482
    %1484 = vmatmul.bf16.gmra.mxu0 %v1342
    %v1485 = vpop.f32.mrf.mxu0
    %v1486 = vadd.f32 0.0, %v1485
    %v1487 = vpop.f32.mrf.mxu0
    %v1488 = vadd.f32 0.0, %v1487
    %1489 = vmatmul.bf16.gmra.mxu0 %v1345
    %v1490 = vpop.f32.mrf.mxu0
    %v1491 = vadd.f32 0.0, %v1490
    %v1492 = vpop.f32.mrf.mxu0
    %v1493 = vadd.f32 0.0, %v1492
    %1494 = vmatmul.bf16.gmra.mxu0 %v1348
    %v1495 = vpop.f32.mrf.mxu0
    %v1496 = vadd.f32 0.0, %v1495
    %v1497 = vpop.f32.mrf.mxu0
    %v1498 = vadd.f32 0.0, %v1497
    %1499 = vmatmul.bf16.gmra.mxu0 %v1351
    %v1500 = vpop.f32.mrf.mxu0
    %v1501 = vadd.f32 0.0, %v1500
    %v1502 = vpop.f32.mrf.mxu0
    %v1503 = vadd.f32 0.0, %v1502
    %1504 = vmatmul.bf16.gmra.mxu0 %v1354
    %v1505 = vpop.f32.mrf.mxu0
    %v1506 = vadd.f32 0.0, %v1505
    %v1507 = vpop.f32.mrf.mxu0
    %v1508 = vadd.f32 0.0, %v1507
    %1509 = vmatmul.bf16.gmra.mxu0 %v1357
    %v1510 = vpop.f32.mrf.mxu0
    %v1511 = vadd.f32 0.0, %v1510
    %v1512 = vpop.f32.mrf.mxu0
    %v1513 = vadd.f32 0.0, %v1512
    %1514 = vmatmul.bf16.gmra.mxu0 %v1360
    %v1515 = vpop.f32.mrf.mxu0
    %v1516 = vadd.f32 0.0, %v1515
    %v1517 = vpop.f32.mrf.mxu0
    %v1518 = vadd.f32 0.0, %v1517
    %1519 = vmatmul.bf16.gmra.mxu0 %v1363
    %v1520 = vpop.f32.mrf.mxu0
    %v1521 = vadd.f32 0.0, %v1520
    %v1522 = vpop.f32.mrf.mxu0
    %v1523 = vadd.f32 0.0, %v1522
    %1524 = vmatmul.bf16.gmra.mxu0 %v1366
    %v1525 = vpop.f32.mrf.mxu0
    %v1526 = vadd.f32 0.0, %v1525
    %v1527 = vpop.f32.mrf.mxu0
    %v1528 = vadd.f32 0.0, %v1527
    %1529 = vmatmul.bf16.gmra.mxu0 %v1369
    %v1530 = vpop.f32.mrf.mxu0
    %v1531 = vadd.f32 0.0, %v1530
    %v1532 = vpop.f32.mrf.mxu0
    %v1533 = vadd.f32 0.0, %v1532
    %1534 = vmatmul.bf16.gmra.mxu0 %v1372
    %v1535 = vpop.f32.mrf.mxu0
    %v1536 = vadd.f32 0.0, %v1535
    %v1537 = vpop.f32.mrf.mxu0
    %v1538 = vadd.f32 0.0, %v1537
    %1539 = vmatmul.bf16.gmra.mxu0 %v1375
    %v1540 = vpop.f32.mrf.mxu0
    %v1541 = vadd.f32 0.0, %v1540
    %v1542 = vpop.f32.mrf.mxu0
    %v1543 = vadd.f32 0.0, %v1542
    %1544 = vmatmul.bf16.gmra.mxu0 %v1378
    %v1545 = vpop.f32.mrf.mxu0
    %v1546 = vadd.f32 0.0, %v1545
    %v1547 = vpop.f32.mrf.mxu0
    %v1548 = vadd.f32 0.0, %v1547
    %1549 = vmatmul.bf16.gmra.mxu0 %v1381
    %v1550 = vpop.f32.mrf.mxu0
    %v1551 = vadd.f32 0.0, %v1550
    %v1552 = vpop.f32.mrf.mxu0
    %v1553 = vadd.f32 0.0, %v1552
    %1554 = vdwg.mxu0
    %v1555 = vadd.f32 %v1124, %v1396
    %v1556 = vadd.f32 %v1125, %v1398
    %v1557 = vadd.f32 %v1126, %v1401
    %v1558 = vadd.f32 %v1127, %v1403
    %v1559 = vadd.f32 %v1128, %v1406
    %v1560 = vadd.f32 %v1129, %v1408
    %v1561 = vadd.f32 %v1130, %v1411
    %v1562 = vadd.f32 %v1131, %v1413
    %v1563 = vadd.f32 %v1132, %v1416
    %v1564 = vadd.f32 %v1133, %v1418
    %v1565 = vadd.f32 %v1134, %v1421
    %v1566 = vadd.f32 %v1135, %v1423
    %v1567 = vadd.f32 %v1136, %v1426
    %v1568 = vadd.f32 %v1137, %v1428
    %v1569 = vadd.f32 %v1138, %v1431
    %v1570 = vadd.f32 %v1139, %v1433
    %v1571 = vadd.f32 %v1140, %v1436
    %v1572 = vadd.f32 %v1141, %v1438
    %v1573 = vadd.f32 %v1142, %v1441
    %v1574 = vadd.f32 %v1143, %v1443
    %v1575 = vadd.f32 %v1144, %v1446
    %v1576 = vadd.f32 %v1145, %v1448
    %v1577 = vadd.f32 %v1146, %v1451
    %v1578 = vadd.f32 %v1147, %v1453
    %v1579 = vadd.f32 %v1148, %v1456
    %v1580 = vadd.f32 %v1149, %v1458
    %v1581 = vadd.f32 %v1150, %v1461
    %v1582 = vadd.f32 %v1151, %v1463
    %v1583 = vadd.f32 %v1152, %v1466
    %v1584 = vadd.f32 %v1153, %v1468
    %v1585 = vadd.f32 %v1154, %v1471
    %v1586 = vadd.f32 %v1155, %v1473
    %v1587 = vadd.f32 %v1156, %v1476
    %v1588 = vadd.f32 %v1157, %v1478
    %v1589 = vadd.f32 %v1158, %v1481
    %v1590 = vadd.f32 %v1159, %v1483
    %v1591 = vadd.f32 %v1160, %v1486
    %v1592 = vadd.f32 %v1161, %v1488
    %v1593 = vadd.f32 %v1162, %v1491
    %v1594 = vadd.f32 %v1163, %v1493
    %v1595 = vadd.f32 %v1164, %v1496
    %v1596 = vadd.f32 %v1165, %v1498
    %v1597 = vadd.f32 %v1166, %v1501
    %v1598 = vadd.f32 %v1167, %v1503
    %v1599 = vadd.f32 %v1168, %v1506
    %v1600 = vadd.f32 %v1169, %v1508
    %v1601 = vadd.f32 %v1170, %v1511
    %v1602 = vadd.f32 %v1171, %v1513
    %v1603 = vadd.f32 %v1172, %v1516
    %v1604 = vadd.f32 %v1173, %v1518
    %v1605 = vadd.f32 %v1174, %v1521
    %v1606 = vadd.f32 %v1175, %v1523
    %v1607 = vadd.f32 %v1176, %v1526
    %v1608 = vadd.f32 %v1177, %v1528
    %v1609 = vadd.f32 %v1178, %v1531
    %v1610 = vadd.f32 %v1179, %v1533
    %v1611 = vadd.f32 %v1180, %v1536
    %v1612 = vadd.f32 %v1181, %v1538
    %v1613 = vadd.f32 %v1182, %v1541
    %v1614 = vadd.f32 %v1183, %v1543
    %v1615 = vadd.f32 %v1184, %v1546
    %v1616 = vadd.f32 %v1185, %v1548
    %v1617 = vadd.f32 %v1186, %v1551
    %v1618 = vadd.f32 %v1187, %v1553
    %v1619 = vld [vmem:[%s1188 + $0x1] sm:$0xff]
    %v1620 = vld [vmem:[%s1188 + $0x9] sm:$0xff]
    %v1621 = vld [vmem:[%s1188 + $0x19] sm:$0xff]
    %v1622 = vld [vmem:[%s1188 + $0x21] sm:$0xff]
    %v1623 = vld [vmem:[%s1188 + $0x31] sm:$0xff]
    %v1624 = vld [vmem:[%s1188 + $0x39] sm:$0xff]
    %v1625 = vld [vmem:[%s1188 + $0x49] sm:$0xff]
    %v1626 = vld [vmem:[%s1188 + $0x51] sm:$0xff]
    %v1627 = vld [vmem:[%s1188 + $0x61] sm:$0xff]
    %v1628 = vld [vmem:[%s1188 + $0x69] sm:$0xff]
    %v1629 = vld [vmem:[%s1188 + $0x79] sm:$0xff]
    %v1630 = vld [vmem:[%s1188 + $0x81] sm:$0xff]
    %v1631 = vld [vmem:[%s1188 + $0x91] sm:$0xff]
    %v1632 = vld [vmem:[%s1188 + $0x99] sm:$0xff]
    %v1633 = vld [vmem:[%s1188 + $0xa9] sm:$0xff]
    %v1634 = vld [vmem:[%s1188 + $0xb1] sm:$0xff]
    %v1635 = vld [vmem:[%s1188 + $0xc1] sm:$0xff]
    %v1636 = vld [vmem:[%s1188 + $0xc9] sm:$0xff]
    %v1637 = vld [vmem:[%s1188 + $0xd9] sm:$0xff]
    %v1638 = vld [vmem:[%s1188 + $0xe1] sm:$0xff]
    %v1639 = vld [vmem:[%s1188 + $0xf1] sm:$0xff]
    %v1640 = vld [vmem:[%s1188 + $0xf9] sm:$0xff]
    %v1641 = vld [vmem:[%s1188 + $0x109] sm:$0xff]
    %v1642 = vld [vmem:[%s1188 + $0x111] sm:$0xff]
    %v1643 = vld [vmem:[%s1188 + $0x121] sm:$0xff]
    %v1644 = vld [vmem:[%s1188 + $0x129] sm:$0xff]
    %v1645 = vld [vmem:[%s1188 + $0x139] sm:$0xff]
    %v1646 = vld [vmem:[%s1188 + $0x141] sm:$0xff]
    %v1647 = vld [vmem:[%s1188 + $0x151] sm:$0xff]
    %v1648 = vld [vmem:[%s1188 + $0x159] sm:$0xff]
    %v1649 = vld [vmem:[%s1188 + $0x169] sm:$0xff]
    %v1650 = vld [vmem:[%s1188 + $0x171] sm:$0xff]
    %v1651 = vld [vmem:[%s1188 + $0x1b1] sm:$0xff]
    %v1652 = vld [vmem:[%s1188 + $0x1b9] sm:$0xff]
    %v1653 = vld [vmem:[%s1188 + $0x1c9] sm:$0xff]
    %v1654 = vld [vmem:[%s1188 + $0x1d1] sm:$0xff]
    %v1655 = vld [vmem:[%s1188 + $0x1e1] sm:$0xff]
    %v1656 = vld [vmem:[%s1188 + $0x1e9] sm:$0xff]
    %v1657 = vld [vmem:[%s1188 + $0x1f9] sm:$0xff]
    %v1658 = vld [vmem:[%s1188 + $0x201] sm:$0xff]
    %v1659 = vld [vmem:[%s1188 + $0x211] sm:$0xff]
    %v1660 = vld [vmem:[%s1188 + $0x219] sm:$0xff]
    %v1661 = vld [vmem:[%s1188 + $0x229] sm:$0xff]
    %v1662 = vld [vmem:[%s1188 + $0x231] sm:$0xff]
    %v1663 = vld [vmem:[%s1188 + $0x241] sm:$0xff]
    %v1664 = vld [vmem:[%s1188 + $0x249] sm:$0xff]
    %v1665 = vld [vmem:[%s1188 + $0x259] sm:$0xff]
    %v1666 = vld [vmem:[%s1188 + $0x261] sm:$0xff]
    %v1667 = vld [vmem:[%s1188 + $0x271] sm:$0xff]
    %v1668 = vld [vmem:[%s1188 + $0x279] sm:$0xff]
    %v1669 = vld [vmem:[%s1188 + $0x289] sm:$0xff]
    %v1670 = vld [vmem:[%s1188 + $0x291] sm:$0xff]
    %v1671 = vld [vmem:[%s1188 + $0x2a1] sm:$0xff]
    %v1672 = vld [vmem:[%s1188 + $0x2a9] sm:$0xff]
    %v1673 = vld [vmem:[%s1188 + $0x2b9] sm:$0xff]
    %v1674 = vld [vmem:[%s1188 + $0x2c1] sm:$0xff]
    %v1675 = vld [vmem:[%s1188 + $0x2d1] sm:$0xff]
    %v1676 = vld [vmem:[%s1188 + $0x2d9] sm:$0xff]
    %v1677 = vld [vmem:[%s1188 + $0x2e9] sm:$0xff]
    %v1678 = vld [vmem:[%s1188 + $0x2f1] sm:$0xff]
    %v1679 = vld [vmem:[%s1188 + $0x301] sm:$0xff]
    %v1680 = vld [vmem:[%s1188 + $0x309] sm:$0xff]
    %v1681 = vld [vmem:[%s1188 + $0x319] sm:$0xff]
    %v1682 = vld [vmem:[%s1188 + $0x321] sm:$0xff]
    %v1683 = vpack.c.bf16 %v1620, %v1619
    %v1684 = vpack.c.bf16 %v1622, %v1621
    %v1685 = vpack.c.bf16 %v1624, %v1623
    %v1686 = vpack.c.bf16 %v1626, %v1625
    %v1687 = vpack.c.bf16 %v1628, %v1627
    %v1688 = vpack.c.bf16 %v1630, %v1629
    %v1689 = vpack.c.bf16 %v1632, %v1631
    %v1690 = vpack.c.bf16 %v1634, %v1633
    %v1691 = vpack.c.bf16 %v1636, %v1635
    %v1692 = vpack.c.bf16 %v1638, %v1637
    %v1693 = vpack.c.bf16 %v1640, %v1639
    %v1694 = vpack.c.bf16 %v1642, %v1641
    %v1695 = vpack.c.bf16 %v1644, %v1643
    %v1696 = vpack.c.bf16 %v1646, %v1645
    %v1697 = vpack.c.bf16 %v1648, %v1647
    %v1698 = vpack.c.bf16 %v1650, %v1649
    %v1699 = vpack.c.bf16 %v1652, %v1651
    %v1700 = vpack.c.bf16 %v1654, %v1653
    %v1701 = vpack.c.bf16 %v1656, %v1655
    %v1702 = vpack.c.bf16 %v1658, %v1657
    %v1703 = vpack.c.bf16 %v1660, %v1659
    %v1704 = vpack.c.bf16 %v1662, %v1661
    %v1705 = vpack.c.bf16 %v1664, %v1663
    %v1706 = vpack.c.bf16 %v1666, %v1665
    %v1707 = vpack.c.bf16 %v1668, %v1667
    %v1708 = vpack.c.bf16 %v1670, %v1669
    %v1709 = vpack.c.bf16 %v1672, %v1671
    %v1710 = vpack.c.bf16 %v1674, %v1673
    %v1711 = vpack.c.bf16 %v1676, %v1675
    %v1712 = vpack.c.bf16 %v1678, %v1677
    %v1713 = vpack.c.bf16 %v1680, %v1679
    %v1714 = vpack.c.bf16 %v1682, %v1681
    %s1715 = scalar_lea.vmem %s1, 8
    %v1716 = vld [vmem:[%s1715] sm:$0x3]
    %v1718 = vsel %vm220, %v1683, 0
    %v1721 = vsel %vm220, %v1684, 0
    %v1724 = vsel %vm220, %v1685, 0
    %v1727 = vsel %vm220, %v1686, 0
    %v1730 = vsel %vm220, %v1687, 0
    %v1733 = vsel %vm220, %v1688, 0
    %v1736 = vsel %vm220, %v1689, 0
    %v1739 = vsel %vm220, %v1690, 0
    %v1742 = vsel %vm220, %v1691, 0
    %v1745 = vsel %vm220, %v1692, 0
    %v1748 = vsel %vm220, %v1693, 0
    %v1751 = vsel %vm220, %v1694, 0
    %v1754 = vsel %vm220, %v1695, 0
    %v1757 = vsel %vm220, %v1696, 0
    %v1760 = vsel %vm220, %v1697, 0
    %v1763 = vsel %vm220, %v1698, 0
    %v1766 = vsel %vm220, %v1699, 0
    %v1769 = vsel %vm220, %v1700, 0
    %v1772 = vsel %vm220, %v1701, 0
    %v1775 = vsel %vm220, %v1702, 0
    %v1778 = vsel %vm220, %v1703, 0
    %v1781 = vsel %vm220, %v1704, 0
    %v1784 = vsel %vm220, %v1705, 0
    %v1787 = vsel %vm220, %v1706, 0
    %v1790 = vsel %vm220, %v1707, 0
    %v1793 = vsel %vm220, %v1708, 0
    %v1796 = vsel %vm220, %v1709, 0
    %v1799 = vsel %vm220, %v1710, 0
    %v1802 = vsel %vm220, %v1711, 0
    %v1805 = vsel %vm220, %v1712, 0
    %v1808 = vsel %vm220, %v1713, 0
    %v1811 = vsel %vm220, %v1714, 0
    %v1814 = vsel %vm317, %v1716, 0
    %1816 = vmatpush.bf16.msra.mxu0 0
    %1817 = vmatpush.bf16.msra.mxu0 0
    %1818 = vmatpush.bf16.msra.mxu0 0
    %1819 = vmatpush.bf16.msra.mxu0 0
    %1820 = vmatpush.bf16.msra.mxu0 0
    %1821 = vmatpush.bf16.msra.mxu0 0
    %1822 = vmatpush.bf16.msra.mxu0 0
    %1823 = vmatpush.bf16.msra.mxu0 %v1814
    %1824 = vmatmul.bf16.gmra.mxu0 %v1718
    %v1825 = vpop.f32.mrf.mxu0
    %v1826 = vadd.f32 0.0, %v1825
    %v1827 = vpop.f32.mrf.mxu0
    %v1828 = vadd.f32 0.0, %v1827
    %1829 = vmatmul.bf16.gmra.mxu0 %v1721
    %v1830 = vpop.f32.mrf.mxu0
    %v1831 = vadd.f32 0.0, %v1830
    %v1832 = vpop.f32.mrf.mxu0
    %v1833 = vadd.f32 0.0, %v1832
    %1834 = vmatmul.bf16.gmra.mxu0 %v1724
    %v1835 = vpop.f32.mrf.mxu0
    %v1836 = vadd.f32 0.0, %v1835
    %v1837 = vpop.f32.mrf.mxu0
    %v1838 = vadd.f32 0.0, %v1837
    %1839 = vmatmul.bf16.gmra.mxu0 %v1727
    %v1840 = vpop.f32.mrf.mxu0
    %v1841 = vadd.f32 0.0, %v1840
    %v1842 = vpop.f32.mrf.mxu0
    %v1843 = vadd.f32 0.0, %v1842
    %1844 = vmatmul.bf16.gmra.mxu0 %v1730
    %v1845 = vpop.f32.mrf.mxu0
    %v1846 = vadd.f32 0.0, %v1845
    %v1847 = vpop.f32.mrf.mxu0
    %v1848 = vadd.f32 0.0, %v1847
    %1849 = vmatmul.bf16.gmra.mxu0 %v1733
    %v1850 = vpop.f32.mrf.mxu0
    %v1851 = vadd.f32 0.0, %v1850
    %v1852 = vpop.f32.mrf.mxu0
    %v1853 = vadd.f32 0.0, %v1852
    %1854 = vmatmul.bf16.gmra.mxu0 %v1736
    %v1855 = vpop.f32.mrf.mxu0
    %v1856 = vadd.f32 0.0, %v1855
    %v1857 = vpop.f32.mrf.mxu0
    %v1858 = vadd.f32 0.0, %v1857
    %1859 = vmatmul.bf16.gmra.mxu0 %v1739
    %v1860 = vpop.f32.mrf.mxu0
    %v1861 = vadd.f32 0.0, %v1860
    %v1862 = vpop.f32.mrf.mxu0
    %v1863 = vadd.f32 0.0, %v1862
    %1864 = vmatmul.bf16.gmra.mxu0 %v1742
    %v1865 = vpop.f32.mrf.mxu0
    %v1866 = vadd.f32 0.0, %v1865
    %v1867 = vpop.f32.mrf.mxu0
    %v1868 = vadd.f32 0.0, %v1867
    %1869 = vmatmul.bf16.gmra.mxu0 %v1745
    %v1870 = vpop.f32.mrf.mxu0
    %v1871 = vadd.f32 0.0, %v1870
    %v1872 = vpop.f32.mrf.mxu0
    %v1873 = vadd.f32 0.0, %v1872
    %1874 = vmatmul.bf16.gmra.mxu0 %v1748
    %v1875 = vpop.f32.mrf.mxu0
    %v1876 = vadd.f32 0.0, %v1875
    %v1877 = vpop.f32.mrf.mxu0
    %v1878 = vadd.f32 0.0, %v1877
    %1879 = vmatmul.bf16.gmra.mxu0 %v1751
    %v1880 = vpop.f32.mrf.mxu0
    %v1881 = vadd.f32 0.0, %v1880
    %v1882 = vpop.f32.mrf.mxu0
    %v1883 = vadd.f32 0.0, %v1882
    %1884 = vmatmul.bf16.gmra.mxu0 %v1754
    %v1885 = vpop.f32.mrf.mxu0
    %v1886 = vadd.f32 0.0, %v1885
    %v1887 = vpop.f32.mrf.mxu0
    %v1888 = vadd.f32 0.0, %v1887
    %1889 = vmatmul.bf16.gmra.mxu0 %v1757
    %v1890 = vpop.f32.mrf.mxu0
    %v1891 = vadd.f32 0.0, %v1890
    %v1892 = vpop.f32.mrf.mxu0
    %v1893 = vadd.f32 0.0, %v1892
    %1894 = vmatmul.bf16.gmra.mxu0 %v1760
    %v1895 = vpop.f32.mrf.mxu0
    %v1896 = vadd.f32 0.0, %v1895
    %v1897 = vpop.f32.mrf.mxu0
    %v1898 = vadd.f32 0.0, %v1897
    %1899 = vmatmul.bf16.gmra.mxu0 %v1763
    %v1900 = vpop.f32.mrf.mxu0
    %v1901 = vadd.f32 0.0, %v1900
    %v1902 = vpop.f32.mrf.mxu0
    %v1903 = vadd.f32 0.0, %v1902
    %1904 = vmatmul.bf16.gmra.mxu0 %v1766
    %v1905 = vpop.f32.mrf.mxu0
    %v1906 = vadd.f32 0.0, %v1905
    %v1907 = vpop.f32.mrf.mxu0
    %v1908 = vadd.f32 0.0, %v1907
    %1909 = vmatmul.bf16.gmra.mxu0 %v1769
    %v1910 = vpop.f32.mrf.mxu0
    %v1911 = vadd.f32 0.0, %v1910
    %v1912 = vpop.f32.mrf.mxu0
    %v1913 = vadd.f32 0.0, %v1912
    %1914 = vmatmul.bf16.gmra.mxu0 %v1772
    %v1915 = vpop.f32.mrf.mxu0
    %v1916 = vadd.f32 0.0, %v1915
    %v1917 = vpop.f32.mrf.mxu0
    %v1918 = vadd.f32 0.0, %v1917
    %1919 = vmatmul.bf16.gmra.mxu0 %v1775
    %v1920 = vpop.f32.mrf.mxu0
    %v1921 = vadd.f32 0.0, %v1920
    %v1922 = vpop.f32.mrf.mxu0
    %v1923 = vadd.f32 0.0, %v1922
    %1924 = vmatmul.bf16.gmra.mxu0 %v1778
    %v1925 = vpop.f32.mrf.mxu0
    %v1926 = vadd.f32 0.0, %v1925
    %v1927 = vpop.f32.mrf.mxu0
    %v1928 = vadd.f32 0.0, %v1927
    %1929 = vmatmul.bf16.gmra.mxu0 %v1781
    %v1930 = vpop.f32.mrf.mxu0
    %v1931 = vadd.f32 0.0, %v1930
    %v1932 = vpop.f32.mrf.mxu0
    %v1933 = vadd.f32 0.0, %v1932
    %1934 = vmatmul.bf16.gmra.mxu0 %v1784
    %v1935 = vpop.f32.mrf.mxu0
    %v1936 = vadd.f32 0.0, %v1935
    %v1937 = vpop.f32.mrf.mxu0
    %v1938 = vadd.f32 0.0, %v1937
    %1939 = vmatmul.bf16.gmra.mxu0 %v1787
    %v1940 = vpop.f32.mrf.mxu0
    %v1941 = vadd.f32 0.0, %v1940
    %v1942 = vpop.f32.mrf.mxu0
    %v1943 = vadd.f32 0.0, %v1942
    %1944 = vmatmul.bf16.gmra.mxu0 %v1790
    %v1945 = vpop.f32.mrf.mxu0
    %v1946 = vadd.f32 0.0, %v1945
    %v1947 = vpop.f32.mrf.mxu0
    %v1948 = vadd.f32 0.0, %v1947
    %1949 = vmatmul.bf16.gmra.mxu0 %v1793
    %v1950 = vpop.f32.mrf.mxu0
    %v1951 = vadd.f32 0.0, %v1950
    %v1952 = vpop.f32.mrf.mxu0
    %v1953 = vadd.f32 0.0, %v1952
    %1954 = vmatmul.bf16.gmra.mxu0 %v1796
    %v1955 = vpop.f32.mrf.mxu0
    %v1956 = vadd.f32 0.0, %v1955
    %v1957 = vpop.f32.mrf.mxu0
    %v1958 = vadd.f32 0.0, %v1957
    %1959 = vmatmul.bf16.gmra.mxu0 %v1799
    %v1960 = vpop.f32.mrf.mxu0
    %v1961 = vadd.f32 0.0, %v1960
    %v1962 = vpop.f32.mrf.mxu0
    %v1963 = vadd.f32 0.0, %v1962
    %1964 = vmatmul.bf16.gmra.mxu0 %v1802
    %v1965 = vpop.f32.mrf.mxu0
    %v1966 = vadd.f32 0.0, %v1965
    %v1967 = vpop.f32.mrf.mxu0
    %v1968 = vadd.f32 0.0, %v1967
    %1969 = vmatmul.bf16.gmra.mxu0 %v1805
    %v1970 = vpop.f32.mrf.mxu0
    %v1971 = vadd.f32 0.0, %v1970
    %v1972 = vpop.f32.mrf.mxu0
    %v1973 = vadd.f32 0.0, %v1972
    %1974 = vmatmul.bf16.gmra.mxu0 %v1808
    %v1975 = vpop.f32.mrf.mxu0
    %v1976 = vadd.f32 0.0, %v1975
    %v1977 = vpop.f32.mrf.mxu0
    %v1978 = vadd.f32 0.0, %v1977
    %1979 = vmatmul.bf16.gmra.mxu0 %v1811
    %v1980 = vpop.f32.mrf.mxu0
    %v1981 = vadd.f32 0.0, %v1980
    %v1982 = vpop.f32.mrf.mxu0
    %v1983 = vadd.f32 0.0, %v1982
    %1984 = vdwg.mxu0
    %v1985 = vadd.f32 %v1555, %v1826
    %v1986 = vadd.f32 %v1556, %v1828
    %v1987 = vadd.f32 %v1557, %v1831
    %v1988 = vadd.f32 %v1558, %v1833
    %v1989 = vadd.f32 %v1559, %v1836
    %v1990 = vadd.f32 %v1560, %v1838
    %v1991 = vadd.f32 %v1561, %v1841
    %v1992 = vadd.f32 %v1562, %v1843
    %v1993 = vadd.f32 %v1563, %v1846
    %v1994 = vadd.f32 %v1564, %v1848
    %v1995 = vadd.f32 %v1565, %v1851
    %v1996 = vadd.f32 %v1566, %v1853
    %v1997 = vadd.f32 %v1567, %v1856
    %v1998 = vadd.f32 %v1568, %v1858
    %v1999 = vadd.f32 %v1569, %v1861
    %v2000 = vadd.f32 %v1570, %v1863
    %v2001 = vadd.f32 %v1571, %v1866
    %v2002 = vadd.f32 %v1572, %v1868
    %v2003 = vadd.f32 %v1573, %v1871
    %v2004 = vadd.f32 %v1574, %v1873
    %v2005 = vadd.f32 %v1575, %v1876
    %v2006 = vadd.f32 %v1576, %v1878
    %v2007 = vadd.f32 %v1577, %v1881
    %v2008 = vadd.f32 %v1578, %v1883
    %v2009 = vadd.f32 %v1579, %v1886
    %v2010 = vadd.f32 %v1580, %v1888
    %v2011 = vadd.f32 %v1581, %v1891
    %v2012 = vadd.f32 %v1582, %v1893
    %v2013 = vadd.f32 %v1583, %v1896
    %v2014 = vadd.f32 %v1584, %v1898
    %v2015 = vadd.f32 %v1585, %v1901
    %v2016 = vadd.f32 %v1586, %v1903
    %v2017 = vadd.f32 %v1587, %v1906
    %v2018 = vadd.f32 %v1588, %v1908
    %v2019 = vadd.f32 %v1589, %v1911
    %v2020 = vadd.f32 %v1590, %v1913
    %v2021 = vadd.f32 %v1591, %v1916
    %v2022 = vadd.f32 %v1592, %v1918
    %v2023 = vadd.f32 %v1593, %v1921
    %v2024 = vadd.f32 %v1594, %v1923
    %v2025 = vadd.f32 %v1595, %v1926
    %v2026 = vadd.f32 %v1596, %v1928
    %v2027 = vadd.f32 %v1597, %v1931
    %v2028 = vadd.f32 %v1598, %v1933
    %v2029 = vadd.f32 %v1599, %v1936
    %v2030 = vadd.f32 %v1600, %v1938
    %v2031 = vadd.f32 %v1601, %v1941
    %v2032 = vadd.f32 %v1602, %v1943
    %v2033 = vadd.f32 %v1603, %v1946
    %v2034 = vadd.f32 %v1604, %v1948
    %v2035 = vadd.f32 %v1605, %v1951
    %v2036 = vadd.f32 %v1606, %v1953
    %v2037 = vadd.f32 %v1607, %v1956
    %v2038 = vadd.f32 %v1608, %v1958
    %v2039 = vadd.f32 %v1609, %v1961
    %v2040 = vadd.f32 %v1610, %v1963
    %v2041 = vadd.f32 %v1611, %v1966
    %v2042 = vadd.f32 %v1612, %v1968
    %v2043 = vadd.f32 %v1613, %v1971
    %v2044 = vadd.f32 %v1614, %v1973
    %v2045 = vadd.f32 %v1615, %v1976
    %v2046 = vadd.f32 %v1616, %v1978
    %v2047 = vadd.f32 %v1617, %v1981
    %v2048 = vadd.f32 %v1618, %v1983
    %v2049 = vld [vmem:[%s1188 + $0x2] sm:$0xff]
    %v2050 = vld [vmem:[%s1188 + $0xa] sm:$0xff]
    %v2051 = vld [vmem:[%s1188 + $0x1a] sm:$0xff]
    %v2052 = vld [vmem:[%s1188 + $0x22] sm:$0xff]
    %v2053 = vld [vmem:[%s1188 + $0x32] sm:$0xff]
    %v2054 = vld [vmem:[%s1188 + $0x3a] sm:$0xff]
    %v2055 = vld [vmem:[%s1188 + $0x4a] sm:$0xff]
    %v2056 = vld [vmem:[%s1188 + $0x52] sm:$0xff]
    %v2057 = vld [vmem:[%s1188 + $0x62] sm:$0xff]
    %v2058 = vld [vmem:[%s1188 + $0x6a] sm:$0xff]
    %v2059 = vld [vmem:[%s1188 + $0x7a] sm:$0xff]
    %v2060 = vld [vmem:[%s1188 + $0x82] sm:$0xff]
    %v2061 = vld [vmem:[%s1188 + $0x92] sm:$0xff]
    %v2062 = vld [vmem:[%s1188 + $0x9a] sm:$0xff]
    %v2063 = vld [vmem:[%s1188 + $0xaa] sm:$0xff]
    %v2064 = vld [vmem:[%s1188 + $0xb2] sm:$0xff]
    %v2065 = vld [vmem:[%s1188 + $0xc2] sm:$0xff]
    %v2066 = vld [vmem:[%s1188 + $0xca] sm:$0xff]
    %v2067 = vld [vmem:[%s1188 + $0xda] sm:$0xff]
    %v2068 = vld [vmem:[%s1188 + $0xe2] sm:$0xff]
    %v2069 = vld [vmem:[%s1188 + $0xf2] sm:$0xff]
    %v2070 = vld [vmem:[%s1188 + $0xfa] sm:$0xff]
    %v2071 = vld [vmem:[%s1188 + $0x10a] sm:$0xff]
    %v2072 = vld [vmem:[%s1188 + $0x112] sm:$0xff]
    %v2073 = vld [vmem:[%s1188 + $0x122] sm:$0xff]
    %v2074 = vld [vmem:[%s1188 + $0x12a] sm:$0xff]
    %v2075 = vld [vmem:[%s1188 + $0x13a] sm:$0xff]
    %v2076 = vld [vmem:[%s1188 + $0x142] sm:$0xff]
    %v2077 = vld [vmem:[%s1188 + $0x152] sm:$0xff]
    %v2078 = vld [vmem:[%s1188 + $0x15a] sm:$0xff]
    %v2079 = vld [vmem:[%s1188 + $0x16a] sm:$0xff]
    %v2080 = vld [vmem:[%s1188 + $0x172] sm:$0xff]
    %v2081 = vld [vmem:[%s1188 + $0x1b2] sm:$0xff]
    %v2082 = vld [vmem:[%s1188 + $0x1ba] sm:$0xff]
    %v2083 = vld [vmem:[%s1188 + $0x1ca] sm:$0xff]
    %v2084 = vld [vmem:[%s1188 + $0x1d2] sm:$0xff]
    %v2085 = vld [vmem:[%s1188 + $0x1e2] sm:$0xff]
    %v2086 = vld [vmem:[%s1188 + $0x1ea] sm:$0xff]
    %v2087 = vld [vmem:[%s1188 + $0x1fa] sm:$0xff]
    %v2088 = vld [vmem:[%s1188 + $0x202] sm:$0xff]
    %v2089 = vld [vmem:[%s1188 + $0x212] sm:$0xff]
    %v2090 = vld [vmem:[%s1188 + $0x21a] sm:$0xff]
    %v2091 = vld [vmem:[%s1188 + $0x22a] sm:$0xff]
    %v2092 = vld [vmem:[%s1188 + $0x232] sm:$0xff]
    %v2093 = vld [vmem:[%s1188 + $0x242] sm:$0xff]
    %v2094 = vld [vmem:[%s1188 + $0x24a] sm:$0xff]
    %v2095 = vld [vmem:[%s1188 + $0x25a] sm:$0xff]
    %v2096 = vld [vmem:[%s1188 + $0x262] sm:$0xff]
    %v2097 = vld [vmem:[%s1188 + $0x272] sm:$0xff]
    %v2098 = vld [vmem:[%s1188 + $0x27a] sm:$0xff]
    %v2099 = vld [vmem:[%s1188 + $0x28a] sm:$0xff]
    %v2100 = vld [vmem:[%s1188 + $0x292] sm:$0xff]
    %v2101 = vld [vmem:[%s1188 + $0x2a2] sm:$0xff]
    %v2102 = vld [vmem:[%s1188 + $0x2aa] sm:$0xff]
    %v2103 = vld [vmem:[%s1188 + $0x2ba] sm:$0xff]
    %v2104 = vld [vmem:[%s1188 + $0x2c2] sm:$0xff]
    %v2105 = vld [vmem:[%s1188 + $0x2d2] sm:$0xff]
    %v2106 = vld [vmem:[%s1188 + $0x2da] sm:$0xff]
    %v2107 = vld [vmem:[%s1188 + $0x2ea] sm:$0xff]
    %v2108 = vld [vmem:[%s1188 + $0x2f2] sm:$0xff]
    %v2109 = vld [vmem:[%s1188 + $0x302] sm:$0xff]
    %v2110 = vld [vmem:[%s1188 + $0x30a] sm:$0xff]
    %v2111 = vld [vmem:[%s1188 + $0x31a] sm:$0xff]
    %v2112 = vld [vmem:[%s1188 + $0x322] sm:$0xff]
    %v2113 = vpack.c.bf16 %v2050, %v2049
    %v2114 = vpack.c.bf16 %v2052, %v2051
    %v2115 = vpack.c.bf16 %v2054, %v2053
    %v2116 = vpack.c.bf16 %v2056, %v2055
    %v2117 = vpack.c.bf16 %v2058, %v2057
    %v2118 = vpack.c.bf16 %v2060, %v2059
    %v2119 = vpack.c.bf16 %v2062, %v2061
    %v2120 = vpack.c.bf16 %v2064, %v2063
    %v2121 = vpack.c.bf16 %v2066, %v2065
    %v2122 = vpack.c.bf16 %v2068, %v2067
    %v2123 = vpack.c.bf16 %v2070, %v2069
    %v2124 = vpack.c.bf16 %v2072, %v2071
    %v2125 = vpack.c.bf16 %v2074, %v2073
    %v2126 = vpack.c.bf16 %v2076, %v2075
    %v2127 = vpack.c.bf16 %v2078, %v2077
    %v2128 = vpack.c.bf16 %v2080, %v2079
    %v2129 = vpack.c.bf16 %v2082, %v2081
    %v2130 = vpack.c.bf16 %v2084, %v2083
    %v2131 = vpack.c.bf16 %v2086, %v2085
    %v2132 = vpack.c.bf16 %v2088, %v2087
    %v2133 = vpack.c.bf16 %v2090, %v2089
    %v2134 = vpack.c.bf16 %v2092, %v2091
    %v2135 = vpack.c.bf16 %v2094, %v2093
    %v2136 = vpack.c.bf16 %v2096, %v2095
    %v2137 = vpack.c.bf16 %v2098, %v2097
    %v2138 = vpack.c.bf16 %v2100, %v2099
    %v2139 = vpack.c.bf16 %v2102, %v2101
    %v2140 = vpack.c.bf16 %v2104, %v2103
    %v2141 = vpack.c.bf16 %v2106, %v2105
    %v2142 = vpack.c.bf16 %v2108, %v2107
    %v2143 = vpack.c.bf16 %v2110, %v2109
    %v2144 = vpack.c.bf16 %v2112, %v2111
    %s2145 = scalar_lea.vmem %s1, 10
    %v2146 = vld [vmem:[%s2145] sm:$0x3]
    %v2148 = vsel %vm220, %v2113, 0
    %v2151 = vsel %vm220, %v2114, 0
    %v2154 = vsel %vm220, %v2115, 0
    %v2157 = vsel %vm220, %v2116, 0
    %v2160 = vsel %vm220, %v2117, 0
    %v2163 = vsel %vm220, %v2118, 0
    %v2166 = vsel %vm220, %v2119, 0
    %v2169 = vsel %vm220, %v2120, 0
    %v2172 = vsel %vm220, %v2121, 0
    %v2175 = vsel %vm220, %v2122, 0
    %v2178 = vsel %vm220, %v2123, 0
    %v2181 = vsel %vm220, %v2124, 0
    %v2184 = vsel %vm220, %v2125, 0
    %v2187 = vsel %vm220, %v2126, 0
    %v2190 = vsel %vm220, %v2127, 0
    %v2193 = vsel %vm220, %v2128, 0
    %v2196 = vsel %vm220, %v2129, 0
    %v2199 = vsel %vm220, %v2130, 0
    %v2202 = vsel %vm220, %v2131, 0
    %v2205 = vsel %vm220, %v2132, 0
    %v2208 = vsel %vm220, %v2133, 0
    %v2211 = vsel %vm220, %v2134, 0
    %v2214 = vsel %vm220, %v2135, 0
    %v2217 = vsel %vm220, %v2136, 0
    %v2220 = vsel %vm220, %v2137, 0
    %v2223 = vsel %vm220, %v2138, 0
    %v2226 = vsel %vm220, %v2139, 0
    %v2229 = vsel %vm220, %v2140, 0
    %v2232 = vsel %vm220, %v2141, 0
    %v2235 = vsel %vm220, %v2142, 0
    %v2238 = vsel %vm220, %v2143, 0
    %v2241 = vsel %vm220, %v2144, 0
    %v2244 = vsel %vm317, %v2146, 0
    %2246 = vmatpush.bf16.msra.mxu0 0
    %2247 = vmatpush.bf16.msra.mxu0 0
    %2248 = vmatpush.bf16.msra.mxu0 0
    %2249 = vmatpush.bf16.msra.mxu0 0
    %2250 = vmatpush.bf16.msra.mxu0 0
    %2251 = vmatpush.bf16.msra.mxu0 0
    %2252 = vmatpush.bf16.msra.mxu0 0
    %2253 = vmatpush.bf16.msra.mxu0 %v2244
    %2254 = vmatmul.bf16.gmra.mxu0 %v2148
    %v2255 = vpop.f32.mrf.mxu0
    %v2256 = vadd.f32 0.0, %v2255
    %v2257 = vpop.f32.mrf.mxu0
    %v2258 = vadd.f32 0.0, %v2257
    %2259 = vmatmul.bf16.gmra.mxu0 %v2151
    %v2260 = vpop.f32.mrf.mxu0
    %v2261 = vadd.f32 0.0, %v2260
    %v2262 = vpop.f32.mrf.mxu0
    %v2263 = vadd.f32 0.0, %v2262
    %2264 = vmatmul.bf16.gmra.mxu0 %v2154
    %v2265 = vpop.f32.mrf.mxu0
    %v2266 = vadd.f32 0.0, %v2265
    %v2267 = vpop.f32.mrf.mxu0
    %v2268 = vadd.f32 0.0, %v2267
    %2269 = vmatmul.bf16.gmra.mxu0 %v2157
    %v2270 = vpop.f32.mrf.mxu0
    %v2271 = vadd.f32 0.0, %v2270
    %v2272 = vpop.f32.mrf.mxu0
    %v2273 = vadd.f32 0.0, %v2272
    %2274 = vmatmul.bf16.gmra.mxu0 %v2160
    %v2275 = vpop.f32.mrf.mxu0
    %v2276 = vadd.f32 0.0, %v2275
    %v2277 = vpop.f32.mrf.mxu0
    %v2278 = vadd.f32 0.0, %v2277
    %2279 = vmatmul.bf16.gmra.mxu0 %v2163
    %v2280 = vpop.f32.mrf.mxu0
    %v2281 = vadd.f32 0.0, %v2280
    %v2282 = vpop.f32.mrf.mxu0
    %v2283 = vadd.f32 0.0, %v2282
    %2284 = vmatmul.bf16.gmra.mxu0 %v2166
    %v2285 = vpop.f32.mrf.mxu0
    %v2286 = vadd.f32 0.0, %v2285
    %v2287 = vpop.f32.mrf.mxu0
    %v2288 = vadd.f32 0.0, %v2287
    %2289 = vmatmul.bf16.gmra.mxu0 %v2169
    %v2290 = vpop.f32.mrf.mxu0
    %v2291 = vadd.f32 0.0, %v2290
    %v2292 = vpop.f32.mrf.mxu0
    %v2293 = vadd.f32 0.0, %v2292
    %2294 = vmatmul.bf16.gmra.mxu0 %v2172
    %v2295 = vpop.f32.mrf.mxu0
    %v2296 = vadd.f32 0.0, %v2295
    %v2297 = vpop.f32.mrf.mxu0
    %v2298 = vadd.f32 0.0, %v2297
    %2299 = vmatmul.bf16.gmra.mxu0 %v2175
    %v2300 = vpop.f32.mrf.mxu0
    %v2301 = vadd.f32 0.0, %v2300
    %v2302 = vpop.f32.mrf.mxu0
    %v2303 = vadd.f32 0.0, %v2302
    %2304 = vmatmul.bf16.gmra.mxu0 %v2178
    %v2305 = vpop.f32.mrf.mxu0
    %v2306 = vadd.f32 0.0, %v2305
    %v2307 = vpop.f32.mrf.mxu0
    %v2308 = vadd.f32 0.0, %v2307
    %2309 = vmatmul.bf16.gmra.mxu0 %v2181
    %v2310 = vpop.f32.mrf.mxu0
    %v2311 = vadd.f32 0.0, %v2310
    %v2312 = vpop.f32.mrf.mxu0
    %v2313 = vadd.f32 0.0, %v2312
    %2314 = vmatmul.bf16.gmra.mxu0 %v2184
    %v2315 = vpop.f32.mrf.mxu0
    %v2316 = vadd.f32 0.0, %v2315
    %v2317 = vpop.f32.mrf.mxu0
    %v2318 = vadd.f32 0.0, %v2317
    %2319 = vmatmul.bf16.gmra.mxu0 %v2187
    %v2320 = vpop.f32.mrf.mxu0
    %v2321 = vadd.f32 0.0, %v2320
    %v2322 = vpop.f32.mrf.mxu0
    %v2323 = vadd.f32 0.0, %v2322
    %2324 = vmatmul.bf16.gmra.mxu0 %v2190
    %v2325 = vpop.f32.mrf.mxu0
    %v2326 = vadd.f32 0.0, %v2325
    %v2327 = vpop.f32.mrf.mxu0
    %v2328 = vadd.f32 0.0, %v2327
    %2329 = vmatmul.bf16.gmra.mxu0 %v2193
    %v2330 = vpop.f32.mrf.mxu0
    %v2331 = vadd.f32 0.0, %v2330
    %v2332 = vpop.f32.mrf.mxu0
    %v2333 = vadd.f32 0.0, %v2332
    %2334 = vmatmul.bf16.gmra.mxu0 %v2196
    %v2335 = vpop.f32.mrf.mxu0
    %v2336 = vadd.f32 0.0, %v2335
    %v2337 = vpop.f32.mrf.mxu0
    %v2338 = vadd.f32 0.0, %v2337
    %2339 = vmatmul.bf16.gmra.mxu0 %v2199
    %v2340 = vpop.f32.mrf.mxu0
    %v2341 = vadd.f32 0.0, %v2340
    %v2342 = vpop.f32.mrf.mxu0
    %v2343 = vadd.f32 0.0, %v2342
    %2344 = vmatmul.bf16.gmra.mxu0 %v2202
    %v2345 = vpop.f32.mrf.mxu0
    %v2346 = vadd.f32 0.0, %v2345
    %v2347 = vpop.f32.mrf.mxu0
    %v2348 = vadd.f32 0.0, %v2347
    %2349 = vmatmul.bf16.gmra.mxu0 %v2205
    %v2350 = vpop.f32.mrf.mxu0
    %v2351 = vadd.f32 0.0, %v2350
    %v2352 = vpop.f32.mrf.mxu0
    %v2353 = vadd.f32 0.0, %v2352
    %2354 = vmatmul.bf16.gmra.mxu0 %v2208
    %v2355 = vpop.f32.mrf.mxu0
    %v2356 = vadd.f32 0.0, %v2355
    %v2357 = vpop.f32.mrf.mxu0
    %v2358 = vadd.f32 0.0, %v2357
    %2359 = vmatmul.bf16.gmra.mxu0 %v2211
    %v2360 = vpop.f32.mrf.mxu0
    %v2361 = vadd.f32 0.0, %v2360
    %v2362 = vpop.f32.mrf.mxu0
    %v2363 = vadd.f32 0.0, %v2362
    %2364 = vmatmul.bf16.gmra.mxu0 %v2214
    %v2365 = vpop.f32.mrf.mxu0
    %v2366 = vadd.f32 0.0, %v2365
    %v2367 = vpop.f32.mrf.mxu0
    %v2368 = vadd.f32 0.0, %v2367
    %2369 = vmatmul.bf16.gmra.mxu0 %v2217
    %v2370 = vpop.f32.mrf.mxu0
    %v2371 = vadd.f32 0.0, %v2370
    %v2372 = vpop.f32.mrf.mxu0
    %v2373 = vadd.f32 0.0, %v2372
    %2374 = vmatmul.bf16.gmra.mxu0 %v2220
    %v2375 = vpop.f32.mrf.mxu0
    %v2376 = vadd.f32 0.0, %v2375
    %v2377 = vpop.f32.mrf.mxu0
    %v2378 = vadd.f32 0.0, %v2377
    %2379 = vmatmul.bf16.gmra.mxu0 %v2223
    %v2380 = vpop.f32.mrf.mxu0
    %v2381 = vadd.f32 0.0, %v2380
    %v2382 = vpop.f32.mrf.mxu0
    %v2383 = vadd.f32 0.0, %v2382
    %2384 = vmatmul.bf16.gmra.mxu0 %v2226
    %v2385 = vpop.f32.mrf.mxu0
    %v2386 = vadd.f32 0.0, %v2385
    %v2387 = vpop.f32.mrf.mxu0
    %v2388 = vadd.f32 0.0, %v2387
    %2389 = vmatmul.bf16.gmra.mxu0 %v2229
    %v2390 = vpop.f32.mrf.mxu0
    %v2391 = vadd.f32 0.0, %v2390
    %v2392 = vpop.f32.mrf.mxu0
    %v2393 = vadd.f32 0.0, %v2392
    %2394 = vmatmul.bf16.gmra.mxu0 %v2232
    %v2395 = vpop.f32.mrf.mxu0
    %v2396 = vadd.f32 0.0, %v2395
    %v2397 = vpop.f32.mrf.mxu0
    %v2398 = vadd.f32 0.0, %v2397
    %2399 = vmatmul.bf16.gmra.mxu0 %v2235
    %v2400 = vpop.f32.mrf.mxu0
    %v2401 = vadd.f32 0.0, %v2400
    %v2402 = vpop.f32.mrf.mxu0
    %v2403 = vadd.f32 0.0, %v2402
    %2404 = vmatmul.bf16.gmra.mxu0 %v2238
    %v2405 = vpop.f32.mrf.mxu0
    %v2406 = vadd.f32 0.0, %v2405
    %v2407 = vpop.f32.mrf.mxu0
    %v2408 = vadd.f32 0.0, %v2407
    %2409 = vmatmul.bf16.gmra.mxu0 %v2241
    %v2410 = vpop.f32.mrf.mxu0
    %v2411 = vadd.f32 0.0, %v2410
    %v2412 = vpop.f32.mrf.mxu0
    %v2413 = vadd.f32 0.0, %v2412
    %2414 = vdwg.mxu0
    %v2415 = vadd.f32 %v1985, %v2256
    %v2416 = vadd.f32 %v1986, %v2258
    %v2417 = vadd.f32 %v1987, %v2261
    %v2418 = vadd.f32 %v1988, %v2263
    %v2419 = vadd.f32 %v1989, %v2266
    %v2420 = vadd.f32 %v1990, %v2268
    %v2421 = vadd.f32 %v1991, %v2271
    %v2422 = vadd.f32 %v1992, %v2273
    %v2423 = vadd.f32 %v1993, %v2276
    %v2424 = vadd.f32 %v1994, %v2278
    %v2425 = vadd.f32 %v1995, %v2281
    %v2426 = vadd.f32 %v1996, %v2283
    %v2427 = vadd.f32 %v1997, %v2286
    %v2428 = vadd.f32 %v1998, %v2288
    %v2429 = vadd.f32 %v1999, %v2291
    %v2430 = vadd.f32 %v2000, %v2293
    %v2431 = vadd.f32 %v2001, %v2296
    %v2432 = vadd.f32 %v2002, %v2298
    %v2433 = vadd.f32 %v2003, %v2301
    %v2434 = vadd.f32 %v2004, %v2303
    %v2435 = vadd.f32 %v2005, %v2306
    %v2436 = vadd.f32 %v2006, %v2308
    %v2437 = vadd.f32 %v2007, %v2311
    %v2438 = vadd.f32 %v2008, %v2313
    %v2439 = vadd.f32 %v2009, %v2316
    %v2440 = vadd.f32 %v2010, %v2318
    %v2441 = vadd.f32 %v2011, %v2321
    %v2442 = vadd.f32 %v2012, %v2323
    %v2443 = vadd.f32 %v2013, %v2326
    %v2444 = vadd.f32 %v2014, %v2328
    %v2445 = vadd.f32 %v2015, %v2331
    %v2446 = vadd.f32 %v2016, %v2333
    %v2447 = vadd.f32 %v2017, %v2336
    %v2448 = vadd.f32 %v2018, %v2338
    %v2449 = vadd.f32 %v2019, %v2341
    %v2450 = vadd.f32 %v2020, %v2343
    %v2451 = vadd.f32 %v2021, %v2346
    %v2452 = vadd.f32 %v2022, %v2348
    %v2453 = vadd.f32 %v2023, %v2351
    %v2454 = vadd.f32 %v2024, %v2353
    %v2455 = vadd.f32 %v2025, %v2356
    %v2456 = vadd.f32 %v2026, %v2358
    %v2457 = vadd.f32 %v2027, %v2361
    %v2458 = vadd.f32 %v2028, %v2363
    %v2459 = vadd.f32 %v2029, %v2366
    %v2460 = vadd.f32 %v2030, %v2368
    %v2461 = vadd.f32 %v2031, %v2371
    %v2462 = vadd.f32 %v2032, %v2373
    %v2463 = vadd.f32 %v2033, %v2376
    %v2464 = vadd.f32 %v2034, %v2378
    %v2465 = vadd.f32 %v2035, %v2381
    %v2466 = vadd.f32 %v2036, %v2383
    %v2467 = vadd.f32 %v2037, %v2386
    %v2468 = vadd.f32 %v2038, %v2388
    %v2469 = vadd.f32 %v2039, %v2391
    %v2470 = vadd.f32 %v2040, %v2393
    %v2471 = vadd.f32 %v2041, %v2396
    %v2472 = vadd.f32 %v2042, %v2398
    %v2473 = vadd.f32 %v2043, %v2401
    %v2474 = vadd.f32 %v2044, %v2403
    %v2475 = vadd.f32 %v2045, %v2406
    %v2476 = vadd.f32 %v2046, %v2408
    %v2477 = vadd.f32 %v2047, %v2411
    %v2478 = vadd.f32 %v2048, %v2413
    %s2479 = scalar_lea.vmem %s0, 48
    %v2480 = vld [vmem:[%s2479] sm:$0xff]
    %v2481 = vld [vmem:[%s2479 + $0x8] sm:$0xff]
    %v2482 = vld [vmem:[%s2479 + $0x18] sm:$0xff]
    %v2483 = vld [vmem:[%s2479 + $0x20] sm:$0xff]
    %v2484 = vld [vmem:[%s2479 + $0x30] sm:$0xff]
    %v2485 = vld [vmem:[%s2479 + $0x38] sm:$0xff]
    %v2486 = vld [vmem:[%s2479 + $0x48] sm:$0xff]
    %v2487 = vld [vmem:[%s2479 + $0x50] sm:$0xff]
    %v2488 = vld [vmem:[%s2479 + $0x60] sm:$0xff]
    %v2489 = vld [vmem:[%s2479 + $0x68] sm:$0xff]
    %v2490 = vld [vmem:[%s2479 + $0x78] sm:$0xff]
    %v2491 = vld [vmem:[%s2479 + $0x80] sm:$0xff]
    %v2492 = vld [vmem:[%s2479 + $0x90] sm:$0xff]
    %v2493 = vld [vmem:[%s2479 + $0x98] sm:$0xff]
    %v2494 = vld [vmem:[%s2479 + $0xa8] sm:$0xff]
    %v2495 = vld [vmem:[%s2479 + $0xb0] sm:$0xff]
    %v2496 = vld [vmem:[%s2479 + $0xc0] sm:$0xff]
    %v2497 = vld [vmem:[%s2479 + $0xc8] sm:$0xff]
    %v2498 = vld [vmem:[%s2479 + $0xd8] sm:$0xff]
    %v2499 = vld [vmem:[%s2479 + $0xe0] sm:$0xff]
    %v2500 = vld [vmem:[%s2479 + $0xf0] sm:$0xff]
    %v2501 = vld [vmem:[%s2479 + $0xf8] sm:$0xff]
    %v2502 = vld [vmem:[%s2479 + $0x108] sm:$0xff]
    %v2503 = vld [vmem:[%s2479 + $0x110] sm:$0xff]
    %v2504 = vld [vmem:[%s2479 + $0x120] sm:$0xff]
    %v2505 = vld [vmem:[%s2479 + $0x128] sm:$0xff]
    %v2506 = vld [vmem:[%s2479 + $0x138] sm:$0xff]
    %v2507 = vld [vmem:[%s2479 + $0x140] sm:$0xff]
    %v2508 = vld [vmem:[%s2479 + $0x150] sm:$0xff]
    %v2509 = vld [vmem:[%s2479 + $0x158] sm:$0xff]
    %v2510 = vld [vmem:[%s2479 + $0x168] sm:$0xff]
    %v2511 = vld [vmem:[%s2479 + $0x170] sm:$0xff]
    %v2512 = vld [vmem:[%s2479 + $0x1b0] sm:$0xff]
    %v2513 = vld [vmem:[%s2479 + $0x1b8] sm:$0xff]
    %v2514 = vld [vmem:[%s2479 + $0x1c8] sm:$0xff]
    %v2515 = vld [vmem:[%s2479 + $0x1d0] sm:$0xff]
    %v2516 = vld [vmem:[%s2479 + $0x1e0] sm:$0xff]
    %v2517 = vld [vmem:[%s2479 + $0x1e8] sm:$0xff]
    %v2518 = vld [vmem:[%s2479 + $0x1f8] sm:$0xff]
    %v2519 = vld [vmem:[%s2479 + $0x200] sm:$0xff]
    %v2520 = vld [vmem:[%s2479 + $0x210] sm:$0xff]
    %v2521 = vld [vmem:[%s2479 + $0x218] sm:$0xff]
    %v2522 = vld [vmem:[%s2479 + $0x228] sm:$0xff]
    %v2523 = vld [vmem:[%s2479 + $0x230] sm:$0xff]
    %v2524 = vld [vmem:[%s2479 + $0x240] sm:$0xff]
    %v2525 = vld [vmem:[%s2479 + $0x248] sm:$0xff]
    %v2526 = vld [vmem:[%s2479 + $0x258] sm:$0xff]
    %v2527 = vld [vmem:[%s2479 + $0x260] sm:$0xff]
    %v2528 = vld [vmem:[%s2479 + $0x270] sm:$0xff]
    %v2529 = vld [vmem:[%s2479 + $0x278] sm:$0xff]
    %v2530 = vld [vmem:[%s2479 + $0x288] sm:$0xff]
    %v2531 = vld [vmem:[%s2479 + $0x290] sm:$0xff]
    %v2532 = vld [vmem:[%s2479 + $0x2a0] sm:$0xff]
    %v2533 = vld [vmem:[%s2479 + $0x2a8] sm:$0xff]
    %v2534 = vld [vmem:[%s2479 + $0x2b8] sm:$0xff]
    %v2535 = vld [vmem:[%s2479 + $0x2c0] sm:$0xff]
    %v2536 = vld [vmem:[%s2479 + $0x2d0] sm:$0xff]
    %v2537 = vld [vmem:[%s2479 + $0x2d8] sm:$0xff]
    %v2538 = vld [vmem:[%s2479 + $0x2e8] sm:$0xff]
    %v2539 = vld [vmem:[%s2479 + $0x2f0] sm:$0xff]
    %v2540 = vld [vmem:[%s2479 + $0x300] sm:$0xff]
    %v2541 = vld [vmem:[%s2479 + $0x308] sm:$0xff]
    %v2542 = vld [vmem:[%s2479 + $0x318] sm:$0xff]
    %v2543 = vld [vmem:[%s2479 + $0x320] sm:$0xff]
    %v2544 = vpack.c.bf16 %v2481, %v2480
    %v2545 = vpack.c.bf16 %v2483, %v2482
    %v2546 = vpack.c.bf16 %v2485, %v2484
    %v2547 = vpack.c.bf16 %v2487, %v2486
    %v2548 = vpack.c.bf16 %v2489, %v2488
    %v2549 = vpack.c.bf16 %v2491, %v2490
    %v2550 = vpack.c.bf16 %v2493, %v2492
    %v2551 = vpack.c.bf16 %v2495, %v2494
    %v2552 = vpack.c.bf16 %v2497, %v2496
    %v2553 = vpack.c.bf16 %v2499, %v2498
    %v2554 = vpack.c.bf16 %v2501, %v2500
    %v2555 = vpack.c.bf16 %v2503, %v2502
    %v2556 = vpack.c.bf16 %v2505, %v2504
    %v2557 = vpack.c.bf16 %v2507, %v2506
    %v2558 = vpack.c.bf16 %v2509, %v2508
    %v2559 = vpack.c.bf16 %v2511, %v2510
    %v2560 = vpack.c.bf16 %v2513, %v2512
    %v2561 = vpack.c.bf16 %v2515, %v2514
    %v2562 = vpack.c.bf16 %v2517, %v2516
    %v2563 = vpack.c.bf16 %v2519, %v2518
    %v2564 = vpack.c.bf16 %v2521, %v2520
    %v2565 = vpack.c.bf16 %v2523, %v2522
    %v2566 = vpack.c.bf16 %v2525, %v2524
    %v2567 = vpack.c.bf16 %v2527, %v2526
    %v2568 = vpack.c.bf16 %v2529, %v2528
    %v2569 = vpack.c.bf16 %v2531, %v2530
    %v2570 = vpack.c.bf16 %v2533, %v2532
    %v2571 = vpack.c.bf16 %v2535, %v2534
    %v2572 = vpack.c.bf16 %v2537, %v2536
    %v2573 = vpack.c.bf16 %v2539, %v2538
    %v2574 = vpack.c.bf16 %v2541, %v2540
    %v2575 = vpack.c.bf16 %v2543, %v2542
    %s2576 = scalar_lea.vmem %s1, 12
    %v2577 = vld [vmem:[%s2576] sm:$0x3]
    %v2579 = vsel %vm220, %v2544, 0
    %v2582 = vsel %vm220, %v2545, 0
    %v2585 = vsel %vm220, %v2546, 0
    %v2588 = vsel %vm220, %v2547, 0
    %v2591 = vsel %vm220, %v2548, 0
    %v2594 = vsel %vm220, %v2549, 0
    %v2597 = vsel %vm220, %v2550, 0
    %v2600 = vsel %vm220, %v2551, 0
    %v2603 = vsel %vm220, %v2552, 0
    %v2606 = vsel %vm220, %v2553, 0
    %v2609 = vsel %vm220, %v2554, 0
    %v2612 = vsel %vm220, %v2555, 0
    %v2615 = vsel %vm220, %v2556, 0
    %v2618 = vsel %vm220, %v2557, 0
    %v2621 = vsel %vm220, %v2558, 0
    %v2624 = vsel %vm220, %v2559, 0
    %v2627 = vsel %vm220, %v2560, 0
    %v2630 = vsel %vm220, %v2561, 0
    %v2633 = vsel %vm220, %v2562, 0
    %v2636 = vsel %vm220, %v2563, 0
    %v2639 = vsel %vm220, %v2564, 0
    %v2642 = vsel %vm220, %v2565, 0
    %v2645 = vsel %vm220, %v2566, 0
    %v2648 = vsel %vm220, %v2567, 0
    %v2651 = vsel %vm220, %v2568, 0
    %v2654 = vsel %vm220, %v2569, 0
    %v2657 = vsel %vm220, %v2570, 0
    %v2660 = vsel %vm220, %v2571, 0
    %v2663 = vsel %vm220, %v2572, 0
    %v2666 = vsel %vm220, %v2573, 0
    %v2669 = vsel %vm220, %v2574, 0
    %v2672 = vsel %vm220, %v2575, 0
    %v2675 = vsel %vm317, %v2577, 0
    %2677 = vmatpush.bf16.msra.mxu0 0
    %2678 = vmatpush.bf16.msra.mxu0 0
    %2679 = vmatpush.bf16.msra.mxu0 0
    %2680 = vmatpush.bf16.msra.mxu0 0
    %2681 = vmatpush.bf16.msra.mxu0 0
    %2682 = vmatpush.bf16.msra.mxu0 0
    %2683 = vmatpush.bf16.msra.mxu0 0
    %2684 = vmatpush.bf16.msra.mxu0 %v2675
    %2685 = vmatmul.bf16.gmra.mxu0 %v2579
    %v2686 = vpop.f32.mrf.mxu0
    %v2687 = vadd.f32 0.0, %v2686
    %v2688 = vpop.f32.mrf.mxu0
    %v2689 = vadd.f32 0.0, %v2688
    %2690 = vmatmul.bf16.gmra.mxu0 %v2582
    %v2691 = vpop.f32.mrf.mxu0
    %v2692 = vadd.f32 0.0, %v2691
    %v2693 = vpop.f32.mrf.mxu0
    %v2694 = vadd.f32 0.0, %v2693
    %2695 = vmatmul.bf16.gmra.mxu0 %v2585
    %v2696 = vpop.f32.mrf.mxu0
    %v2697 = vadd.f32 0.0, %v2696
    %v2698 = vpop.f32.mrf.mxu0
    %v2699 = vadd.f32 0.0, %v2698
    %2700 = vmatmul.bf16.gmra.mxu0 %v2588
    %v2701 = vpop.f32.mrf.mxu0
    %v2702 = vadd.f32 0.0, %v2701
    %v2703 = vpop.f32.mrf.mxu0
    %v2704 = vadd.f32 0.0, %v2703
    %2705 = vmatmul.bf16.gmra.mxu0 %v2591
    %v2706 = vpop.f32.mrf.mxu0
    %v2707 = vadd.f32 0.0, %v2706
    %v2708 = vpop.f32.mrf.mxu0
    %v2709 = vadd.f32 0.0, %v2708
    %2710 = vmatmul.bf16.gmra.mxu0 %v2594
    %v2711 = vpop.f32.mrf.mxu0
    %v2712 = vadd.f32 0.0, %v2711
    %v2713 = vpop.f32.mrf.mxu0
    %v2714 = vadd.f32 0.0, %v2713
    %2715 = vmatmul.bf16.gmra.mxu0 %v2597
    %v2716 = vpop.f32.mrf.mxu0
    %v2717 = vadd.f32 0.0, %v2716
    %v2718 = vpop.f32.mrf.mxu0
    %v2719 = vadd.f32 0.0, %v2718
    %2720 = vmatmul.bf16.gmra.mxu0 %v2600
    %v2721 = vpop.f32.mrf.mxu0
    %v2722 = vadd.f32 0.0, %v2721
    %v2723 = vpop.f32.mrf.mxu0
    %v2724 = vadd.f32 0.0, %v2723
    %2725 = vmatmul.bf16.gmra.mxu0 %v2603
    %v2726 = vpop.f32.mrf.mxu0
    %v2727 = vadd.f32 0.0, %v2726
    %v2728 = vpop.f32.mrf.mxu0
    %v2729 = vadd.f32 0.0, %v2728
    %2730 = vmatmul.bf16.gmra.mxu0 %v2606
    %v2731 = vpop.f32.mrf.mxu0
    %v2732 = vadd.f32 0.0, %v2731
    %v2733 = vpop.f32.mrf.mxu0
    %v2734 = vadd.f32 0.0, %v2733
    %2735 = vmatmul.bf16.gmra.mxu0 %v2609
    %v2736 = vpop.f32.mrf.mxu0
    %v2737 = vadd.f32 0.0, %v2736
    %v2738 = vpop.f32.mrf.mxu0
    %v2739 = vadd.f32 0.0, %v2738
    %2740 = vmatmul.bf16.gmra.mxu0 %v2612
    %v2741 = vpop.f32.mrf.mxu0
    %v2742 = vadd.f32 0.0, %v2741
    %v2743 = vpop.f32.mrf.mxu0
    %v2744 = vadd.f32 0.0, %v2743
    %2745 = vmatmul.bf16.gmra.mxu0 %v2615
    %v2746 = vpop.f32.mrf.mxu0
    %v2747 = vadd.f32 0.0, %v2746
    %v2748 = vpop.f32.mrf.mxu0
    %v2749 = vadd.f32 0.0, %v2748
    %2750 = vmatmul.bf16.gmra.mxu0 %v2618
    %v2751 = vpop.f32.mrf.mxu0
    %v2752 = vadd.f32 0.0, %v2751
    %v2753 = vpop.f32.mrf.mxu0
    %v2754 = vadd.f32 0.0, %v2753
    %2755 = vmatmul.bf16.gmra.mxu0 %v2621
    %v2756 = vpop.f32.mrf.mxu0
    %v2757 = vadd.f32 0.0, %v2756
    %v2758 = vpop.f32.mrf.mxu0
    %v2759 = vadd.f32 0.0, %v2758
    %2760 = vmatmul.bf16.gmra.mxu0 %v2624
    %v2761 = vpop.f32.mrf.mxu0
    %v2762 = vadd.f32 0.0, %v2761
    %v2763 = vpop.f32.mrf.mxu0
    %v2764 = vadd.f32 0.0, %v2763
    %2765 = vmatmul.bf16.gmra.mxu0 %v2627
    %v2766 = vpop.f32.mrf.mxu0
    %v2767 = vadd.f32 0.0, %v2766
    %v2768 = vpop.f32.mrf.mxu0
    %v2769 = vadd.f32 0.0, %v2768
    %2770 = vmatmul.bf16.gmra.mxu0 %v2630
    %v2771 = vpop.f32.mrf.mxu0
    %v2772 = vadd.f32 0.0, %v2771
    %v2773 = vpop.f32.mrf.mxu0
    %v2774 = vadd.f32 0.0, %v2773
    %2775 = vmatmul.bf16.gmra.mxu0 %v2633
    %v2776 = vpop.f32.mrf.mxu0
    %v2777 = vadd.f32 0.0, %v2776
    %v2778 = vpop.f32.mrf.mxu0
    %v2779 = vadd.f32 0.0, %v2778
    %2780 = vmatmul.bf16.gmra.mxu0 %v2636
    %v2781 = vpop.f32.mrf.mxu0
    %v2782 = vadd.f32 0.0, %v2781
    %v2783 = vpop.f32.mrf.mxu0
    %v2784 = vadd.f32 0.0, %v2783
    %2785 = vmatmul.bf16.gmra.mxu0 %v2639
    %v2786 = vpop.f32.mrf.mxu0
    %v2787 = vadd.f32 0.0, %v2786
    %v2788 = vpop.f32.mrf.mxu0
    %v2789 = vadd.f32 0.0, %v2788
    %2790 = vmatmul.bf16.gmra.mxu0 %v2642
    %v2791 = vpop.f32.mrf.mxu0
    %v2792 = vadd.f32 0.0, %v2791
    %v2793 = vpop.f32.mrf.mxu0
    %v2794 = vadd.f32 0.0, %v2793
    %2795 = vmatmul.bf16.gmra.mxu0 %v2645
    %v2796 = vpop.f32.mrf.mxu0
    %v2797 = vadd.f32 0.0, %v2796
    %v2798 = vpop.f32.mrf.mxu0
    %v2799 = vadd.f32 0.0, %v2798
    %2800 = vmatmul.bf16.gmra.mxu0 %v2648
    %v2801 = vpop.f32.mrf.mxu0
    %v2802 = vadd.f32 0.0, %v2801
    %v2803 = vpop.f32.mrf.mxu0
    %v2804 = vadd.f32 0.0, %v2803
    %2805 = vmatmul.bf16.gmra.mxu0 %v2651
    %v2806 = vpop.f32.mrf.mxu0
    %v2807 = vadd.f32 0.0, %v2806
    %v2808 = vpop.f32.mrf.mxu0
    %v2809 = vadd.f32 0.0, %v2808
    %2810 = vmatmul.bf16.gmra.mxu0 %v2654
    %v2811 = vpop.f32.mrf.mxu0
    %v2812 = vadd.f32 0.0, %v2811
    %v2813 = vpop.f32.mrf.mxu0
    %v2814 = vadd.f32 0.0, %v2813
    %2815 = vmatmul.bf16.gmra.mxu0 %v2657
    %v2816 = vpop.f32.mrf.mxu0
    %v2817 = vadd.f32 0.0, %v2816
    %v2818 = vpop.f32.mrf.mxu0
    %v2819 = vadd.f32 0.0, %v2818
    %2820 = vmatmul.bf16.gmra.mxu0 %v2660
    %v2821 = vpop.f32.mrf.mxu0
    %v2822 = vadd.f32 0.0, %v2821
    %v2823 = vpop.f32.mrf.mxu0
    %v2824 = vadd.f32 0.0, %v2823
    %2825 = vmatmul.bf16.gmra.mxu0 %v2663
    %v2826 = vpop.f32.mrf.mxu0
    %v2827 = vadd.f32 0.0, %v2826
    %v2828 = vpop.f32.mrf.mxu0
    %v2829 = vadd.f32 0.0, %v2828
    %2830 = vmatmul.bf16.gmra.mxu0 %v2666
    %v2831 = vpop.f32.mrf.mxu0
    %v2832 = vadd.f32 0.0, %v2831
    %v2833 = vpop.f32.mrf.mxu0
    %v2834 = vadd.f32 0.0, %v2833
    %2835 = vmatmul.bf16.gmra.mxu0 %v2669
    %v2836 = vpop.f32.mrf.mxu0
    %v2837 = vadd.f32 0.0, %v2836
    %v2838 = vpop.f32.mrf.mxu0
    %v2839 = vadd.f32 0.0, %v2838
    %2840 = vmatmul.bf16.gmra.mxu0 %v2672
    %v2841 = vpop.f32.mrf.mxu0
    %v2842 = vadd.f32 0.0, %v2841
    %v2843 = vpop.f32.mrf.mxu0
    %v2844 = vadd.f32 0.0, %v2843
    %2845 = vdwg.mxu0
    %v2846 = vadd.f32 %v2415, %v2687
    %v2847 = vadd.f32 %v2416, %v2689
    %v2848 = vadd.f32 %v2417, %v2692
    %v2849 = vadd.f32 %v2418, %v2694
    %v2850 = vadd.f32 %v2419, %v2697
    %v2851 = vadd.f32 %v2420, %v2699
    %v2852 = vadd.f32 %v2421, %v2702
    %v2853 = vadd.f32 %v2422, %v2704
    %v2854 = vadd.f32 %v2423, %v2707
    %v2855 = vadd.f32 %v2424, %v2709
    %v2856 = vadd.f32 %v2425, %v2712
    %v2857 = vadd.f32 %v2426, %v2714
    %v2858 = vadd.f32 %v2427, %v2717
    %v2859 = vadd.f32 %v2428, %v2719
    %v2860 = vadd.f32 %v2429, %v2722
    %v2861 = vadd.f32 %v2430, %v2724
    %v2862 = vadd.f32 %v2431, %v2727
    %v2863 = vadd.f32 %v2432, %v2729
    %v2864 = vadd.f32 %v2433, %v2732
    %v2865 = vadd.f32 %v2434, %v2734
    %v2866 = vadd.f32 %v2435, %v2737
    %v2867 = vadd.f32 %v2436, %v2739
    %v2868 = vadd.f32 %v2437, %v2742
    %v2869 = vadd.f32 %v2438, %v2744
    %v2870 = vadd.f32 %v2439, %v2747
    %v2871 = vadd.f32 %v2440, %v2749
    %v2872 = vadd.f32 %v2441, %v2752
    %v2873 = vadd.f32 %v2442, %v2754
    %v2874 = vadd.f32 %v2443, %v2757
    %v2875 = vadd.f32 %v2444, %v2759
    %v2876 = vadd.f32 %v2445, %v2762
    %v2877 = vadd.f32 %v2446, %v2764
    %v2878 = vadd.f32 %v2447, %v2767
    %v2879 = vadd.f32 %v2448, %v2769
    %v2880 = vadd.f32 %v2449, %v2772
    %v2881 = vadd.f32 %v2450, %v2774
    %v2882 = vadd.f32 %v2451, %v2777
    %v2883 = vadd.f32 %v2452, %v2779
    %v2884 = vadd.f32 %v2453, %v2782
    %v2885 = vadd.f32 %v2454, %v2784
    %v2886 = vadd.f32 %v2455, %v2787
    %v2887 = vadd.f32 %v2456, %v2789
    %v2888 = vadd.f32 %v2457, %v2792
    %v2889 = vadd.f32 %v2458, %v2794
    %v2890 = vadd.f32 %v2459, %v2797
    %v2891 = vadd.f32 %v2460, %v2799
    %v2892 = vadd.f32 %v2461, %v2802
    %v2893 = vadd.f32 %v2462, %v2804
    %v2894 = vadd.f32 %v2463, %v2807
    %v2895 = vadd.f32 %v2464, %v2809
    %v2896 = vadd.f32 %v2465, %v2812
    %v2897 = vadd.f32 %v2466, %v2814
    %v2898 = vadd.f32 %v2467, %v2817
    %v2899 = vadd.f32 %v2468, %v2819
    %v2900 = vadd.f32 %v2469, %v2822
    %v2901 = vadd.f32 %v2470, %v2824
    %v2902 = vadd.f32 %v2471, %v2827
    %v2903 = vadd.f32 %v2472, %v2829
    %v2904 = vadd.f32 %v2473, %v2832
    %v2905 = vadd.f32 %v2474, %v2834
    %v2906 = vadd.f32 %v2475, %v2837
    %v2907 = vadd.f32 %v2476, %v2839
    %v2908 = vadd.f32 %v2477, %v2842
    %v2909 = vadd.f32 %v2478, %v2844
    %v2910 = vld [vmem:[%s2479 + $0x1] sm:$0xff]
    %v2911 = vld [vmem:[%s2479 + $0x9] sm:$0xff]
    %v2912 = vld [vmem:[%s2479 + $0x19] sm:$0xff]
    %v2913 = vld [vmem:[%s2479 + $0x21] sm:$0xff]
    %v2914 = vld [vmem:[%s2479 + $0x31] sm:$0xff]
    %v2915 = vld [vmem:[%s2479 + $0x39] sm:$0xff]
    %v2916 = vld [vmem:[%s2479 + $0x49] sm:$0xff]
    %v2917 = vld [vmem:[%s2479 + $0x51] sm:$0xff]
    %v2918 = vld [vmem:[%s2479 + $0x61] sm:$0xff]
    %v2919 = vld [vmem:[%s2479 + $0x69] sm:$0xff]
    %v2920 = vld [vmem:[%s2479 + $0x79] sm:$0xff]
    %v2921 = vld [vmem:[%s2479 + $0x81] sm:$0xff]
    %v2922 = vld [vmem:[%s2479 + $0x91] sm:$0xff]
    %v2923 = vld [vmem:[%s2479 + $0x99] sm:$0xff]
    %v2924 = vld [vmem:[%s2479 + $0xa9] sm:$0xff]
    %v2925 = vld [vmem:[%s2479 + $0xb1] sm:$0xff]
    %v2926 = vld [vmem:[%s2479 + $0xc1] sm:$0xff]
    %v2927 = vld [vmem:[%s2479 + $0xc9] sm:$0xff]
    %v2928 = vld [vmem:[%s2479 + $0xd9] sm:$0xff]
    %v2929 = vld [vmem:[%s2479 + $0xe1] sm:$0xff]
    %v2930 = vld [vmem:[%s2479 + $0xf1] sm:$0xff]
    %v2931 = vld [vmem:[%s2479 + $0xf9] sm:$0xff]
    %v2932 = vld [vmem:[%s2479 + $0x109] sm:$0xff]
    %v2933 = vld [vmem:[%s2479 + $0x111] sm:$0xff]
    %v2934 = vld [vmem:[%s2479 + $0x121] sm:$0xff]
    %v2935 = vld [vmem:[%s2479 + $0x129] sm:$0xff]
    %v2936 = vld [vmem:[%s2479 + $0x139] sm:$0xff]
    %v2937 = vld [vmem:[%s2479 + $0x141] sm:$0xff]
    %v2938 = vld [vmem:[%s2479 + $0x151] sm:$0xff]
    %v2939 = vld [vmem:[%s2479 + $0x159] sm:$0xff]
    %v2940 = vld [vmem:[%s2479 + $0x169] sm:$0xff]
    %v2941 = vld [vmem:[%s2479 + $0x171] sm:$0xff]
    %v2942 = vld [vmem:[%s2479 + $0x1b1] sm:$0xff]
    %v2943 = vld [vmem:[%s2479 + $0x1b9] sm:$0xff]
    %v2944 = vld [vmem:[%s2479 + $0x1c9] sm:$0xff]
    %v2945 = vld [vmem:[%s2479 + $0x1d1] sm:$0xff]
    %v2946 = vld [vmem:[%s2479 + $0x1e1] sm:$0xff]
    %v2947 = vld [vmem:[%s2479 + $0x1e9] sm:$0xff]
    %v2948 = vld [vmem:[%s2479 + $0x1f9] sm:$0xff]
    %v2949 = vld [vmem:[%s2479 + $0x201] sm:$0xff]
    %v2950 = vld [vmem:[%s2479 + $0x211] sm:$0xff]
    %v2951 = vld [vmem:[%s2479 + $0x219] sm:$0xff]
    %v2952 = vld [vmem:[%s2479 + $0x229] sm:$0xff]
    %v2953 = vld [vmem:[%s2479 + $0x231] sm:$0xff]
    %v2954 = vld [vmem:[%s2479 + $0x241] sm:$0xff]
    %v2955 = vld [vmem:[%s2479 + $0x249] sm:$0xff]
    %v2956 = vld [vmem:[%s2479 + $0x259] sm:$0xff]
    %v2957 = vld [vmem:[%s2479 + $0x261] sm:$0xff]
    %v2958 = vld [vmem:[%s2479 + $0x271] sm:$0xff]
    %v2959 = vld [vmem:[%s2479 + $0x279] sm:$0xff]
    %v2960 = vld [vmem:[%s2479 + $0x289] sm:$0xff]
    %v2961 = vld [vmem:[%s2479 + $0x291] sm:$0xff]
    %v2962 = vld [vmem:[%s2479 + $0x2a1] sm:$0xff]
    %v2963 = vld [vmem:[%s2479 + $0x2a9] sm:$0xff]
    %v2964 = vld [vmem:[%s2479 + $0x2b9] sm:$0xff]
    %v2965 = vld [vmem:[%s2479 + $0x2c1] sm:$0xff]
    %v2966 = vld [vmem:[%s2479 + $0x2d1] sm:$0xff]
    %v2967 = vld [vmem:[%s2479 + $0x2d9] sm:$0xff]
    %v2968 = vld [vmem:[%s2479 + $0x2e9] sm:$0xff]
    %v2969 = vld [vmem:[%s2479 + $0x2f1] sm:$0xff]
    %v2970 = vld [vmem:[%s2479 + $0x301] sm:$0xff]
    %v2971 = vld [vmem:[%s2479 + $0x309] sm:$0xff]
    %v2972 = vld [vmem:[%s2479 + $0x319] sm:$0xff]
    %v2973 = vld [vmem:[%s2479 + $0x321] sm:$0xff]
    %v2974 = vpack.c.bf16 %v2911, %v2910
    %v2975 = vpack.c.bf16 %v2913, %v2912
    %v2976 = vpack.c.bf16 %v2915, %v2914
    %v2977 = vpack.c.bf16 %v2917, %v2916
    %v2978 = vpack.c.bf16 %v2919, %v2918
    %v2979 = vpack.c.bf16 %v2921, %v2920
    %v2980 = vpack.c.bf16 %v2923, %v2922
    %v2981 = vpack.c.bf16 %v2925, %v2924
    %v2982 = vpack.c.bf16 %v2927, %v2926
    %v2983 = vpack.c.bf16 %v2929, %v2928
    %v2984 = vpack.c.bf16 %v2931, %v2930
    %v2985 = vpack.c.bf16 %v2933, %v2932
    %v2986 = vpack.c.bf16 %v2935, %v2934
    %v2987 = vpack.c.bf16 %v2937, %v2936
    %v2988 = vpack.c.bf16 %v2939, %v2938
    %v2989 = vpack.c.bf16 %v2941, %v2940
    %v2990 = vpack.c.bf16 %v2943, %v2942
    %v2991 = vpack.c.bf16 %v2945, %v2944
    %v2992 = vpack.c.bf16 %v2947, %v2946
    %v2993 = vpack.c.bf16 %v2949, %v2948
    %v2994 = vpack.c.bf16 %v2951, %v2950
    %v2995 = vpack.c.bf16 %v2953, %v2952
    %v2996 = vpack.c.bf16 %v2955, %v2954
    %v2997 = vpack.c.bf16 %v2957, %v2956
    %v2998 = vpack.c.bf16 %v2959, %v2958
    %v2999 = vpack.c.bf16 %v2961, %v2960
    %v3000 = vpack.c.bf16 %v2963, %v2962
    %v3001 = vpack.c.bf16 %v2965, %v2964
    %v3002 = vpack.c.bf16 %v2967, %v2966
    %v3003 = vpack.c.bf16 %v2969, %v2968
    %v3004 = vpack.c.bf16 %v2971, %v2970
    %v3005 = vpack.c.bf16 %v2973, %v2972
    %s3006 = scalar_lea.vmem %s1, 14
    %v3007 = vld [vmem:[%s3006] sm:$0x3]
    %v3009 = vsel %vm220, %v2974, 0
    %v3012 = vsel %vm220, %v2975, 0
    %v3015 = vsel %vm220, %v2976, 0
    %v3018 = vsel %vm220, %v2977, 0
    %v3021 = vsel %vm220, %v2978, 0
    %v3024 = vsel %vm220, %v2979, 0
    %v3027 = vsel %vm220, %v2980, 0
    %v3030 = vsel %vm220, %v2981, 0
    %v3033 = vsel %vm220, %v2982, 0
    %v3036 = vsel %vm220, %v2983, 0
    %v3039 = vsel %vm220, %v2984, 0
    %v3042 = vsel %vm220, %v2985, 0
    %v3045 = vsel %vm220, %v2986, 0
    %v3048 = vsel %vm220, %v2987, 0
    %v3051 = vsel %vm220, %v2988, 0
    %v3054 = vsel %vm220, %v2989, 0
    %v3057 = vsel %vm220, %v2990, 0
    %v3060 = vsel %vm220, %v2991, 0
    %v3063 = vsel %vm220, %v2992, 0
    %v3066 = vsel %vm220, %v2993, 0
    %v3069 = vsel %vm220, %v2994, 0
    %v3072 = vsel %vm220, %v2995, 0
    %v3075 = vsel %vm220, %v2996, 0
    %v3078 = vsel %vm220, %v2997, 0
    %v3081 = vsel %vm220, %v2998, 0
    %v3084 = vsel %vm220, %v2999, 0
    %v3087 = vsel %vm220, %v3000, 0
    %v3090 = vsel %vm220, %v3001, 0
    %v3093 = vsel %vm220, %v3002, 0
    %v3096 = vsel %vm220, %v3003, 0
    %v3099 = vsel %vm220, %v3004, 0
    %v3102 = vsel %vm220, %v3005, 0
    %v3105 = vsel %vm317, %v3007, 0
    %3107 = vmatpush.bf16.msra.mxu0 0
    %3108 = vmatpush.bf16.msra.mxu0 0
    %3109 = vmatpush.bf16.msra.mxu0 0
    %3110 = vmatpush.bf16.msra.mxu0 0
    %3111 = vmatpush.bf16.msra.mxu0 0
    %3112 = vmatpush.bf16.msra.mxu0 0
    %3113 = vmatpush.bf16.msra.mxu0 0
    %3114 = vmatpush.bf16.msra.mxu0 %v3105
    %3115 = vmatmul.bf16.gmra.mxu0 %v3009
    %v3116 = vpop.f32.mrf.mxu0
    %v3117 = vadd.f32 0.0, %v3116
    %v3118 = vpop.f32.mrf.mxu0
    %v3119 = vadd.f32 0.0, %v3118
    %3120 = vmatmul.bf16.gmra.mxu0 %v3012
    %v3121 = vpop.f32.mrf.mxu0
    %v3122 = vadd.f32 0.0, %v3121
    %v3123 = vpop.f32.mrf.mxu0
    %v3124 = vadd.f32 0.0, %v3123
    %3125 = vmatmul.bf16.gmra.mxu0 %v3015
    %v3126 = vpop.f32.mrf.mxu0
    %v3127 = vadd.f32 0.0, %v3126
    %v3128 = vpop.f32.mrf.mxu0
    %v3129 = vadd.f32 0.0, %v3128
    %3130 = vmatmul.bf16.gmra.mxu0 %v3018
    %v3131 = vpop.f32.mrf.mxu0
    %v3132 = vadd.f32 0.0, %v3131
    %v3133 = vpop.f32.mrf.mxu0
    %v3134 = vadd.f32 0.0, %v3133
    %3135 = vmatmul.bf16.gmra.mxu0 %v3021
    %v3136 = vpop.f32.mrf.mxu0
    %v3137 = vadd.f32 0.0, %v3136
    %v3138 = vpop.f32.mrf.mxu0
    %v3139 = vadd.f32 0.0, %v3138
    %3140 = vmatmul.bf16.gmra.mxu0 %v3024
    %v3141 = vpop.f32.mrf.mxu0
    %v3142 = vadd.f32 0.0, %v3141
    %v3143 = vpop.f32.mrf.mxu0
    %v3144 = vadd.f32 0.0, %v3143
    %3145 = vmatmul.bf16.gmra.mxu0 %v3027
    %v3146 = vpop.f32.mrf.mxu0
    %v3147 = vadd.f32 0.0, %v3146
    %v3148 = vpop.f32.mrf.mxu0
    %v3149 = vadd.f32 0.0, %v3148
    %3150 = vmatmul.bf16.gmra.mxu0 %v3030
    %v3151 = vpop.f32.mrf.mxu0
    %v3152 = vadd.f32 0.0, %v3151
    %v3153 = vpop.f32.mrf.mxu0
    %v3154 = vadd.f32 0.0, %v3153
    %3155 = vmatmul.bf16.gmra.mxu0 %v3033
    %v3156 = vpop.f32.mrf.mxu0
    %v3157 = vadd.f32 0.0, %v3156
    %v3158 = vpop.f32.mrf.mxu0
    %v3159 = vadd.f32 0.0, %v3158
    %3160 = vmatmul.bf16.gmra.mxu0 %v3036
    %v3161 = vpop.f32.mrf.mxu0
    %v3162 = vadd.f32 0.0, %v3161
    %v3163 = vpop.f32.mrf.mxu0
    %v3164 = vadd.f32 0.0, %v3163
    %3165 = vmatmul.bf16.gmra.mxu0 %v3039
    %v3166 = vpop.f32.mrf.mxu0
    %v3167 = vadd.f32 0.0, %v3166
    %v3168 = vpop.f32.mrf.mxu0
    %v3169 = vadd.f32 0.0, %v3168
    %3170 = vmatmul.bf16.gmra.mxu0 %v3042
    %v3171 = vpop.f32.mrf.mxu0
    %v3172 = vadd.f32 0.0, %v3171
    %v3173 = vpop.f32.mrf.mxu0
    %v3174 = vadd.f32 0.0, %v3173
    %3175 = vmatmul.bf16.gmra.mxu0 %v3045
    %v3176 = vpop.f32.mrf.mxu0
    %v3177 = vadd.f32 0.0, %v3176
    %v3178 = vpop.f32.mrf.mxu0
    %v3179 = vadd.f32 0.0, %v3178
    %3180 = vmatmul.bf16.gmra.mxu0 %v3048
    %v3181 = vpop.f32.mrf.mxu0
    %v3182 = vadd.f32 0.0, %v3181
    %v3183 = vpop.f32.mrf.mxu0
    %v3184 = vadd.f32 0.0, %v3183
    %3185 = vmatmul.bf16.gmra.mxu0 %v3051
    %v3186 = vpop.f32.mrf.mxu0
    %v3187 = vadd.f32 0.0, %v3186
    %v3188 = vpop.f32.mrf.mxu0
    %v3189 = vadd.f32 0.0, %v3188
    %3190 = vmatmul.bf16.gmra.mxu0 %v3054
    %v3191 = vpop.f32.mrf.mxu0
    %v3192 = vadd.f32 0.0, %v3191
    %v3193 = vpop.f32.mrf.mxu0
    %v3194 = vadd.f32 0.0, %v3193
    %3195 = vmatmul.bf16.gmra.mxu0 %v3057
    %v3196 = vpop.f32.mrf.mxu0
    %v3197 = vadd.f32 0.0, %v3196
    %v3198 = vpop.f32.mrf.mxu0
    %v3199 = vadd.f32 0.0, %v3198
    %3200 = vmatmul.bf16.gmra.mxu0 %v3060
    %v3201 = vpop.f32.mrf.mxu0
    %v3202 = vadd.f32 0.0, %v3201
    %v3203 = vpop.f32.mrf.mxu0
    %v3204 = vadd.f32 0.0, %v3203
    %3205 = vmatmul.bf16.gmra.mxu0 %v3063
    %v3206 = vpop.f32.mrf.mxu0
    %v3207 = vadd.f32 0.0, %v3206
    %v3208 = vpop.f32.mrf.mxu0
    %v3209 = vadd.f32 0.0, %v3208
    %3210 = vmatmul.bf16.gmra.mxu0 %v3066
    %v3211 = vpop.f32.mrf.mxu0
    %v3212 = vadd.f32 0.0, %v3211
    %v3213 = vpop.f32.mrf.mxu0
    %v3214 = vadd.f32 0.0, %v3213
    %3215 = vmatmul.bf16.gmra.mxu0 %v3069
    %v3216 = vpop.f32.mrf.mxu0
    %v3217 = vadd.f32 0.0, %v3216
    %v3218 = vpop.f32.mrf.mxu0
    %v3219 = vadd.f32 0.0, %v3218
    %3220 = vmatmul.bf16.gmra.mxu0 %v3072
    %v3221 = vpop.f32.mrf.mxu0
    %v3222 = vadd.f32 0.0, %v3221
    %v3223 = vpop.f32.mrf.mxu0
    %v3224 = vadd.f32 0.0, %v3223
    %3225 = vmatmul.bf16.gmra.mxu0 %v3075
    %v3226 = vpop.f32.mrf.mxu0
    %v3227 = vadd.f32 0.0, %v3226
    %v3228 = vpop.f32.mrf.mxu0
    %v3229 = vadd.f32 0.0, %v3228
    %3230 = vmatmul.bf16.gmra.mxu0 %v3078
    %v3231 = vpop.f32.mrf.mxu0
    %v3232 = vadd.f32 0.0, %v3231
    %v3233 = vpop.f32.mrf.mxu0
    %v3234 = vadd.f32 0.0, %v3233
    %3235 = vmatmul.bf16.gmra.mxu0 %v3081
    %v3236 = vpop.f32.mrf.mxu0
    %v3237 = vadd.f32 0.0, %v3236
    %v3238 = vpop.f32.mrf.mxu0
    %v3239 = vadd.f32 0.0, %v3238
    %3240 = vmatmul.bf16.gmra.mxu0 %v3084
    %v3241 = vpop.f32.mrf.mxu0
    %v3242 = vadd.f32 0.0, %v3241
    %v3243 = vpop.f32.mrf.mxu0
    %v3244 = vadd.f32 0.0, %v3243
    %3245 = vmatmul.bf16.gmra.mxu0 %v3087
    %v3246 = vpop.f32.mrf.mxu0
    %v3247 = vadd.f32 0.0, %v3246
    %v3248 = vpop.f32.mrf.mxu0
    %v3249 = vadd.f32 0.0, %v3248
    %3250 = vmatmul.bf16.gmra.mxu0 %v3090
    %v3251 = vpop.f32.mrf.mxu0
    %v3252 = vadd.f32 0.0, %v3251
    %v3253 = vpop.f32.mrf.mxu0
    %v3254 = vadd.f32 0.0, %v3253
    %3255 = vmatmul.bf16.gmra.mxu0 %v3093
    %v3256 = vpop.f32.mrf.mxu0
    %v3257 = vadd.f32 0.0, %v3256
    %v3258 = vpop.f32.mrf.mxu0
    %v3259 = vadd.f32 0.0, %v3258
    %3260 = vmatmul.bf16.gmra.mxu0 %v3096
    %v3261 = vpop.f32.mrf.mxu0
    %v3262 = vadd.f32 0.0, %v3261
    %v3263 = vpop.f32.mrf.mxu0
    %v3264 = vadd.f32 0.0, %v3263
    %3265 = vmatmul.bf16.gmra.mxu0 %v3099
    %v3266 = vpop.f32.mrf.mxu0
    %v3267 = vadd.f32 0.0, %v3266
    %v3268 = vpop.f32.mrf.mxu0
    %v3269 = vadd.f32 0.0, %v3268
    %3270 = vmatmul.bf16.gmra.mxu0 %v3102
    %v3271 = vpop.f32.mrf.mxu0
    %v3272 = vadd.f32 0.0, %v3271
    %v3273 = vpop.f32.mrf.mxu0
    %v3274 = vadd.f32 0.0, %v3273
    %3275 = vdwg.mxu0
    %v3276 = vadd.f32 %v2846, %v3117
    %v3277 = vadd.f32 %v2847, %v3119
    %v3278 = vadd.f32 %v2848, %v3122
    %v3279 = vadd.f32 %v2849, %v3124
    %v3280 = vadd.f32 %v2850, %v3127
    %v3281 = vadd.f32 %v2851, %v3129
    %v3282 = vadd.f32 %v2852, %v3132
    %v3283 = vadd.f32 %v2853, %v3134
    %v3284 = vadd.f32 %v2854, %v3137
    %v3285 = vadd.f32 %v2855, %v3139
    %v3286 = vadd.f32 %v2856, %v3142
    %v3287 = vadd.f32 %v2857, %v3144
    %v3288 = vadd.f32 %v2858, %v3147
    %v3289 = vadd.f32 %v2859, %v3149
    %v3290 = vadd.f32 %v2860, %v3152
    %v3291 = vadd.f32 %v2861, %v3154
    %v3292 = vadd.f32 %v2862, %v3157
    %v3293 = vadd.f32 %v2863, %v3159
    %v3294 = vadd.f32 %v2864, %v3162
    %v3295 = vadd.f32 %v2865, %v3164
    %v3296 = vadd.f32 %v2866, %v3167
    %v3297 = vadd.f32 %v2867, %v3169
    %v3298 = vadd.f32 %v2868, %v3172
    %v3299 = vadd.f32 %v2869, %v3174
    %v3300 = vadd.f32 %v2870, %v3177
    %v3301 = vadd.f32 %v2871, %v3179
    %v3302 = vadd.f32 %v2872, %v3182
    %v3303 = vadd.f32 %v2873, %v3184
    %v3304 = vadd.f32 %v2874, %v3187
    %v3305 = vadd.f32 %v2875, %v3189
    %v3306 = vadd.f32 %v2876, %v3192
    %v3307 = vadd.f32 %v2877, %v3194
    %v3308 = vadd.f32 %v2878, %v3197
    %v3309 = vadd.f32 %v2879, %v3199
    %v3310 = vadd.f32 %v2880, %v3202
    %v3311 = vadd.f32 %v2881, %v3204
    %v3312 = vadd.f32 %v2882, %v3207
    %v3313 = vadd.f32 %v2883, %v3209
    %v3314 = vadd.f32 %v2884, %v3212
    %v3315 = vadd.f32 %v2885, %v3214
    %v3316 = vadd.f32 %v2886, %v3217
    %v3317 = vadd.f32 %v2887, %v3219
    %v3318 = vadd.f32 %v2888, %v3222
    %v3319 = vadd.f32 %v2889, %v3224
    %v3320 = vadd.f32 %v2890, %v3227
    %v3321 = vadd.f32 %v2891, %v3229
    %v3322 = vadd.f32 %v2892, %v3232
    %v3323 = vadd.f32 %v2893, %v3234
    %v3324 = vadd.f32 %v2894, %v3237
    %v3325 = vadd.f32 %v2895, %v3239
    %v3326 = vadd.f32 %v2896, %v3242
    %v3327 = vadd.f32 %v2897, %v3244
    %v3328 = vadd.f32 %v2898, %v3247
    %v3329 = vadd.f32 %v2899, %v3249
    %v3330 = vadd.f32 %v2900, %v3252
    %v3331 = vadd.f32 %v2901, %v3254
    %v3332 = vadd.f32 %v2902, %v3257
    %v3333 = vadd.f32 %v2903, %v3259
    %v3334 = vadd.f32 %v2904, %v3262
    %v3335 = vadd.f32 %v2905, %v3264
    %v3336 = vadd.f32 %v2906, %v3267
    %v3337 = vadd.f32 %v2907, %v3269
    %v3338 = vadd.f32 %v2908, %v3272
    %v3339 = vadd.f32 %v2909, %v3274
    %v3340 = vld [vmem:[%s2479 + $0x2] sm:$0xff]
    %v3341 = vld [vmem:[%s2479 + $0xa] sm:$0xff]
    %v3342 = vld [vmem:[%s2479 + $0x1a] sm:$0xff]
    %v3343 = vld [vmem:[%s2479 + $0x22] sm:$0xff]
    %v3344 = vld [vmem:[%s2479 + $0x32] sm:$0xff]
    %v3345 = vld [vmem:[%s2479 + $0x3a] sm:$0xff]
    %v3346 = vld [vmem:[%s2479 + $0x4a] sm:$0xff]
    %v3347 = vld [vmem:[%s2479 + $0x52] sm:$0xff]
    %v3348 = vld [vmem:[%s2479 + $0x62] sm:$0xff]
    %v3349 = vld [vmem:[%s2479 + $0x6a] sm:$0xff]
    %v3350 = vld [vmem:[%s2479 + $0x7a] sm:$0xff]
    %v3351 = vld [vmem:[%s2479 + $0x82] sm:$0xff]
    %v3352 = vld [vmem:[%s2479 + $0x92] sm:$0xff]
    %v3353 = vld [vmem:[%s2479 + $0x9a] sm:$0xff]
    %v3354 = vld [vmem:[%s2479 + $0xaa] sm:$0xff]
    %v3355 = vld [vmem:[%s2479 + $0xb2] sm:$0xff]
    %v3356 = vld [vmem:[%s2479 + $0xc2] sm:$0xff]
    %v3357 = vld [vmem:[%s2479 + $0xca] sm:$0xff]
    %v3358 = vld [vmem:[%s2479 + $0xda] sm:$0xff]
    %v3359 = vld [vmem:[%s2479 + $0xe2] sm:$0xff]
    %v3360 = vld [vmem:[%s2479 + $0xf2] sm:$0xff]
    %v3361 = vld [vmem:[%s2479 + $0xfa] sm:$0xff]
    %v3362 = vld [vmem:[%s2479 + $0x10a] sm:$0xff]
    %v3363 = vld [vmem:[%s2479 + $0x112] sm:$0xff]
    %v3364 = vld [vmem:[%s2479 + $0x122] sm:$0xff]
    %v3365 = vld [vmem:[%s2479 + $0x12a] sm:$0xff]
    %v3366 = vld [vmem:[%s2479 + $0x13a] sm:$0xff]
    %v3367 = vld [vmem:[%s2479 + $0x142] sm:$0xff]
    %v3368 = vld [vmem:[%s2479 + $0x152] sm:$0xff]
    %v3369 = vld [vmem:[%s2479 + $0x15a] sm:$0xff]
    %v3370 = vld [vmem:[%s2479 + $0x16a] sm:$0xff]
    %v3371 = vld [vmem:[%s2479 + $0x172] sm:$0xff]
    %v3372 = vld [vmem:[%s2479 + $0x1b2] sm:$0xff]
    %v3373 = vld [vmem:[%s2479 + $0x1ba] sm:$0xff]
    %v3374 = vld [vmem:[%s2479 + $0x1ca] sm:$0xff]
    %v3375 = vld [vmem:[%s2479 + $0x1d2] sm:$0xff]
    %v3376 = vld [vmem:[%s2479 + $0x1e2] sm:$0xff]
    %v3377 = vld [vmem:[%s2479 + $0x1ea] sm:$0xff]
    %v3378 = vld [vmem:[%s2479 + $0x1fa] sm:$0xff]
    %v3379 = vld [vmem:[%s2479 + $0x202] sm:$0xff]
    %v3380 = vld [vmem:[%s2479 + $0x212] sm:$0xff]
    %v3381 = vld [vmem:[%s2479 + $0x21a] sm:$0xff]
    %v3382 = vld [vmem:[%s2479 + $0x22a] sm:$0xff]
    %v3383 = vld [vmem:[%s2479 + $0x232] sm:$0xff]
    %v3384 = vld [vmem:[%s2479 + $0x242] sm:$0xff]
    %v3385 = vld [vmem:[%s2479 + $0x24a] sm:$0xff]
    %v3386 = vld [vmem:[%s2479 + $0x25a] sm:$0xff]
    %v3387 = vld [vmem:[%s2479 + $0x262] sm:$0xff]
    %v3388 = vld [vmem:[%s2479 + $0x272] sm:$0xff]
    %v3389 = vld [vmem:[%s2479 + $0x27a] sm:$0xff]
    %v3390 = vld [vmem:[%s2479 + $0x28a] sm:$0xff]
    %v3391 = vld [vmem:[%s2479 + $0x292] sm:$0xff]
    %v3392 = vld [vmem:[%s2479 + $0x2a2] sm:$0xff]
    %v3393 = vld [vmem:[%s2479 + $0x2aa] sm:$0xff]
    %v3394 = vld [vmem:[%s2479 + $0x2ba] sm:$0xff]
    %v3395 = vld [vmem:[%s2479 + $0x2c2] sm:$0xff]
    %v3396 = vld [vmem:[%s2479 + $0x2d2] sm:$0xff]
    %v3397 = vld [vmem:[%s2479 + $0x2da] sm:$0xff]
    %v3398 = vld [vmem:[%s2479 + $0x2ea] sm:$0xff]
    %v3399 = vld [vmem:[%s2479 + $0x2f2] sm:$0xff]
    %v3400 = vld [vmem:[%s2479 + $0x302] sm:$0xff]
    %v3401 = vld [vmem:[%s2479 + $0x30a] sm:$0xff]
    %v3402 = vld [vmem:[%s2479 + $0x31a] sm:$0xff]
    %v3403 = vld [vmem:[%s2479 + $0x322] sm:$0xff]
    %v3404 = vpack.c.bf16 %v3341, %v3340
    %v3405 = vpack.c.bf16 %v3343, %v3342
    %v3406 = vpack.c.bf16 %v3345, %v3344
    %v3407 = vpack.c.bf16 %v3347, %v3346
    %v3408 = vpack.c.bf16 %v3349, %v3348
    %v3409 = vpack.c.bf16 %v3351, %v3350
    %v3410 = vpack.c.bf16 %v3353, %v3352
    %v3411 = vpack.c.bf16 %v3355, %v3354
    %v3412 = vpack.c.bf16 %v3357, %v3356
    %v3413 = vpack.c.bf16 %v3359, %v3358
    %v3414 = vpack.c.bf16 %v3361, %v3360
    %v3415 = vpack.c.bf16 %v3363, %v3362
    %v3416 = vpack.c.bf16 %v3365, %v3364
    %v3417 = vpack.c.bf16 %v3367, %v3366
    %v3418 = vpack.c.bf16 %v3369, %v3368
    %v3419 = vpack.c.bf16 %v3371, %v3370
    %v3420 = vpack.c.bf16 %v3373, %v3372
    %v3421 = vpack.c.bf16 %v3375, %v3374
    %v3422 = vpack.c.bf16 %v3377, %v3376
    %v3423 = vpack.c.bf16 %v3379, %v3378
    %v3424 = vpack.c.bf16 %v3381, %v3380
    %v3425 = vpack.c.bf16 %v3383, %v3382
    %v3426 = vpack.c.bf16 %v3385, %v3384
    %v3427 = vpack.c.bf16 %v3387, %v3386
    %v3428 = vpack.c.bf16 %v3389, %v3388
    %v3429 = vpack.c.bf16 %v3391, %v3390
    %v3430 = vpack.c.bf16 %v3393, %v3392
    %v3431 = vpack.c.bf16 %v3395, %v3394
    %v3432 = vpack.c.bf16 %v3397, %v3396
    %v3433 = vpack.c.bf16 %v3399, %v3398
    %v3434 = vpack.c.bf16 %v3401, %v3400
    %v3435 = vpack.c.bf16 %v3403, %v3402
    %s3436 = scalar_lea.vmem %s1, 16
    %v3437 = vld [vmem:[%s3436] sm:$0x3]
    %v3439 = vsel %vm220, %v3404, 0
    %v3442 = vsel %vm220, %v3405, 0
    %v3445 = vsel %vm220, %v3406, 0
    %v3448 = vsel %vm220, %v3407, 0
    %v3451 = vsel %vm220, %v3408, 0
    %v3454 = vsel %vm220, %v3409, 0
    %v3457 = vsel %vm220, %v3410, 0
    %v3460 = vsel %vm220, %v3411, 0
    %v3463 = vsel %vm220, %v3412, 0
    %v3466 = vsel %vm220, %v3413, 0
    %v3469 = vsel %vm220, %v3414, 0
    %v3472 = vsel %vm220, %v3415, 0
    %v3475 = vsel %vm220, %v3416, 0
    %v3478 = vsel %vm220, %v3417, 0
    %v3481 = vsel %vm220, %v3418, 0
    %v3484 = vsel %vm220, %v3419, 0
    %v3487 = vsel %vm220, %v3420, 0
    %v3490 = vsel %vm220, %v3421, 0
    %v3493 = vsel %vm220, %v3422, 0
    %v3496 = vsel %vm220, %v3423, 0
    %v3499 = vsel %vm220, %v3424, 0
    %v3502 = vsel %vm220, %v3425, 0
    %v3505 = vsel %vm220, %v3426, 0
    %v3508 = vsel %vm220, %v3427, 0
    %v3511 = vsel %vm220, %v3428, 0
    %v3514 = vsel %vm220, %v3429, 0
    %v3517 = vsel %vm220, %v3430, 0
    %v3520 = vsel %vm220, %v3431, 0
    %v3523 = vsel %vm220, %v3432, 0
    %v3526 = vsel %vm220, %v3433, 0
    %v3529 = vsel %vm220, %v3434, 0
    %v3532 = vsel %vm220, %v3435, 0
    %v3535 = vsel %vm317, %v3437, 0
    %3537 = vmatpush.bf16.msra.mxu0 0
    %3538 = vmatpush.bf16.msra.mxu0 0
    %3539 = vmatpush.bf16.msra.mxu0 0
    %3540 = vmatpush.bf16.msra.mxu0 0
    %3541 = vmatpush.bf16.msra.mxu0 0
    %3542 = vmatpush.bf16.msra.mxu0 0
    %3543 = vmatpush.bf16.msra.mxu0 0
    %3544 = vmatpush.bf16.msra.mxu0 %v3535
    %3545 = vmatmul.bf16.gmra.mxu0 %v3439
    %v3546 = vpop.f32.mrf.mxu0
    %v3547 = vadd.f32 0.0, %v3546
    %v3548 = vpop.f32.mrf.mxu0
    %v3549 = vadd.f32 0.0, %v3548
    %3550 = vmatmul.bf16.gmra.mxu0 %v3442
    %v3551 = vpop.f32.mrf.mxu0
    %v3552 = vadd.f32 0.0, %v3551
    %v3553 = vpop.f32.mrf.mxu0
    %v3554 = vadd.f32 0.0, %v3553
    %3555 = vmatmul.bf16.gmra.mxu0 %v3445
    %v3556 = vpop.f32.mrf.mxu0
    %v3557 = vadd.f32 0.0, %v3556
    %v3558 = vpop.f32.mrf.mxu0
    %v3559 = vadd.f32 0.0, %v3558
    %3560 = vmatmul.bf16.gmra.mxu0 %v3448
    %v3561 = vpop.f32.mrf.mxu0
    %v3562 = vadd.f32 0.0, %v3561
    %v3563 = vpop.f32.mrf.mxu0
    %v3564 = vadd.f32 0.0, %v3563
    %3565 = vmatmul.bf16.gmra.mxu0 %v3451
    %v3566 = vpop.f32.mrf.mxu0
    %v3567 = vadd.f32 0.0, %v3566
    %v3568 = vpop.f32.mrf.mxu0
    %v3569 = vadd.f32 0.0, %v3568
    %3570 = vmatmul.bf16.gmra.mxu0 %v3454
    %v3571 = vpop.f32.mrf.mxu0
    %v3572 = vadd.f32 0.0, %v3571
    %v3573 = vpop.f32.mrf.mxu0
    %v3574 = vadd.f32 0.0, %v3573
    %3575 = vmatmul.bf16.gmra.mxu0 %v3457
    %v3576 = vpop.f32.mrf.mxu0
    %v3577 = vadd.f32 0.0, %v3576
    %v3578 = vpop.f32.mrf.mxu0
    %v3579 = vadd.f32 0.0, %v3578
    %3580 = vmatmul.bf16.gmra.mxu0 %v3460
    %v3581 = vpop.f32.mrf.mxu0
    %v3582 = vadd.f32 0.0, %v3581
    %v3583 = vpop.f32.mrf.mxu0
    %v3584 = vadd.f32 0.0, %v3583
    %3585 = vmatmul.bf16.gmra.mxu0 %v3463
    %v3586 = vpop.f32.mrf.mxu0
    %v3587 = vadd.f32 0.0, %v3586
    %v3588 = vpop.f32.mrf.mxu0
    %v3589 = vadd.f32 0.0, %v3588
    %3590 = vmatmul.bf16.gmra.mxu0 %v3466
    %v3591 = vpop.f32.mrf.mxu0
    %v3592 = vadd.f32 0.0, %v3591
    %v3593 = vpop.f32.mrf.mxu0
    %v3594 = vadd.f32 0.0, %v3593
    %3595 = vmatmul.bf16.gmra.mxu0 %v3469
    %v3596 = vpop.f32.mrf.mxu0
    %v3597 = vadd.f32 0.0, %v3596
    %v3598 = vpop.f32.mrf.mxu0
    %v3599 = vadd.f32 0.0, %v3598
    %3600 = vmatmul.bf16.gmra.mxu0 %v3472
    %v3601 = vpop.f32.mrf.mxu0
    %v3602 = vadd.f32 0.0, %v3601
    %v3603 = vpop.f32.mrf.mxu0
    %v3604 = vadd.f32 0.0, %v3603
    %3605 = vmatmul.bf16.gmra.mxu0 %v3475
    %v3606 = vpop.f32.mrf.mxu0
    %v3607 = vadd.f32 0.0, %v3606
    %v3608 = vpop.f32.mrf.mxu0
    %v3609 = vadd.f32 0.0, %v3608
    %3610 = vmatmul.bf16.gmra.mxu0 %v3478
    %v3611 = vpop.f32.mrf.mxu0
    %v3612 = vadd.f32 0.0, %v3611
    %v3613 = vpop.f32.mrf.mxu0
    %v3614 = vadd.f32 0.0, %v3613
    %3615 = vmatmul.bf16.gmra.mxu0 %v3481
    %v3616 = vpop.f32.mrf.mxu0
    %v3617 = vadd.f32 0.0, %v3616
    %v3618 = vpop.f32.mrf.mxu0
    %v3619 = vadd.f32 0.0, %v3618
    %3620 = vmatmul.bf16.gmra.mxu0 %v3484
    %v3621 = vpop.f32.mrf.mxu0
    %v3622 = vadd.f32 0.0, %v3621
    %v3623 = vpop.f32.mrf.mxu0
    %v3624 = vadd.f32 0.0, %v3623
    %3625 = vmatmul.bf16.gmra.mxu0 %v3487
    %v3626 = vpop.f32.mrf.mxu0
    %v3627 = vadd.f32 0.0, %v3626
    %v3628 = vpop.f32.mrf.mxu0
    %v3629 = vadd.f32 0.0, %v3628
    %3630 = vmatmul.bf16.gmra.mxu0 %v3490
    %v3631 = vpop.f32.mrf.mxu0
    %v3632 = vadd.f32 0.0, %v3631
    %v3633 = vpop.f32.mrf.mxu0
    %v3634 = vadd.f32 0.0, %v3633
    %3635 = vmatmul.bf16.gmra.mxu0 %v3493
    %v3636 = vpop.f32.mrf.mxu0
    %v3637 = vadd.f32 0.0, %v3636
    %v3638 = vpop.f32.mrf.mxu0
    %v3639 = vadd.f32 0.0, %v3638
    %3640 = vmatmul.bf16.gmra.mxu0 %v3496
    %v3641 = vpop.f32.mrf.mxu0
    %v3642 = vadd.f32 0.0, %v3641
    %v3643 = vpop.f32.mrf.mxu0
    %v3644 = vadd.f32 0.0, %v3643
    %3645 = vmatmul.bf16.gmra.mxu0 %v3499
    %v3646 = vpop.f32.mrf.mxu0
    %v3647 = vadd.f32 0.0, %v3646
    %v3648 = vpop.f32.mrf.mxu0
    %v3649 = vadd.f32 0.0, %v3648
    %3650 = vmatmul.bf16.gmra.mxu0 %v3502
    %v3651 = vpop.f32.mrf.mxu0
    %v3652 = vadd.f32 0.0, %v3651
    %v3653 = vpop.f32.mrf.mxu0
    %v3654 = vadd.f32 0.0, %v3653
    %3655 = vmatmul.bf16.gmra.mxu0 %v3505
    %v3656 = vpop.f32.mrf.mxu0
    %v3657 = vadd.f32 0.0, %v3656
    %v3658 = vpop.f32.mrf.mxu0
    %v3659 = vadd.f32 0.0, %v3658
    %3660 = vmatmul.bf16.gmra.mxu0 %v3508
    %v3661 = vpop.f32.mrf.mxu0
    %v3662 = vadd.f32 0.0, %v3661
    %v3663 = vpop.f32.mrf.mxu0
    %v3664 = vadd.f32 0.0, %v3663
    %3665 = vmatmul.bf16.gmra.mxu0 %v3511
    %v3666 = vpop.f32.mrf.mxu0
    %v3667 = vadd.f32 0.0, %v3666
    %v3668 = vpop.f32.mrf.mxu0
    %v3669 = vadd.f32 0.0, %v3668
    %3670 = vmatmul.bf16.gmra.mxu0 %v3514
    %v3671 = vpop.f32.mrf.mxu0
    %v3672 = vadd.f32 0.0, %v3671
    %v3673 = vpop.f32.mrf.mxu0
    %v3674 = vadd.f32 0.0, %v3673
    %3675 = vmatmul.bf16.gmra.mxu0 %v3517
    %v3676 = vpop.f32.mrf.mxu0
    %v3677 = vadd.f32 0.0, %v3676
    %v3678 = vpop.f32.mrf.mxu0
    %v3679 = vadd.f32 0.0, %v3678
    %3680 = vmatmul.bf16.gmra.mxu0 %v3520
    %v3681 = vpop.f32.mrf.mxu0
    %v3682 = vadd.f32 0.0, %v3681
    %v3683 = vpop.f32.mrf.mxu0
    %v3684 = vadd.f32 0.0, %v3683
    %3685 = vmatmul.bf16.gmra.mxu0 %v3523
    %v3686 = vpop.f32.mrf.mxu0
    %v3687 = vadd.f32 0.0, %v3686
    %v3688 = vpop.f32.mrf.mxu0
    %v3689 = vadd.f32 0.0, %v3688
    %3690 = vmatmul.bf16.gmra.mxu0 %v3526
    %v3691 = vpop.f32.mrf.mxu0
    %v3692 = vadd.f32 0.0, %v3691
    %v3693 = vpop.f32.mrf.mxu0
    %v3694 = vadd.f32 0.0, %v3693
    %3695 = vmatmul.bf16.gmra.mxu0 %v3529
    %v3696 = vpop.f32.mrf.mxu0
    %v3697 = vadd.f32 0.0, %v3696
    %v3698 = vpop.f32.mrf.mxu0
    %v3699 = vadd.f32 0.0, %v3698
    %3700 = vmatmul.bf16.gmra.mxu0 %v3532
    %v3701 = vpop.f32.mrf.mxu0
    %v3702 = vadd.f32 0.0, %v3701
    %v3703 = vpop.f32.mrf.mxu0
    %v3704 = vadd.f32 0.0, %v3703
    %3705 = vdwg.mxu0
    %v3706 = vadd.f32 %v3276, %v3547
    %v3707 = vadd.f32 %v3277, %v3549
    %v3708 = vadd.f32 %v3278, %v3552
    %v3709 = vadd.f32 %v3279, %v3554
    %v3710 = vadd.f32 %v3280, %v3557
    %v3711 = vadd.f32 %v3281, %v3559
    %v3712 = vadd.f32 %v3282, %v3562
    %v3713 = vadd.f32 %v3283, %v3564
    %v3714 = vadd.f32 %v3284, %v3567
    %v3715 = vadd.f32 %v3285, %v3569
    %v3716 = vadd.f32 %v3286, %v3572
    %v3717 = vadd.f32 %v3287, %v3574
    %v3718 = vadd.f32 %v3288, %v3577
    %v3719 = vadd.f32 %v3289, %v3579
    %v3720 = vadd.f32 %v3290, %v3582
    %v3721 = vadd.f32 %v3291, %v3584
    %v3722 = vadd.f32 %v3292, %v3587
    %v3723 = vadd.f32 %v3293, %v3589
    %v3724 = vadd.f32 %v3294, %v3592
    %v3725 = vadd.f32 %v3295, %v3594
    %v3726 = vadd.f32 %v3296, %v3597
    %v3727 = vadd.f32 %v3297, %v3599
    %v3728 = vadd.f32 %v3298, %v3602
    %v3729 = vadd.f32 %v3299, %v3604
    %v3730 = vadd.f32 %v3300, %v3607
    %v3731 = vadd.f32 %v3301, %v3609
    %v3732 = vadd.f32 %v3302, %v3612
    %v3733 = vadd.f32 %v3303, %v3614
    %v3734 = vadd.f32 %v3304, %v3617
    %v3735 = vadd.f32 %v3305, %v3619
    %v3736 = vadd.f32 %v3306, %v3622
    %v3737 = vadd.f32 %v3307, %v3624
    %v3738 = vadd.f32 %v3308, %v3627
    %v3739 = vadd.f32 %v3309, %v3629
    %v3740 = vadd.f32 %v3310, %v3632
    %v3741 = vadd.f32 %v3311, %v3634
    %v3742 = vadd.f32 %v3312, %v3637
    %v3743 = vadd.f32 %v3313, %v3639
    %v3744 = vadd.f32 %v3314, %v3642
    %v3745 = vadd.f32 %v3315, %v3644
    %v3746 = vadd.f32 %v3316, %v3647
    %v3747 = vadd.f32 %v3317, %v3649
    %v3748 = vadd.f32 %v3318, %v3652
    %v3749 = vadd.f32 %v3319, %v3654
    %v3750 = vadd.f32 %v3320, %v3657
    %v3751 = vadd.f32 %v3321, %v3659
    %v3752 = vadd.f32 %v3322, %v3662
    %v3753 = vadd.f32 %v3323, %v3664
    %v3754 = vadd.f32 %v3324, %v3667
    %v3755 = vadd.f32 %v3325, %v3669
    %v3756 = vadd.f32 %v3326, %v3672
    %v3757 = vadd.f32 %v3327, %v3674
    %v3758 = vadd.f32 %v3328, %v3677
    %v3759 = vadd.f32 %v3329, %v3679
    %v3760 = vadd.f32 %v3330, %v3682
    %v3761 = vadd.f32 %v3331, %v3684
    %v3762 = vadd.f32 %v3332, %v3687
    %v3763 = vadd.f32 %v3333, %v3689
    %v3764 = vadd.f32 %v3334, %v3692
    %v3765 = vadd.f32 %v3335, %v3694
    %v3766 = vadd.f32 %v3336, %v3697
    %v3767 = vadd.f32 %v3337, %v3699
    %v3768 = vadd.f32 %v3338, %v3702
    %v3769 = vadd.f32 %v3339, %v3704
    %v3770 = vadd.f32 %v3706, %v3707
    %v3771 = vadd.f32 %v3770, %v3708
    %v3772 = vadd.f32 %v3771, %v3709
    %v3773 = vadd.f32 %v3772, %v3710
    %v3774 = vadd.f32 %v3773, %v3711
    %v3775 = vadd.f32 %v3774, %v3712
    %v3776 = vadd.f32 %v3775, %v3713
    %v3777 = vadd.f32 %v3776, %v3714
    %v3778 = vadd.f32 %v3777, %v3715
    %v3779 = vadd.f32 %v3778, %v3716
    %v3780 = vadd.f32 %v3779, %v3717
    %v3781 = vadd.f32 %v3780, %v3718
    %v3782 = vadd.f32 %v3781, %v3719
    %v3783 = vadd.f32 %v3782, %v3720
    %v3784 = vadd.f32 %v3783, %v3721
    %v3785 = vadd.f32 %v3784, %v3722
    %v3786 = vadd.f32 %v3785, %v3723
    %v3787 = vadd.f32 %v3786, %v3724
    %v3788 = vadd.f32 %v3787, %v3725
    %v3789 = vadd.f32 %v3788, %v3726
    %v3790 = vadd.f32 %v3789, %v3727
    %v3791 = vadd.f32 %v3790, %v3728
    %v3792 = vadd.f32 %v3791, %v3729
    %v3793 = vadd.f32 %v3792, %v3730
    %v3794 = vadd.f32 %v3793, %v3731
    %v3795 = vadd.f32 %v3794, %v3732
    %v3796 = vadd.f32 %v3795, %v3733
    %v3797 = vadd.f32 %v3796, %v3734
    %v3798 = vadd.f32 %v3797, %v3735
    %v3799 = vadd.f32 %v3798, %v3736
    %v3800 = vadd.f32 %v3799, %v3737
    %v3801 = vadd.f32 %v3800, %v3738
    %v3802 = vadd.f32 %v3801, %v3739
    %v3803 = vadd.f32 %v3802, %v3740
    %v3804 = vadd.f32 %v3803, %v3741
    %v3805 = vadd.f32 %v3804, %v3742
    %v3806 = vadd.f32 %v3805, %v3743
    %v3807 = vadd.f32 %v3806, %v3744
    %v3808 = vadd.f32 %v3807, %v3745
    %v3809 = vadd.f32 %v3808, %v3746
    %v3810 = vadd.f32 %v3809, %v3747
    %v3811 = vadd.f32 %v3810, %v3748
    %v3812 = vadd.f32 %v3811, %v3749
    %v3813 = vadd.f32 %v3812, %v3750
    %v3814 = vadd.f32 %v3813, %v3751
    %v3815 = vadd.f32 %v3814, %v3752
    %v3816 = vadd.f32 %v3815, %v3753
    %v3817 = vadd.f32 %v3816, %v3754
    %v3818 = vadd.f32 %v3817, %v3755
    %v3819 = vadd.f32 %v3818, %v3756
    %v3820 = vadd.f32 %v3819, %v3757
    %v3821 = vadd.f32 %v3820, %v3758
    %v3822 = vadd.f32 %v3821, %v3759
    %v3823 = vadd.f32 %v3822, %v3760
    %v3824 = vadd.f32 %v3823, %v3761
    %v3825 = vadd.f32 %v3824, %v3762
    %v3826 = vadd.f32 %v3825, %v3763
    %v3827 = vadd.f32 %v3826, %v3764
    %v3828 = vadd.f32 %v3827, %v3765
    %v3829 = vadd.f32 %v3828, %v3766
    %v3830 = vadd.f32 %v3829, %v3767
    %v3831 = vadd.f32 %v3830, %v3768
    %v3832 = vadd.f32 %v3831, %v3769
    %v3833 = vrot.slane %v3832, 4
    %v3834 = vadd.f32 %v3832, %v3833
    %v3835 = vrot.slane %v3834, 2
    %v3836 = vadd.f32 %v3834, %v3835
    %v3837 = vrot.slane %v3836, 1
    %v3838 = vadd.f32 %v3836, %v3837
    %v3839 = vmul.f32 %v3706, %v3706
    %v3840 = vmul.f32 %v3707, %v3707
    %v3841 = vmul.f32 %v3708, %v3708
    %v3842 = vmul.f32 %v3709, %v3709
    %v3843 = vmul.f32 %v3710, %v3710
    %v3844 = vmul.f32 %v3711, %v3711
    %v3845 = vmul.f32 %v3712, %v3712
    %v3846 = vmul.f32 %v3713, %v3713
    %v3847 = vmul.f32 %v3714, %v3714
    %v3848 = vmul.f32 %v3715, %v3715
    %v3849 = vmul.f32 %v3716, %v3716
    %v3850 = vmul.f32 %v3717, %v3717
    %v3851 = vmul.f32 %v3718, %v3718
    %v3852 = vmul.f32 %v3719, %v3719
    %v3853 = vmul.f32 %v3720, %v3720
    %v3854 = vmul.f32 %v3721, %v3721
    %v3855 = vmul.f32 %v3722, %v3722
    %v3856 = vmul.f32 %v3723, %v3723
    %v3857 = vmul.f32 %v3724, %v3724
    %v3858 = vmul.f32 %v3725, %v3725
    %v3859 = vmul.f32 %v3726, %v3726
    %v3860 = vmul.f32 %v3727, %v3727
    %v3861 = vmul.f32 %v3728, %v3728
    %v3862 = vmul.f32 %v3729, %v3729
    %v3863 = vmul.f32 %v3730, %v3730
    %v3864 = vmul.f32 %v3731, %v3731
    %v3865 = vmul.f32 %v3732, %v3732
    %v3866 = vmul.f32 %v3733, %v3733
    %v3867 = vmul.f32 %v3734, %v3734
    %v3868 = vmul.f32 %v3735, %v3735
    %v3869 = vmul.f32 %v3736, %v3736
    %v3870 = vmul.f32 %v3737, %v3737
    %v3871 = vmul.f32 %v3738, %v3738
    %v3872 = vmul.f32 %v3739, %v3739
    %v3873 = vmul.f32 %v3740, %v3740
    %v3874 = vmul.f32 %v3741, %v3741
    %v3875 = vmul.f32 %v3742, %v3742
    %v3876 = vmul.f32 %v3743, %v3743
    %v3877 = vmul.f32 %v3744, %v3744
    %v3878 = vmul.f32 %v3745, %v3745
    %v3879 = vmul.f32 %v3746, %v3746
    %v3880 = vmul.f32 %v3747, %v3747
    %v3881 = vmul.f32 %v3748, %v3748
    %v3882 = vmul.f32 %v3749, %v3749
    %v3883 = vmul.f32 %v3750, %v3750
    %v3884 = vmul.f32 %v3751, %v3751
    %v3885 = vmul.f32 %v3752, %v3752
    %v3886 = vmul.f32 %v3753, %v3753
    %v3887 = vmul.f32 %v3754, %v3754
    %v3888 = vmul.f32 %v3755, %v3755
    %v3889 = vmul.f32 %v3756, %v3756
    %v3890 = vmul.f32 %v3757, %v3757
    %v3891 = vmul.f32 %v3758, %v3758
    %v3892 = vmul.f32 %v3759, %v3759
    %v3893 = vmul.f32 %v3760, %v3760
    %v3894 = vmul.f32 %v3761, %v3761
    %v3895 = vmul.f32 %v3762, %v3762
    %v3896 = vmul.f32 %v3763, %v3763
    %v3897 = vmul.f32 %v3764, %v3764
    %v3898 = vmul.f32 %v3765, %v3765
    %v3899 = vmul.f32 %v3766, %v3766
    %v3900 = vmul.f32 %v3767, %v3767
    %v3901 = vmul.f32 %v3768, %v3768
    %v3902 = vmul.f32 %v3769, %v3769
    %v3903 = vadd.f32 %v3839, %v3840
    %v3904 = vadd.f32 %v3903, %v3841
    %v3905 = vadd.f32 %v3904, %v3842
    %v3906 = vadd.f32 %v3905, %v3843
    %v3907 = vadd.f32 %v3906, %v3844
    %v3908 = vadd.f32 %v3907, %v3845
    %v3909 = vadd.f32 %v3908, %v3846
    %v3910 = vadd.f32 %v3909, %v3847
    %v3911 = vadd.f32 %v3910, %v3848
    %v3912 = vadd.f32 %v3911, %v3849
    %v3913 = vadd.f32 %v3912, %v3850
    %v3914 = vadd.f32 %v3913, %v3851
    %v3915 = vadd.f32 %v3914, %v3852
    %v3916 = vadd.f32 %v3915, %v3853
    %v3917 = vadd.f32 %v3916, %v3854
    %v3918 = vadd.f32 %v3917, %v3855
    %v3919 = vadd.f32 %v3918, %v3856
    %v3920 = vadd.f32 %v3919, %v3857
    %v3921 = vadd.f32 %v3920, %v3858
    %v3922 = vadd.f32 %v3921, %v3859
    %v3923 = vadd.f32 %v3922, %v3860
    %v3924 = vadd.f32 %v3923, %v3861
    %v3925 = vadd.f32 %v3924, %v3862
    %v3926 = vadd.f32 %v3925, %v3863
    %v3927 = vadd.f32 %v3926, %v3864
    %v3928 = vadd.f32 %v3927, %v3865
    %v3929 = vadd.f32 %v3928, %v3866
    %v3930 = vadd.f32 %v3929, %v3867
    %v3931 = vadd.f32 %v3930, %v3868
    %v3932 = vadd.f32 %v3931, %v3869
    %v3933 = vadd.f32 %v3932, %v3870
    %v3934 = vadd.f32 %v3933, %v3871
    %v3935 = vadd.f32 %v3934, %v3872
    %v3936 = vadd.f32 %v3935, %v3873
    %v3937 = vadd.f32 %v3936, %v3874
    %v3938 = vadd.f32 %v3937, %v3875
    %v3939 = vadd.f32 %v3938, %v3876
    %v3940 = vadd.f32 %v3939, %v3877
    %v3941 = vadd.f32 %v3940, %v3878
    %v3942 = vadd.f32 %v3941, %v3879
    %v3943 = vadd.f32 %v3942, %v3880
    %v3944 = vadd.f32 %v3943, %v3881
    %v3945 = vadd.f32 %v3944, %v3882
    %v3946 = vadd.f32 %v3945, %v3883
    %v3947 = vadd.f32 %v3946, %v3884
    %v3948 = vadd.f32 %v3947, %v3885
    %v3949 = vadd.f32 %v3948, %v3886
    %v3950 = vadd.f32 %v3949, %v3887
    %v3951 = vadd.f32 %v3950, %v3888
    %v3952 = vadd.f32 %v3951, %v3889
    %v3953 = vadd.f32 %v3952, %v3890
    %v3954 = vadd.f32 %v3953, %v3891
    %v3955 = vadd.f32 %v3954, %v3892
    %v3956 = vadd.f32 %v3955, %v3893
    %v3957 = vadd.f32 %v3956, %v3894
    %v3958 = vadd.f32 %v3957, %v3895
    %v3959 = vadd.f32 %v3958, %v3896
    %v3960 = vadd.f32 %v3959, %v3897
    %v3961 = vadd.f32 %v3960, %v3898
    %v3962 = vadd.f32 %v3961, %v3899
    %v3963 = vadd.f32 %v3962, %v3900
    %v3964 = vadd.f32 %v3963, %v3901
    %v3965 = vadd.f32 %v3964, %v3902
    %v3966 = vrot.slane %v3965, 4
    %v3967 = vadd.f32 %v3965, %v3966
    %v3968 = vrot.slane %v3967, 2
    %v3969 = vadd.f32 %v3967, %v3968
    %v3970 = vrot.slane %v3969, 1
    %v3971 = vadd.f32 %v3969, %v3970
    %v3972 = vmul.f32 %v3838, 0.001953125
    %v3973 = vmul.f32 %v3971, 0.001953125
    %v3974 = vmul.f32 %v3972, %v3972
    %v3975 = vsub.f32 %v3973, %v3974
    %v3976 = vmax.f32 %v3975, 0.0
    %v3977 = vld [vmem:[%s2] sm:$0x1]
    %v3978 = vadd.f32 %v3976, 1e-05
    %v3979 = vrsqrt.pop %v3978
    %v3980 = vmul.f32 %v3979, %v3978
    %v3981 = vmul.f32 %v3980, %v3979
    %v3982 = vmul.f32 0.5, %v3981
    %v3983 = vsub.f32 1.5, %v3982
    %v3984 = vmul.f32 %v3979, %v3983
    %vm3985 = vweird.f32 %v3978
    %vm3986 = vweird.f32 %v3979
    %vm3987 = vmor %vm3985, %vm3986
    %v3988 = vsel %vm3987, %v3979, %v3984
    %v3989 = vmul.f32 %v3977, %v3988
    %v3990 = vld [vmem:[%s3] sm:$0x1]
    %v3991 = vmul.f32 %v3972, %v3989
    %v3992 = vsub.f32 %v3990, %v3991
    %v3994 = vperm.slane %v3989, 0
    %v3996 = vmul.f32 %v3706, %v3994
    %v3997 = vmul.f32 %v3707, %v3994
    %v3998 = vmul.f32 %v3708, %v3994
    %v3999 = vmul.f32 %v3709, %v3994
    %v4000 = vmul.f32 %v3710, %v3994
    %v4001 = vmul.f32 %v3711, %v3994
    %v4002 = vmul.f32 %v3712, %v3994
    %v4003 = vmul.f32 %v3713, %v3994
    %v4004 = vmul.f32 %v3714, %v3994
    %v4005 = vmul.f32 %v3715, %v3994
    %v4006 = vmul.f32 %v3716, %v3994
    %v4007 = vmul.f32 %v3717, %v3994
    %v4008 = vmul.f32 %v3718, %v3994
    %v4009 = vmul.f32 %v3719, %v3994
    %v4010 = vmul.f32 %v3720, %v3994
    %v4011 = vmul.f32 %v3721, %v3994
    %v4012 = vmul.f32 %v3722, %v3994
    %v4013 = vmul.f32 %v3723, %v3994
    %v4014 = vmul.f32 %v3724, %v3994
    %v4015 = vmul.f32 %v3725, %v3994
    %v4016 = vmul.f32 %v3726, %v3994
    %v4017 = vmul.f32 %v3727, %v3994
    %v4018 = vmul.f32 %v3728, %v3994
    %v4019 = vmul.f32 %v3729, %v3994
    %v4020 = vmul.f32 %v3730, %v3994
    %v4021 = vmul.f32 %v3731, %v3994
    %v4022 = vmul.f32 %v3732, %v3994
    %v4023 = vmul.f32 %v3733, %v3994
    %v4024 = vmul.f32 %v3734, %v3994
    %v4025 = vmul.f32 %v3735, %v3994
    %v4026 = vmul.f32 %v3736, %v3994
    %v4027 = vmul.f32 %v3737, %v3994
    %v4028 = vmul.f32 %v3738, %v3994
    %v4029 = vmul.f32 %v3739, %v3994
    %v4030 = vmul.f32 %v3740, %v3994
    %v4031 = vmul.f32 %v3741, %v3994
    %v4032 = vmul.f32 %v3742, %v3994
    %v4033 = vmul.f32 %v3743, %v3994
    %v4034 = vmul.f32 %v3744, %v3994
    %v4035 = vmul.f32 %v3745, %v3994
    %v4036 = vmul.f32 %v3746, %v3994
    %v4037 = vmul.f32 %v3747, %v3994
    %v4038 = vmul.f32 %v3748, %v3994
    %v4039 = vmul.f32 %v3749, %v3994
    %v4040 = vmul.f32 %v3750, %v3994
    %v4041 = vmul.f32 %v3751, %v3994
    %v4042 = vmul.f32 %v3752, %v3994
    %v4043 = vmul.f32 %v3753, %v3994
    %v4044 = vmul.f32 %v3754, %v3994
    %v4045 = vmul.f32 %v3755, %v3994
    %v4046 = vmul.f32 %v3756, %v3994
    %v4047 = vmul.f32 %v3757, %v3994
    %v4048 = vmul.f32 %v3758, %v3994
    %v4049 = vmul.f32 %v3759, %v3994
    %v4050 = vmul.f32 %v3760, %v3994
    %v4051 = vmul.f32 %v3761, %v3994
    %v4052 = vmul.f32 %v3762, %v3994
    %v4053 = vmul.f32 %v3763, %v3994
    %v4054 = vmul.f32 %v3764, %v3994
    %v4055 = vmul.f32 %v3765, %v3994
    %v4056 = vmul.f32 %v3766, %v3994
    %v4057 = vmul.f32 %v3767, %v3994
    %v4058 = vmul.f32 %v3768, %v3994
    %v4059 = vmul.f32 %v3769, %v3994
    %v4061 = vperm.slane %v3992, 0
    %v4063 = vadd.f32 %v3996, %v4061
    %v4064 = vadd.f32 %v3997, %v4061
    %v4065 = vadd.f32 %v3998, %v4061
    %v4066 = vadd.f32 %v3999, %v4061
    %v4067 = vadd.f32 %v4000, %v4061
    %v4068 = vadd.f32 %v4001, %v4061
    %v4069 = vadd.f32 %v4002, %v4061
    %v4070 = vadd.f32 %v4003, %v4061
    %v4071 = vadd.f32 %v4004, %v4061
    %v4072 = vadd.f32 %v4005, %v4061
    %v4073 = vadd.f32 %v4006, %v4061
    %v4074 = vadd.f32 %v4007, %v4061
    %v4075 = vadd.f32 %v4008, %v4061
    %v4076 = vadd.f32 %v4009, %v4061
    %v4077 = vadd.f32 %v4010, %v4061
    %v4078 = vadd.f32 %v4011, %v4061
    %v4079 = vadd.f32 %v4012, %v4061
    %v4080 = vadd.f32 %v4013, %v4061
    %v4081 = vadd.f32 %v4014, %v4061
    %v4082 = vadd.f32 %v4015, %v4061
    %v4083 = vadd.f32 %v4016, %v4061
    %v4084 = vadd.f32 %v4017, %v4061
    %v4085 = vadd.f32 %v4018, %v4061
    %v4086 = vadd.f32 %v4019, %v4061
    %v4087 = vadd.f32 %v4020, %v4061
    %v4088 = vadd.f32 %v4021, %v4061
    %v4089 = vadd.f32 %v4022, %v4061
    %v4090 = vadd.f32 %v4023, %v4061
    %v4091 = vadd.f32 %v4024, %v4061
    %v4092 = vadd.f32 %v4025, %v4061
    %v4093 = vadd.f32 %v4026, %v4061
    %v4094 = vadd.f32 %v4027, %v4061
    %v4095 = vadd.f32 %v4028, %v4061
    %v4096 = vadd.f32 %v4029, %v4061
    %v4097 = vadd.f32 %v4030, %v4061
    %v4098 = vadd.f32 %v4031, %v4061
    %v4099 = vadd.f32 %v4032, %v4061
    %v4100 = vadd.f32 %v4033, %v4061
    %v4101 = vadd.f32 %v4034, %v4061
    %v4102 = vadd.f32 %v4035, %v4061
    %v4103 = vadd.f32 %v4036, %v4061
    %v4104 = vadd.f32 %v4037, %v4061
    %v4105 = vadd.f32 %v4038, %v4061
    %v4106 = vadd.f32 %v4039, %v4061
    %v4107 = vadd.f32 %v4040, %v4061
    %v4108 = vadd.f32 %v4041, %v4061
    %v4109 = vadd.f32 %v4042, %v4061
    %v4110 = vadd.f32 %v4043, %v4061
    %v4111 = vadd.f32 %v4044, %v4061
    %v4112 = vadd.f32 %v4045, %v4061
    %v4113 = vadd.f32 %v4046, %v4061
    %v4114 = vadd.f32 %v4047, %v4061
    %v4115 = vadd.f32 %v4048, %v4061
    %v4116 = vadd.f32 %v4049, %v4061
    %v4117 = vadd.f32 %v4050, %v4061
    %v4118 = vadd.f32 %v4051, %v4061
    %v4119 = vadd.f32 %v4052, %v4061
    %v4120 = vadd.f32 %v4053, %v4061
    %v4121 = vadd.f32 %v4054, %v4061
    %v4122 = vadd.f32 %v4055, %v4061
    %v4123 = vadd.f32 %v4056, %v4061
    %v4124 = vadd.f32 %v4057, %v4061
    %v4125 = vadd.f32 %v4058, %v4061
    %v4126 = vadd.f32 %v4059, %v4061
    %v4127 = vadd.f32 %v4063, %v4064
    %v4128 = vadd.f32 %v4127, %v4065
    %v4129 = vadd.f32 %v4128, %v4066
    %v4130 = vadd.f32 %v4129, %v4067
    %v4131 = vadd.f32 %v4130, %v4068
    %v4132 = vadd.f32 %v4131, %v4069
    %v4133 = vadd.f32 %v4132, %v4070
    %v4134 = vadd.f32 %v4133, %v4071
    %v4135 = vadd.f32 %v4134, %v4072
    %v4136 = vadd.f32 %v4135, %v4073
    %v4137 = vadd.f32 %v4136, %v4074
    %v4138 = vadd.f32 %v4137, %v4075
    %v4139 = vadd.f32 %v4138, %v4076
    %v4140 = vadd.f32 %v4139, %v4077
    %v4141 = vadd.f32 %v4140, %v4078
    %v4142 = vadd.f32 %v4141, %v4079
    %v4143 = vadd.f32 %v4142, %v4080
    %v4144 = vadd.f32 %v4143, %v4081
    %v4145 = vadd.f32 %v4144, %v4082
    %v4146 = vadd.f32 %v4145, %v4083
    %v4147 = vadd.f32 %v4146, %v4084
    %v4148 = vadd.f32 %v4147, %v4085
    %v4149 = vadd.f32 %v4148, %v4086
    %v4150 = vadd.f32 %v4149, %v4087
    %v4151 = vadd.f32 %v4150, %v4088
    %v4152 = vadd.f32 %v4151, %v4089
    %v4153 = vadd.f32 %v4152, %v4090
    %v4154 = vadd.f32 %v4153, %v4091
    %v4155 = vadd.f32 %v4154, %v4092
    %v4156 = vadd.f32 %v4155, %v4093
    %v4157 = vadd.f32 %v4156, %v4094
    %v4158 = vrot.slane %v4157, 4
    %v4159 = vadd.f32 %v4157, %v4158
    %v4160 = vrot.slane %v4159, 2
    %v4161 = vadd.f32 %v4159, %v4160
    %v4162 = vrot.slane %v4161, 1
    %v4163 = vadd.f32 %v4161, %v4162
    %v4164 = vadd.f32 %v4095, %v4096
    %v4165 = vadd.f32 %v4164, %v4097
    %v4166 = vadd.f32 %v4165, %v4098
    %v4167 = vadd.f32 %v4166, %v4099
    %v4168 = vadd.f32 %v4167, %v4100
    %v4169 = vadd.f32 %v4168, %v4101
    %v4170 = vadd.f32 %v4169, %v4102
    %v4171 = vadd.f32 %v4170, %v4103
    %v4172 = vadd.f32 %v4171, %v4104
    %v4173 = vadd.f32 %v4172, %v4105
    %v4174 = vadd.f32 %v4173, %v4106
    %v4175 = vadd.f32 %v4174, %v4107
    %v4176 = vadd.f32 %v4175, %v4108
    %v4177 = vadd.f32 %v4176, %v4109
    %v4178 = vadd.f32 %v4177, %v4110
    %v4179 = vadd.f32 %v4178, %v4111
    %v4180 = vadd.f32 %v4179, %v4112
    %v4181 = vadd.f32 %v4180, %v4113
    %v4182 = vadd.f32 %v4181, %v4114
    %v4183 = vadd.f32 %v4182, %v4115
    %v4184 = vadd.f32 %v4183, %v4116
    %v4185 = vadd.f32 %v4184, %v4117
    %v4186 = vadd.f32 %v4185, %v4118
    %v4187 = vadd.f32 %v4186, %v4119
    %v4188 = vadd.f32 %v4187, %v4120
    %v4189 = vadd.f32 %v4188, %v4121
    %v4190 = vadd.f32 %v4189, %v4122
    %v4191 = vadd.f32 %v4190, %v4123
    %v4192 = vadd.f32 %v4191, %v4124
    %v4193 = vadd.f32 %v4192, %v4125
    %v4194 = vadd.f32 %v4193, %v4126
    %v4195 = vrot.slane %v4194, 4
    %v4196 = vadd.f32 %v4194, %v4195
    %v4197 = vrot.slane %v4196, 2
    %v4198 = vadd.f32 %v4196, %v4197
    %v4199 = vrot.slane %v4198, 1
    %v4200 = vadd.f32 %v4198, %v4199
    %v4201 = vrcp.pop 256.0
    %v4202 = vmul.f32 256.0, %v4201
    %v4203 = vsub.f32 1.0, %v4202
    %v4204 = vmul.f32 %v4201, %v4203
    %v4205 = vadd.f32 %v4201, %v4204
    %vm4206 = vweird.f32 %v4201
    %v4207 = vsel %vm4206, %v4201, %v4205
    %v4208 = vmul.f32 %v4163, %v4207
    %v4209 = vmul.f32 %v4200, %v4207
    %v4210 = vld [vmem:[%s4] sm:$0xff]
    %v4211 = vld [vmem:[%s4 + $0x8] sm:$0xff]
    %v4212 = vld [vmem:[%s4 + $0x10] sm:$0xff]
    %v4213 = vld [vmem:[%s4 + $0x18] sm:$0xff]
    %v4214 = vld [vmem:[%s4 + $0x20] sm:$0xff]
    %v4215 = vld [vmem:[%s4 + $0x28] sm:$0xff]
    %v4216 = vld [vmem:[%s4 + $0x30] sm:$0xff]
    %v4217 = vld [vmem:[%s4 + $0x38] sm:$0xff]
    %v4218 = vld [vmem:[%s4 + $0x40] sm:$0xff]
    %v4219 = vld [vmem:[%s4 + $0x48] sm:$0xff]
    %v4220 = vld [vmem:[%s4 + $0x50] sm:$0xff]
    %v4221 = vld [vmem:[%s4 + $0x58] sm:$0xff]
    %v4222 = vld [vmem:[%s4 + $0x60] sm:$0xff]
    %v4223 = vld [vmem:[%s4 + $0x68] sm:$0xff]
    %v4224 = vld [vmem:[%s4 + $0x70] sm:$0xff]
    %v4225 = vld [vmem:[%s4 + $0x78] sm:$0xff]
    %vm4228 = vcmask 1041409
    %v4229 = vsel %vm4228, %v4209, %v4208
    %4231 = vmatpush.msra.mxu0 %v4225
    %4232 = vmatpush.msra.mxu0 %v4224
    %4233 = vmatpush.msra.mxu0 %v4223
    %4234 = vmatpush.msra.mxu0 %v4222
    %4235 = vmatpush.msra.mxu0 %v4221
    %4236 = vmatpush.msra.mxu0 %v4220
    %4237 = vmatpush.msra.mxu0 %v4219
    %4238 = vmatpush.msra.mxu0 %v4218
    %4239 = vmatpush.msra.mxu0 %v4217
    %4240 = vmatpush.msra.mxu0 %v4216
    %4241 = vmatpush.msra.mxu0 %v4215
    %4242 = vmatpush.msra.mxu0 %v4214
    %4243 = vmatpush.msra.mxu0 %v4213
    %4244 = vmatpush.msra.mxu0 %v4212
    %4245 = vmatpush.msra.mxu0 %v4211
    %4246 = vmatpush.msra.mxu0 %v4210
    %4247 = vmatmul.f32.gmra.mxu0 %v4229
    %v4248 = vpop.f32.mrf.mxu0
    %v4249 = vadd.f32 0.0, %v4248
    %4250 = vdwg.mxu0
    %v4251 = vmax.f32 %v4249, 0.0
    %v4252 = vld [vmem:[%s5] sm:$0x3]
    %vm4253 = vcmask 15360
    %v4255 = vsel %vm4253, %v4251, 0
    %v4258 = vsel %vm317, %v4252, 0
    %4260 = vmatpush.msra.mxu0 0.0
    %4261 = vmatpush.msra.mxu0 0.0
    %4262 = vmatpush.msra.mxu0 0.0
    %4263 = vmatpush.msra.mxu0 0.0
    %4264 = vmatpush.msra.mxu0 0.0
    %4265 = vmatpush.msra.mxu0 0.0
    %4266 = vmatpush.msra.mxu0 0.0
    %4267 = vmatpush.msra.mxu0 0.0
    %4268 = vmatpush.msra.mxu0 0.0
    %4269 = vmatpush.msra.mxu0 0.0
    %4270 = vmatpush.msra.mxu0 0.0
    %4271 = vmatpush.msra.mxu0 0.0
    %4272 = vmatpush.msra.mxu0 0.0
    %4273 = vmatpush.msra.mxu0 0.0
    %4274 = vmatpush.msra.mxu0 0.0
    %4275 = vmatpush.msra.mxu0 %v4258
    %4276 = vmatmul.f32.gmra.mxu0 %v4255
    %v4277 = vpop.f32.mrf.mxu0
    %v4278 = vadd.f32 0.0, %v4277
    %4279 = vdwg.mxu0
    %v4280 = vxor.u32 %v4278, 2147483648
    %v4281 = vmul.f32 %v4280, 1.442695
    %v4282 = vpow.pop %v4281
    %v4283 = vadd.f32 %v4282, 1.0
    %v4284 = vrcp.pop %v4283
    %v4285 = vmul.f32 %v4283, %v4284
    %v4286 = vsub.f32 1.0, %v4285
    %v4287 = vmul.f32 %v4284, %v4286
    %v4288 = vadd.f32 %v4284, %v4287
    %vm4289 = vweird.f32 %v4283
    %vm4290 = vweird.f32 %v4284
    %vm4291 = vmor %vm4289, %vm4290
    %v4292 = vsel %vm4291, %v4284, %v4288
    %v4293 = vand.u32 2147483647, %v4283
    %vm4294 = vcmp.eq.f32.partialorder %v4293, 8.507059e+37
    %v4295 = vand.u32 %v4283, 2147483648
    %v4296 = vor.u32 1.1754944e-38, %v4295
    %v4297 = vsel %vm4294, %v4296, %v4292
    %v4298 = vmul.f32 1.0, %v4297
    %v4300 = vrot.slane %v4298, 1
    %v4301 = vperm.slane %v4298, 0
    %v4302 = vperm.slane %v4300, 0
    %v4305 = vmul.f32 %v4063, %v4301
    %v4306 = vmul.f32 %v4064, %v4301
    %v4307 = vmul.f32 %v4065, %v4301
    %v4308 = vmul.f32 %v4066, %v4301
    %v4309 = vmul.f32 %v4067, %v4301
    %v4310 = vmul.f32 %v4068, %v4301
    %v4311 = vmul.f32 %v4069, %v4301
    %v4312 = vmul.f32 %v4070, %v4301
    %v4313 = vmul.f32 %v4071, %v4301
    %v4314 = vmul.f32 %v4072, %v4301
    %v4315 = vmul.f32 %v4073, %v4301
    %v4316 = vmul.f32 %v4074, %v4301
    %v4317 = vmul.f32 %v4075, %v4301
    %v4318 = vmul.f32 %v4076, %v4301
    %v4319 = vmul.f32 %v4077, %v4301
    %v4320 = vmul.f32 %v4078, %v4301
    %v4321 = vmul.f32 %v4079, %v4301
    %v4322 = vmul.f32 %v4080, %v4301
    %v4323 = vmul.f32 %v4081, %v4301
    %v4324 = vmul.f32 %v4082, %v4301
    %v4325 = vmul.f32 %v4083, %v4301
    %v4326 = vmul.f32 %v4084, %v4301
    %v4327 = vmul.f32 %v4085, %v4301
    %v4328 = vmul.f32 %v4086, %v4301
    %v4329 = vmul.f32 %v4087, %v4301
    %v4330 = vmul.f32 %v4088, %v4301
    %v4331 = vmul.f32 %v4089, %v4301
    %v4332 = vmul.f32 %v4090, %v4301
    %v4333 = vmul.f32 %v4091, %v4301
    %v4334 = vmul.f32 %v4092, %v4301
    %v4335 = vmul.f32 %v4093, %v4301
    %v4336 = vmul.f32 %v4094, %v4301
    %v4337 = vmul.f32 %v4095, %v4302
    %v4338 = vmul.f32 %v4096, %v4302
    %v4339 = vmul.f32 %v4097, %v4302
    %v4340 = vmul.f32 %v4098, %v4302
    %v4341 = vmul.f32 %v4099, %v4302
    %v4342 = vmul.f32 %v4100, %v4302
    %v4343 = vmul.f32 %v4101, %v4302
    %v4344 = vmul.f32 %v4102, %v4302
    %v4345 = vmul.f32 %v4103, %v4302
    %v4346 = vmul.f32 %v4104, %v4302
    %v4347 = vmul.f32 %v4105, %v4302
    %v4348 = vmul.f32 %v4106, %v4302
    %v4349 = vmul.f32 %v4107, %v4302
    %v4350 = vmul.f32 %v4108, %v4302
    %v4351 = vmul.f32 %v4109, %v4302
    %v4352 = vmul.f32 %v4110, %v4302
    %v4353 = vmul.f32 %v4111, %v4302
    %v4354 = vmul.f32 %v4112, %v4302
    %v4355 = vmul.f32 %v4113, %v4302
    %v4356 = vmul.f32 %v4114, %v4302
    %v4357 = vmul.f32 %v4115, %v4302
    %v4358 = vmul.f32 %v4116, %v4302
    %v4359 = vmul.f32 %v4117, %v4302
    %v4360 = vmul.f32 %v4118, %v4302
    %v4361 = vmul.f32 %v4119, %v4302
    %v4362 = vmul.f32 %v4120, %v4302
    %v4363 = vmul.f32 %v4121, %v4302
    %v4364 = vmul.f32 %v4122, %v4302
    %v4365 = vmul.f32 %v4123, %v4302
    %v4366 = vmul.f32 %v4124, %v4302
    %v4367 = vmul.f32 %v4125, %v4302
    %v4368 = vmul.f32 %v4126, %v4302
    %4369 = vst [vmem:[#allocation2] sm:$0xff] %v4305
    %4370 = vst [vmem:[#allocation2 + $0x8] sm:$0xff] %v4306
    %4371 = vst [vmem:[#allocation2 + $0x10] sm:$0xff] %v4307
    %4372 = vst [vmem:[#allocation2 + $0x18] sm:$0xff] %v4308
    %4373 = vst [vmem:[#allocation2 + $0x20] sm:$0xff] %v4309
    %4374 = vst [vmem:[#allocation2 + $0x28] sm:$0xff] %v4310
    %4375 = vst [vmem:[#allocation2 + $0x30] sm:$0xff] %v4311
    %4376 = vst [vmem:[#allocation2 + $0x38] sm:$0xff] %v4312
    %4377 = vst [vmem:[#allocation2 + $0x40] sm:$0xff] %v4313
    %4378 = vst [vmem:[#allocation2 + $0x48] sm:$0xff] %v4314
    %4379 = vst [vmem:[#allocation2 + $0x50] sm:$0xff] %v4315
    %4380 = vst [vmem:[#allocation2 + $0x58] sm:$0xff] %v4316
    %4381 = vst [vmem:[#allocation2 + $0x60] sm:$0xff] %v4317
    %4382 = vst [vmem:[#allocation2 + $0x68] sm:$0xff] %v4318
    %4383 = vst [vmem:[#allocation2 + $0x70] sm:$0xff] %v4319
    %4384 = vst [vmem:[#allocation2 + $0x78] sm:$0xff] %v4320
    %4385 = vst [vmem:[#allocation2 + $0x80] sm:$0xff] %v4321
    %4386 = vst [vmem:[#allocation2 + $0x88] sm:$0xff] %v4322
    %4387 = vst [vmem:[#allocation2 + $0x90] sm:$0xff] %v4323
    %4388 = vst [vmem:[#allocation2 + $0x98] sm:$0xff] %v4324
    %4389 = vst [vmem:[#allocation2 + $0xa0] sm:$0xff] %v4325
    %4390 = vst [vmem:[#allocation2 + $0xa8] sm:$0xff] %v4326
    %4391 = vst [vmem:[#allocation2 + $0xb0] sm:$0xff] %v4327
    %4392 = vst [vmem:[#allocation2 + $0xb8] sm:$0xff] %v4328
    %4393 = vst [vmem:[#allocation2 + $0xc0] sm:$0xff] %v4329
    %4394 = vst [vmem:[#allocation2 + $0xc8] sm:$0xff] %v4330
    %4395 = vst [vmem:[#allocation2 + $0xd0] sm:$0xff] %v4331
    %4396 = vst [vmem:[#allocation2 + $0xd8] sm:$0xff] %v4332
    %4397 = vst [vmem:[#allocation2 + $0xe0] sm:$0xff] %v4333
    %4398 = vst [vmem:[#allocation2 + $0xe8] sm:$0xff] %v4334
    %4399 = vst [vmem:[#allocation2 + $0xf0] sm:$0xff] %v4335
    %4400 = vst [vmem:[#allocation2 + $0xf8] sm:$0xff] %v4336
    %4401 = vst [vmem:[#allocation2 + $0x100] sm:$0xff] %v4337
    %4402 = vst [vmem:[#allocation2 + $0x108] sm:$0xff] %v4338
    %4403 = vst [vmem:[#allocation2 + $0x110] sm:$0xff] %v4339
    %4404 = vst [vmem:[#allocation2 + $0x118] sm:$0xff] %v4340
    %4405 = vst [vmem:[#allocation2 + $0x120] sm:$0xff] %v4341
    %4406 = vst [vmem:[#allocation2 + $0x128] sm:$0xff] %v4342
    %4407 = vst [vmem:[#allocation2 + $0x130] sm:$0xff] %v4343
    %4408 = vst [vmem:[#allocation2 + $0x138] sm:$0xff] %v4344
    %4409 = vst [vmem:[#allocation2 + $0x140] sm:$0xff] %v4345
    %4410 = vst [vmem:[#allocation2 + $0x148] sm:$0xff] %v4346
    %4411 = vst [vmem:[#allocation2 + $0x150] sm:$0xff] %v4347
    %4412 = vst [vmem:[#allocation2 + $0x158] sm:$0xff] %v4348
    %4413 = vst [vmem:[#allocation2 + $0x160] sm:$0xff] %v4349
    %4414 = vst [vmem:[#allocation2 + $0x168] sm:$0xff] %v4350
    %4415 = vst [vmem:[#allocation2 + $0x170] sm:$0xff] %v4351
    %4416 = vst [vmem:[#allocation2 + $0x178] sm:$0xff] %v4352
    %4417 = vst [vmem:[#allocation2 + $0x180] sm:$0xff] %v4353
    %4418 = vst [vmem:[#allocation2 + $0x188] sm:$0xff] %v4354
    %4419 = vst [vmem:[#allocation2 + $0x190] sm:$0xff] %v4355
    %4420 = vst [vmem:[#allocation2 + $0x198] sm:$0xff] %v4356
    %4421 = vst [vmem:[#allocation2 + $0x1a0] sm:$0xff] %v4357
    %4422 = vst [vmem:[#allocation2 + $0x1a8] sm:$0xff] %v4358
    %4423 = vst [vmem:[#allocation2 + $0x1b0] sm:$0xff] %v4359
    %4424 = vst [vmem:[#allocation2 + $0x1b8] sm:$0xff] %v4360
    %4425 = vst [vmem:[#allocation2 + $0x1c0] sm:$0xff] %v4361
    %4426 = vst [vmem:[#allocation2 + $0x1c8] sm:$0xff] %v4362
    %4427 = vst [vmem:[#allocation2 + $0x1d0] sm:$0xff] %v4363
    %4428 = vst [vmem:[#allocation2 + $0x1d8] sm:$0xff] %v4364
    %4429 = vst [vmem:[#allocation2 + $0x1e0] sm:$0xff] %v4365
    %4430 = vst [vmem:[#allocation2 + $0x1e8] sm:$0xff] %v4366
    %4431 = vst [vmem:[#allocation2 + $0x1f0] sm:$0xff] %v4367
    %4432 = vst [vmem:[#allocation2 + $0x1f8] sm:$0xff] %v4368
    // Predicated region
    $region26: #{se_res_cellB_forward.1} parent=1 // pred_check
      _
    $region27: #{se_res_cellB_forward.1} parent=1 // pred_check_branch
      %4434 = sbr.rel (0) target = $region29
    $region28: #{se_res_cellB_forward.1} parent=1 // pred_region
      %4436 = vsyncadd [#allocation3], 0
      %s4437 = sshll.u32 [#allocation2], 4
      %s4438 = int_to_ptr.vmem [resolvable:$true] %s4437
      %s4439 = sshll.u32 %s6, 4
      %s4440 = int_to_ptr.hbm [resolvable:$true] %s4439
      %4445 = dma.vmem_to_hbm [thread:$0]  %s4438, 8192, %s4440, [#allocation3], 128, 128, 8
    $region29: #{se_res_cellB_forward.1} parent=1 // pred_fallthru
      _
    // Predicated region
    $region30: #{se_res_cellB_forward.1} parent=1 // pred_check
      _
    $region31: #{se_res_cellB_forward.1} parent=1 // pred_check_branch
      %4447 = sbr.rel (0) target = $region33
    $region32: #{se_res_cellB_forward.1} parent=1 // pred_region
      %4449 = dma.done [#allocation3], 8192
    $region33: #{se_res_cellB_forward.1} parent=1 // pred_fallthru
      _
    %4450 = vsyncpa [#allocation3], 1

</llo_original>
